<compile_context>
chip_gen: v7x
topology: tpu7x:2x2x1
jax: 0.10.0
libtpu: 0.0.40
codegen_flags: <defaults>
</compile_context>

<pallas_src>
import math

import jax
import jax.numpy as jnp
from jax import lax
from jax.experimental import pallas as pl
from jax.experimental.pallas import tpu as pltpu

H = 16
W = 16
C = 64
KH = KW = 3
TAP = 2 * W + 2            # 34: max flat-row reach of a 3x3 valid tap
R4 = (H - 8) * W           # 128: conv4 rows kept per image
R_STRIDE = 240             # per-image slab rows (>= 230 needed, multiple of 16)
WIN = 16                   # extra rows loaded per dy window (>= 2, multiple of 16)
TAIL = 2 * W + WIN         # 48: zeroed guard rows after the last image
CHUNK_IMGS = 4             # images per collapsed matmul chunk (~960 rows of M)
MAX_BATCH_BLOCK = 32       # per-grid-step image cap (~11 MiB VMEM footprint)
EPS = 1e-12                # F.normalize eps


def _fused_conv3x3(src_ref, w_ref, b_ref, c0, rows_out):
    """Valid 3x3 conv (row stride == W) on a flattened (rows, C) slab for rows
    [c0, c0 + rows_out).  The 3 taps sharing a dy are fused along N into one
    (rows, C) @ (C, 3C) MXU matmul (bf16 operands, f32 accumulation).  The
    192-wide partial products are summed across dy first, then the three
    dx-shifted 64-column extractions are done once.  Bias is added once."""
    yd = None
    for dy in range(KH):                                     # static
        xs = src_ref[pl.ds(c0 + dy * W, rows_out + WIN), :]  # (rows+WIN, C) bf16
        d = jnp.dot(xs, w_ref[dy], preferred_element_type=jnp.float32)
        yd = d if yd is None else yd + d
    return (b_ref[...]                                       # (1, C) f32, broadcasts
            + yd[0:rows_out, 0:C]
            + yd[1:rows_out + 1, C:2 * C]
            + yd[2:rows_out + 2, 2 * C:3 * C])


def _min_grid_steps(n):
    """v7x (and other megacore parts) expose 2 TensorCores per device -> keep
    >= 2 'parallel' grid steps; single-TC v5e/v6e want as few steps as fit."""
    if n <= 1:
        return 1
    try:
        kind = jax.devices()[0].device_kind.lower()
    except Exception:
        return 2
    single_tc = any(t in kind for t in ("v5 lite", "v5e", "v6 lite", "v6e"))
    return 1 if single_tc else 2


def stereo_matching_forward(x, params, *, batch_block=None):
    """x: (N, H, W, 1) float32 NHWC.  Returns (N, H-8, W-8, 64) float32."""
    n = x.shape[0]
    (w1, b1), (w2, b2), (w3, b3), (w4, b4) = params

    if batch_block is None:
        batch_block = max(1, min(pl.cdiv(n, _min_grid_steps(n)), MAX_BATCH_BLOCK))
    n_steps = pl.cdiv(n, batch_block)
    n_pad = n_steps * batch_block
    m_rows = batch_block * R_STRIDE          # stacked slab rows per grid step
    slab_rows = m_rows + TAIL

    # Static chunk table for the collapsed matmuls (layer-major, chunk-minor).
    chunk_rows_max = min(m_rows, CHUNK_IMGS * R_STRIDE)
    chunks = []
    r0 = 0
    while r0 < m_rows:
        rows = min(chunk_rows_max, m_rows - r0)
        chunks.append((r0, rows))
        r0 += rows

    # ---- host-side im2col for conv1 (Cin=1 is degenerate on the MXU) --------
    # Kept in the wrapper (~9 KiB/image of extra HBM traffic); the CostEstimate
    # below lets XLA schedule it around the kernel.
    x_flat = x.reshape(n, H * W).astype(jnp.float32)
    x_flat = jnp.pad(x_flat, ((0, n_pad - n), (0, R_STRIDE + TAP - H * W)))
    offs = [dy * W + dx for dy in range(KH) for dx in range(KW)]
    patches = jnp.stack([x_flat[:, o:o + R_STRIDE] for o in offs], axis=-1)
    patches = patches.reshape(n_pad * R_STRIDE, KH * KW)      # (n_pad*240, 9) f32

    # ---- weight packing ------------------------------------------------------
    def prep_w1(w):      # (3, 3, 1, 64) -> (9, 64); f32 (K=9: no MXU gain from bf16)
        return w.reshape(KH * KW, C).astype(jnp.float32)

    def prep_wcat(w):    # (3, 3, 64, 64) -> (3, 64, 192); [dy, :, dx*64:(dx+1)*64] == w[dy, dx]
        return jnp.transpose(w, (0, 2, 1, 3)).reshape(KH, C, KW * C).astype(jnp.bfloat16)

    def prep_b(b):       # (64,) -> (1, 64), f32
        return b.reshape(1, C).astype(jnp.float32)

    args = (patches,
            prep_w1(w1), prep_b(b1),
            prep_wcat(w2), prep_b(b2),
            prep_wcat(w3), prep_b(b3),
            prep_wcat(w4), prep_b(b4))

    # ---- kernel --------------------------------------------------------------
    def kernel(p_ref, w1_ref, b1_ref, w2_ref, b2_ref, w3_ref, b3_ref,
               w4_ref, b4_ref, o_ref, fa_ref, fb_ref):
        # Zero the guard tail so the last chunk's shifted taps read finite data
        # (those rows only ever feed junk rows outside the kept window).
        fa_ref[m_rows:, :] = jnp.zeros((TAIL, C), jnp.bfloat16)
        fb_ref[m_rows:, :] = jnp.zeros((TAIL, C), jnp.bfloat16)

        # conv1: collapsed (rows, 9) @ (9, 64) f32 matmuls over the im2col'd input.
        for c0, rows in chunks:                              # static
            f = jnp.dot(p_ref[pl.ds(c0, rows), :], w1_ref[...],
                        preferred_element_type=jnp.float32) + b1_ref[...]
            fa_ref[pl.ds(c0, rows), :] = jnp.maximum(f, 0.0).astype(jnp.bfloat16)

        # conv2 / conv3: fused 3x3 conv + ReLU, collapsed across images,
        # ping-ponging the two bf16 slabs.
        def mid_layer(src_ref, dst_ref, w_ref, b_ref):
            for c0, rows in chunks:                          # static
                acc = _fused_conv3x3(src_ref, w_ref, b_ref, c0, rows)
                dst_ref[pl.ds(c0, rows), :] = jnp.maximum(acc, 0.0).astype(jnp.bfloat16)

        mid_layer(fa_ref, fb_ref, w2_ref, b2_ref)
        mid_layer(fb_ref, fa_ref, w3_ref, b3_ref)

        # conv4 (no ReLU) + channel L2 normalize over only the 128 kept rows
        # per image (rsqrt runs on the EUP slot); static loop -> fully unrolled.
        for b in range(batch_block):                         # static
            acc = _fused_conv3x3(fa_ref, w4_ref, b4_ref, b * R_STRIDE, R4)
            ssq = jnp.sum(acc * acc, axis=1, keepdims=True)
            inv = lax.rsqrt(jnp.maximum(ssq, EPS * EPS))     # == x / max(||x||, eps)
            o_ref[pl.ds(b * R4, R4), :] = (acc * inv).astype(o_ref.dtype)

    def resident_spec(a):
        # Constant block index: weights/biases are DMA'd once, stay VMEM-resident.
        nd = a.ndim
        return pl.BlockSpec(a.shape, lambda i, _nd=nd: (0,) * _nd)

    in_specs = [pl.BlockSpec((m_rows, KH * KW), lambda i: (i, 0))]
    in_specs += [resident_spec(a) for a in args[1:]]

    macs = n_pad * (R_STRIDE * KH * KW * C                 # conv1
                    + 2 * R_STRIDE * KH * KW * C * C       # conv2, conv3
                    + R4 * KH * KW * C * C)                # conv4
    bytes_accessed = (sum(int(a.size) * a.dtype.itemsize for a in args)
                      + n_pad * R4 * C * 4)
    cost = pl.CostEstimate(flops=2 * macs, transcendentals=n_pad * R4,
                           bytes_accessed=bytes_accessed)

    out = pl.pallas_call(
        kernel,
        out_shape=jax.ShapeDtypeStruct((n_pad * R4, C), jnp.float32),
        grid=(n_steps,),
        in_specs=in_specs,
        out_specs=pl.BlockSpec((batch_block * R4, C), lambda i: (i, 0)),
        scratch_shapes=[pltpu.VMEM((slab_rows, C), jnp.bfloat16),
                        pltpu.VMEM((slab_rows, C), jnp.bfloat16)],
        compiler_params=pltpu.CompilerParams(
            dimension_semantics=("parallel",)),
        cost_estimate=cost,
    )(*args)

    # Per image, rows [0, R4) of the full-width slab are kept; valid columns
    # are [0, W-8).
    out = out[:n * R4].reshape(n, H - 8, W, C)[:, :, :W - 8, :]
    return out


def init_params(key):
    """Deterministic init mirroring PyTorch Conv2d defaults (uniform with
    bound 1/sqrt(fan_in)); weights stored HWIO (3, 3, Cin, Cout)."""
    def conv_init(k, cin, cout):
        kw, kb = jax.random.split(k)
        bound = 1.0 / math.sqrt(cin * KH * KW)
        w = jax.random.uniform(kw, (KH, KW, cin, cout), jnp.float32,
                               -bound, bound)
        b = jax.random.uniform(kb, (cout,), jnp.float32, -bound, bound)
        return w, b

    k1, k2, k3, k4 = jax.random.split(key, 4)
    return (conv_init(k1, 1, C), conv_init(k2, C, C),
            conv_init(k3, C, C), conv_init(k4, C, C))


def reference_forward(x, params):
    """Plain-JAX reference (lax.conv) of the PyTorch forward."""
    feats = x.astype(jnp.float32)
    dn = ('NHWC', 'HWIO', 'NHWC')
    for i, (w, b) in enumerate(params):
        feats = lax.conv_general_dilated(
            feats, w, window_strides=(1, 1), padding='VALID',
            dimension_numbers=dn) + b
        if i < 3:
            feats = jnp.maximum(feats, 0.0)
    norm = jnp.sqrt(jnp.sum(feats * feats, axis=-1, keepdims=True))
    return feats / jnp.maximum(norm, EPS)


if __name__ == "__main__":
    key = jax.random.PRNGKey(0)
    kx, kp = jax.random.split(key)
    x = jax.random.normal(kx, (2, H, W, 1), jnp.float32)
    params = init_params(kp)

    fwd = jax.jit(stereo_matching_forward)
    out = jax.block_until_ready(fwd(x, params))

    assert out.shape == (2, H - 8, W - 8, C), out.shape
    ref = reference_forward(x, params)
    err = float(jnp.max(jnp.abs(out - ref)))
    # bf16 operands for conv2-4 (f32 accumulation) -> relaxed tolerance.
    assert err < 2e-2, f"max abs error vs reference: {err}"
    print("KERNEL_OK")
</pallas_src>

<mosaic_0001>
module attributes {stable_mosaic.version = 11 : i64} {
  func.func @kernel(%arg0: i32, %arg1: memref<240x9xf32, #tpu.memory_space<vmem>>, %arg2: memref<9x64xf32, #tpu.memory_space<vmem>>, %arg3: memref<1x64xf32, #tpu.memory_space<vmem>>, %arg4: memref<3x64x192xbf16, #tpu.memory_space<vmem>>, %arg5: memref<1x64xf32, #tpu.memory_space<vmem>>, %arg6: memref<3x64x192xbf16, #tpu.memory_space<vmem>>, %arg7: memref<1x64xf32, #tpu.memory_space<vmem>>, %arg8: memref<3x64x192xbf16, #tpu.memory_space<vmem>>, %arg9: memref<1x64xf32, #tpu.memory_space<vmem>>, %arg10: memref<128x64xf32, #tpu.memory_space<vmem>>, %arg11: memref<288x64xbf16, #tpu.memory_space<vmem>>, %arg12: memref<288x64xbf16, #tpu.memory_space<vmem>>) attributes {dimension_semantics = [#tpu.dimension_semantics<parallel>], iteration_bounds = array<i64: 2>, scalar_prefetch = 0 : i64, scratch_operands = 2 : i64, tpu.core_type = #tpu.core_type<tc>, window_params = [{transform_indices = @transform_0, window_bounds = array<i64: 240, 9>}, {pipeline_mode = #tpu.pipeline_mode<synchronous>, transform_indices = @transform_1, window_bounds = array<i64: 9, 64>}, {pipeline_mode = #tpu.pipeline_mode<synchronous>, transform_indices = @transform_2, window_bounds = array<i64: 1, 64>}, {pipeline_mode = #tpu.pipeline_mode<synchronous>, transform_indices = @transform_3, window_bounds = array<i64: 3, 64, 192>}, {pipeline_mode = #tpu.pipeline_mode<synchronous>, transform_indices = @transform_4, window_bounds = array<i64: 1, 64>}, {pipeline_mode = #tpu.pipeline_mode<synchronous>, transform_indices = @transform_5, window_bounds = array<i64: 3, 64, 192>}, {pipeline_mode = #tpu.pipeline_mode<synchronous>, transform_indices = @transform_6, window_bounds = array<i64: 1, 64>}, {pipeline_mode = #tpu.pipeline_mode<synchronous>, transform_indices = @transform_7, window_bounds = array<i64: 3, 64, 192>}, {pipeline_mode = #tpu.pipeline_mode<synchronous>, transform_indices = @transform_8, window_bounds = array<i64: 1, 64>}, {transform_indices = @transform_9, window_bounds = array<i64: 128, 64>}]} {
    %cst = arith.constant 0.000000e+00 : bf16
    %0 = vector.broadcast %cst : bf16 to vector<48x64xbf16>
    %c240 = arith.constant 240 : index
    %c0 = arith.constant 0 : index
    %1 = vector.load %arg11[%c240, %c0] : memref<288x64xbf16, #tpu.memory_space<vmem>>, vector<48x64xbf16>
    tpu.vector_store %arg11[%c240, %c0], %0 {strides = array<i32>} : memref<288x64xbf16, #tpu.memory_space<vmem>>, vector<48x64xbf16>,
    %cst_0 = arith.constant 0.000000e+00 : bf16
    %2 = vector.broadcast %cst_0 : bf16 to vector<48x64xbf16>
    %c240_1 = arith.constant 240 : index
    %c0_2 = arith.constant 0 : index
    %3 = vector.load %arg12[%c240_1, %c0_2] : memref<288x64xbf16, #tpu.memory_space<vmem>>, vector<48x64xbf16>
    tpu.vector_store %arg12[%c240_1, %c0_2], %2 {strides = array<i32>} : memref<288x64xbf16, #tpu.memory_space<vmem>>, vector<48x64xbf16>,
    %c0_3 = arith.constant 0 : index
    %c0_4 = arith.constant 0 : index
    %4 = vector.load %arg1[%c0_3, %c0_4] : memref<240x9xf32, #tpu.memory_space<vmem>>, vector<240x9xf32>
    %c0_5 = arith.constant 0 : index
    %c0_6 = arith.constant 0 : index
    %5 = vector.load %arg2[%c0_5, %c0_6] : memref<9x64xf32, #tpu.memory_space<vmem>>, vector<9x64xf32>
    %cst_7 = arith.constant dense<0.000000e+00> : vector<240x64xf32>
    %6 = tpu.matmul %4, %5, %cst_7 {dimension_numbers = #tpu.dot_dimension_numbers<[1], [0], [0], [1], [0, 0, 1, 1], [], []>} : vector<240x9xf32>, vector<9x64xf32>, vector<240x64xf32> -> vector<240x64xf32>
    %c0_8 = arith.constant 0 : index
    %c0_9 = arith.constant 0 : index
    %7 = vector.load %arg3[%c0_8, %c0_9] : memref<1x64xf32, #tpu.memory_space<vmem>>, vector<1x64xf32>
    %8 = vector.broadcast %7 : vector<1x64xf32> to vector<240x64xf32>
    %9 = arith.addf %6, %8 : vector<240x64xf32>
    %cst_10 = arith.constant 0.000000e+00 : f32
    %10 = vector.broadcast %cst_10 : f32 to vector<240x64xf32>
    %11 = arith.maximumf %9, %10 : vector<240x64xf32>
    %12 = arith.truncf %11 : vector<240x64xf32> to vector<240x64xbf16>
    %c0_11 = arith.constant 0 : index
    %c0_12 = arith.constant 0 : index
    %13 = vector.load %arg11[%c0_11, %c0_12] : memref<288x64xbf16, #tpu.memory_space<vmem>>, vector<240x64xbf16>
    tpu.vector_store %arg11[%c0_11, %c0_12], %12 {strides = array<i32>} : memref<288x64xbf16, #tpu.memory_space<vmem>>, vector<240x64xbf16>,
    %c0_13 = arith.constant 0 : index
    %c0_14 = arith.constant 0 : index
    %14 = vector.load %arg11[%c0_13, %c0_14] : memref<288x64xbf16, #tpu.memory_space<vmem>>, vector<256x64xbf16>
    %c0_15 = arith.constant 0 : index
    %c0_16 = arith.constant 0 : index
    %c0_17 = arith.constant 0 : index
    %15 = vector.load %arg4[%c0_15, %c0_16, %c0_17] : memref<3x64x192xbf16, #tpu.memory_space<vmem>>, vector<1x64x192xbf16>
    %16 = vector.shape_cast %15 : vector<1x64x192xbf16> to vector<64x192xbf16>
    %cst_18 = arith.constant dense<0.000000e+00> : vector<256x192xf32>
    %17 = tpu.matmul %14, %16, %cst_18 {dimension_numbers = #tpu.dot_dimension_numbers<[1], [0], [0], [1], [0, 0, 1, 1], [], []>} : vector<256x64xbf16>, vector<64x192xbf16>, vector<256x192xf32> -> vector<256x192xf32>
    %c16 = arith.constant 16 : index
    %c0_19 = arith.constant 0 : index
    %18 = vector.load %arg11[%c16, %c0_19] : memref<288x64xbf16, #tpu.memory_space<vmem>>, vector<256x64xbf16>
    %c1 = arith.constant 1 : index
    %c0_20 = arith.constant 0 : index
    %c0_21 = arith.constant 0 : index
    %19 = vector.load %arg4[%c1, %c0_20, %c0_21] : memref<3x64x192xbf16, #tpu.memory_space<vmem>>, vector<1x64x192xbf16>
    %20 = vector.shape_cast %19 : vector<1x64x192xbf16> to vector<64x192xbf16>
    %cst_22 = arith.constant dense<0.000000e+00> : vector<256x192xf32>
    %21 = tpu.matmul %18, %20, %cst_22 {dimension_numbers = #tpu.dot_dimension_numbers<[1], [0], [0], [1], [0, 0, 1, 1], [], []>} : vector<256x64xbf16>, vector<64x192xbf16>, vector<256x192xf32> -> vector<256x192xf32>
    %22 = arith.addf %17, %21 : vector<256x192xf32>
    %c32 = arith.constant 32 : index
    %c0_23 = arith.constant 0 : index
    %23 = vector.load %arg11[%c32, %c0_23] : memref<288x64xbf16, #tpu.memory_space<vmem>>, vector<256x64xbf16>
    %c2 = arith.constant 2 : index
    %c0_24 = arith.constant 0 : index
    %c0_25 = arith.constant 0 : index
    %24 = vector.load %arg4[%c2, %c0_24, %c0_25] : memref<3x64x192xbf16, #tpu.memory_space<vmem>>, vector<1x64x192xbf16>
    %25 = vector.shape_cast %24 : vector<1x64x192xbf16> to vector<64x192xbf16>
    %cst_26 = arith.constant dense<0.000000e+00> : vector<256x192xf32>
    %26 = tpu.matmul %23, %25, %cst_26 {dimension_numbers = #tpu.dot_dimension_numbers<[1], [0], [0], [1], [0, 0, 1, 1], [], []>} : vector<256x64xbf16>, vector<64x192xbf16>, vector<256x192xf32> -> vector<256x192xf32>
    %27 = arith.addf %22, %26 : vector<256x192xf32>
    %c0_27 = arith.constant 0 : index
    %c0_28 = arith.constant 0 : index
    %28 = vector.load %arg5[%c0_27, %c0_28] : memref<1x64xf32, #tpu.memory_space<vmem>>, vector<1x64xf32>
    %29 = vector.extract_strided_slice %27 {offsets = [0, 0], sizes = [240, 64], strides = [1, 1]} : vector<256x192xf32> to vector<240x64xf32>
    %30 = vector.broadcast %28 : vector<1x64xf32> to vector<240x64xf32>
    %31 = arith.addf %30, %29 : vector<240x64xf32>
    %32 = vector.extract_strided_slice %27 {offsets = [1, 64], sizes = [240, 64], strides = [1, 1]} : vector<256x192xf32> to vector<240x64xf32>
    %33 = arith.addf %31, %32 : vector<240x64xf32>
    %34 = vector.extract_strided_slice %27 {offsets = [2, 128], sizes = [240, 64], strides = [1, 1]} : vector<256x192xf32> to vector<240x64xf32>
    %35 = arith.addf %33, %34 : vector<240x64xf32>
    %cst_29 = arith.constant 0.000000e+00 : f32
    %36 = vector.broadcast %cst_29 : f32 to vector<240x64xf32>
    %37 = arith.maximumf %35, %36 : vector<240x64xf32>
    %38 = arith.truncf %37 : vector<240x64xf32> to vector<240x64xbf16>
    %c0_30 = arith.constant 0 : index
    %c0_31 = arith.constant 0 : index
    %39 = vector.load %arg12[%c0_30, %c0_31] : memref<288x64xbf16, #tpu.memory_space<vmem>>, vector<240x64xbf16>
    tpu.vector_store %arg12[%c0_30, %c0_31], %38 {strides = array<i32>} : memref<288x64xbf16, #tpu.memory_space<vmem>>, vector<240x64xbf16>,
    %c0_32 = arith.constant 0 : index
    %c0_33 = arith.constant 0 : index
    %40 = vector.load %arg12[%c0_32, %c0_33] : memref<288x64xbf16, #tpu.memory_space<vmem>>, vector<256x64xbf16>
    %c0_34 = arith.constant 0 : index
    %c0_35 = arith.constant 0 : index
    %c0_36 = arith.constant 0 : index
    %41 = vector.load %arg6[%c0_34, %c0_35, %c0_36] : memref<3x64x192xbf16, #tpu.memory_space<vmem>>, vector<1x64x192xbf16>
    %42 = vector.shape_cast %41 : vector<1x64x192xbf16> to vector<64x192xbf16>
    %cst_37 = arith.constant dense<0.000000e+00> : vector<256x192xf32>
    %43 = tpu.matmul %40, %42, %cst_37 {dimension_numbers = #tpu.dot_dimension_numbers<[1], [0], [0], [1], [0, 0, 1, 1], [], []>} : vector<256x64xbf16>, vector<64x192xbf16>, vector<256x192xf32> -> vector<256x192xf32>
    %c16_38 = arith.constant 16 : index
    %c0_39 = arith.constant 0 : index
    %44 = vector.load %arg12[%c16_38, %c0_39] : memref<288x64xbf16, #tpu.memory_space<vmem>>, vector<256x64xbf16>
    %c1_40 = arith.constant 1 : index
    %c0_41 = arith.constant 0 : index
    %c0_42 = arith.constant 0 : index
    %45 = vector.load %arg6[%c1_40, %c0_41, %c0_42] : memref<3x64x192xbf16, #tpu.memory_space<vmem>>, vector<1x64x192xbf16>
    %46 = vector.shape_cast %45 : vector<1x64x192xbf16> to vector<64x192xbf16>
    %cst_43 = arith.constant dense<0.000000e+00> : vector<256x192xf32>
    %47 = tpu.matmul %44, %46, %cst_43 {dimension_numbers = #tpu.dot_dimension_numbers<[1], [0], [0], [1], [0, 0, 1, 1], [], []>} : vector<256x64xbf16>, vector<64x192xbf16>, vector<256x192xf32> -> vector<256x192xf32>
    %48 = arith.addf %43, %47 : vector<256x192xf32>
    %c32_44 = arith.constant 32 : index
    %c0_45 = arith.constant 0 : index
    %49 = vector.load %arg12[%c32_44, %c0_45] : memref<288x64xbf16, #tpu.memory_space<vmem>>, vector<256x64xbf16>
    %c2_46 = arith.constant 2 : index
    %c0_47 = arith.constant 0 : index
    %c0_48 = arith.constant 0 : index
    %50 = vector.load %arg6[%c2_46, %c0_47, %c0_48] : memref<3x64x192xbf16, #tpu.memory_space<vmem>>, vector<1x64x192xbf16>
    %51 = vector.shape_cast %50 : vector<1x64x192xbf16> to vector<64x192xbf16>
    %cst_49 = arith.constant dense<0.000000e+00> : vector<256x192xf32>
    %52 = tpu.matmul %49, %51, %cst_49 {dimension_numbers = #tpu.dot_dimension_numbers<[1], [0], [0], [1], [0, 0, 1, 1], [], []>} : vector<256x64xbf16>, vector<64x192xbf16>, vector<256x192xf32> -> vector<256x192xf32>
    %53 = arith.addf %48, %52 : vector<256x192xf32>
    %c0_50 = arith.constant 0 : index
    %c0_51 = arith.constant 0 : index
    %54 = vector.load %arg7[%c0_50, %c0_51] : memref<1x64xf32, #tpu.memory_space<vmem>>, vector<1x64xf32>
    %55 = vector.extract_strided_slice %53 {offsets = [0, 0], sizes = [240, 64], strides = [1, 1]} : vector<256x192xf32> to vector<240x64xf32>
    %56 = vector.broadcast %54 : vector<1x64xf32> to vector<240x64xf32>
    %57 = arith.addf %56, %55 : vector<240x64xf32>
    %58 = vector.extract_strided_slice %53 {offsets = [1, 64], sizes = [240, 64], strides = [1, 1]} : vector<256x192xf32> to vector<240x64xf32>
    %59 = arith.addf %57, %58 : vector<240x64xf32>
    %60 = vector.extract_strided_slice %53 {offsets = [2, 128], sizes = [240, 64], strides = [1, 1]} : vector<256x192xf32> to vector<240x64xf32>
    %61 = arith.addf %59, %60 : vector<240x64xf32>
    %cst_52 = arith.constant 0.000000e+00 : f32
    %62 = vector.broadcast %cst_52 : f32 to vector<240x64xf32>
    %63 = arith.maximumf %61, %62 : vector<240x64xf32>
    %64 = arith.truncf %63 : vector<240x64xf32> to vector<240x64xbf16>
    %c0_53 = arith.constant 0 : index
    %c0_54 = arith.constant 0 : index
    %65 = vector.load %arg11[%c0_53, %c0_54] : memref<288x64xbf16, #tpu.memory_space<vmem>>, vector<240x64xbf16>
    tpu.vector_store %arg11[%c0_53, %c0_54], %64 {strides = array<i32>} : memref<288x64xbf16, #tpu.memory_space<vmem>>, vector<240x64xbf16>,
    %c0_55 = arith.constant 0 : index
    %c0_56 = arith.constant 0 : index
    %66 = vector.load %arg11[%c0_55, %c0_56] : memref<288x64xbf16, #tpu.memory_space<vmem>>, vector<144x64xbf16>
    %c0_57 = arith.constant 0 : index
    %c0_58 = arith.constant 0 : index
    %c0_59 = arith.constant 0 : index
    %67 = vector.load %arg8[%c0_57, %c0_58, %c0_59] : memref<3x64x192xbf16, #tpu.memory_space<vmem>>, vector<1x64x192xbf16>
    %68 = vector.shape_cast %67 : vector<1x64x192xbf16> to vector<64x192xbf16>
    %cst_60 = arith.constant dense<0.000000e+00> : vector<144x192xf32>
    %69 = tpu.matmul %66, %68, %cst_60 {dimension_numbers = #tpu.dot_dimension_numbers<[1], [0], [0], [1], [0, 0, 1, 1], [], []>} : vector<144x64xbf16>, vector<64x192xbf16>, vector<144x192xf32> -> vector<144x192xf32>
    %c16_61 = arith.constant 16 : index
    %c0_62 = arith.constant 0 : index
    %70 = vector.load %arg11[%c16_61, %c0_62] : memref<288x64xbf16, #tpu.memory_space<vmem>>, vector<144x64xbf16>
    %c1_63 = arith.constant 1 : index
    %c0_64 = arith.constant 0 : index
    %c0_65 = arith.constant 0 : index
    %71 = vector.load %arg8[%c1_63, %c0_64, %c0_65] : memref<3x64x192xbf16, #tpu.memory_space<vmem>>, vector<1x64x192xbf16>
    %72 = vector.shape_cast %71 : vector<1x64x192xbf16> to vector<64x192xbf16>
    %cst_66 = arith.constant dense<0.000000e+00> : vector<144x192xf32>
    %73 = tpu.matmul %70, %72, %cst_66 {dimension_numbers = #tpu.dot_dimension_numbers<[1], [0], [0], [1], [0, 0, 1, 1], [], []>} : vector<144x64xbf16>, vector<64x192xbf16>, vector<144x192xf32> -> vector<144x192xf32>
    %74 = arith.addf %69, %73 : vector<144x192xf32>
    %c32_67 = arith.constant 32 : index
    %c0_68 = arith.constant 0 : index
    %75 = vector.load %arg11[%c32_67, %c0_68] : memref<288x64xbf16, #tpu.memory_space<vmem>>, vector<144x64xbf16>
    %c2_69 = arith.constant 2 : index
    %c0_70 = arith.constant 0 : index
    %c0_71 = arith.constant 0 : index
    %76 = vector.load %arg8[%c2_69, %c0_70, %c0_71] : memref<3x64x192xbf16, #tpu.memory_space<vmem>>, vector<1x64x192xbf16>
    %77 = vector.shape_cast %76 : vector<1x64x192xbf16> to vector<64x192xbf16>
    %cst_72 = arith.constant dense<0.000000e+00> : vector<144x192xf32>
    %78 = tpu.matmul %75, %77, %cst_72 {dimension_numbers = #tpu.dot_dimension_numbers<[1], [0], [0], [1], [0, 0, 1, 1], [], []>} : vector<144x64xbf16>, vector<64x192xbf16>, vector<144x192xf32> -> vector<144x192xf32>
    %79 = arith.addf %74, %78 : vector<144x192xf32>
    %c0_73 = arith.constant 0 : index
    %c0_74 = arith.constant 0 : index
    %80 = vector.load %arg9[%c0_73, %c0_74] : memref<1x64xf32, #tpu.memory_space<vmem>>, vector<1x64xf32>
    %81 = vector.extract_strided_slice %79 {offsets = [0, 0], sizes = [128, 64], strides = [1, 1]} : vector<144x192xf32> to vector<128x64xf32>
    %82 = vector.broadcast %80 : vector<1x64xf32> to vector<128x64xf32>
    %83 = arith.addf %82, %81 : vector<128x64xf32>
    %84 = vector.extract_strided_slice %79 {offsets = [1, 64], sizes = [128, 64], strides = [1, 1]} : vector<144x192xf32> to vector<128x64xf32>
    %85 = arith.addf %83, %84 : vector<128x64xf32>
    %86 = vector.extract_strided_slice %79 {offsets = [2, 128], sizes = [128, 64], strides = [1, 1]} : vector<144x192xf32> to vector<128x64xf32>
    %87 = arith.addf %85, %86 : vector<128x64xf32>
    %88 = arith.mulf %87, %87 : vector<128x64xf32>
    %cst_75 = arith.constant dense<0.000000e+00> : vector<128xf32>
    %89 = vector.multi_reduction <add>, %88, %cst_75 [1] : vector<128x64xf32> to vector<128xf32>
    %90 = vector.shape_cast %89 : vector<128xf32> to vector<128x1xf32>
    %cst_76 = arith.constant 1.000000e-24 : f32
    %91 = vector.broadcast %cst_76 : f32 to vector<128x1xf32>
    %92 = arith.maximumf %90, %91 : vector<128x1xf32>
    %93 = math.rsqrt %92 : vector<128x1xf32>
    %94 = vector.broadcast %93 : vector<128x1xf32> to vector<128x64xf32>
    %95 = arith.mulf %87, %94 : vector<128x64xf32>
    %c0_77 = arith.constant 0 : index
    %c0_78 = arith.constant 0 : index
    %96 = vector.load %arg10[%c0_77, %c0_78] : memref<128x64xf32, #tpu.memory_space<vmem>>, vector<128x64xf32>
    tpu.vector_store %arg10[%c0_77, %c0_78], %95 {strides = array<i32>} : memref<128x64xf32, #tpu.memory_space<vmem>>, vector<128x64xf32>,
    return
  }
  func.func @transform_0(%arg0: i32) -> (i32, i32) {
    %c0_i32 = arith.constant 0 : i32
    %c0_i32_0 = arith.constant 0 : i32
    return %arg0, %c0_i32 : i32, i32
  }
  func.func @transform_1(%arg0: i32) -> (i32, i32) {
    %c0_i32 = arith.constant 0 : i32
    %c0_i32_0 = arith.constant 0 : i32
    %c0_i32_1 = arith.constant 0 : i32
    return %c0_i32, %c0_i32_0 : i32, i32
  }
  func.func @transform_2(%arg0: i32) -> (i32, i32) {
    %c0_i32 = arith.constant 0 : i32
    %c0_i32_0 = arith.constant 0 : i32
    %c0_i32_1 = arith.constant 0 : i32
    return %c0_i32, %c0_i32_0 : i32, i32
  }
  func.func @transform_3(%arg0: i32) -> (i32, i32, i32) {
    %c0_i32 = arith.constant 0 : i32
    %c0_i32_0 = arith.constant 0 : i32
    %c0_i32_1 = arith.constant 0 : i32
    %c0_i32_2 = arith.constant 0 : i32
    return %c0_i32, %c0_i32_0, %c0_i32_1 : i32, i32, i32
  }
  func.func @transform_4(%arg0: i32) -> (i32, i32) {
    %c0_i32 = arith.constant 0 : i32
    %c0_i32_0 = arith.constant 0 : i32
    %c0_i32_1 = arith.constant 0 : i32
    return %c0_i32, %c0_i32_0 : i32, i32
  }
  func.func @transform_5(%arg0: i32) -> (i32, i32, i32) {
    %c0_i32 = arith.constant 0 : i32
    %c0_i32_0 = arith.constant 0 : i32
    %c0_i32_1 = arith.constant 0 : i32
    %c0_i32_2 = arith.constant 0 : i32
    return %c0_i32, %c0_i32_0, %c0_i32_1 : i32, i32, i32
  }
  func.func @transform_6(%arg0: i32) -> (i32, i32) {
    %c0_i32 = arith.constant 0 : i32
    %c0_i32_0 = arith.constant 0 : i32
    %c0_i32_1 = arith.constant 0 : i32
    return %c0_i32, %c0_i32_0 : i32, i32
  }
  func.func @transform_7(%arg0: i32) -> (i32, i32, i32) {
    %c0_i32 = arith.constant 0 : i32
    %c0_i32_0 = arith.constant 0 : i32
    %c0_i32_1 = arith.constant 0 : i32
    %c0_i32_2 = arith.constant 0 : i32
    return %c0_i32, %c0_i32_0, %c0_i32_1 : i32, i32, i32
  }
  func.func @transform_8(%arg0: i32) -> (i32, i32) {
    %c0_i32 = arith.constant 0 : i32
    %c0_i32_0 = arith.constant 0 : i32
    %c0_i32_1 = arith.constant 0 : i32
    return %c0_i32, %c0_i32_0 : i32, i32
  }
  func.func @transform_9(%arg0: i32) -> (i32, i32) {
    %c0_i32 = arith.constant 0 : i32
    %c0_i32_0 = arith.constant 0 : i32
    return %arg0, %c0_i32 : i32, i32
  }
}

</mosaic_0001>

<llo_original>
// kernel: stereo_matching_forward.1
$region0: #{stereo_matching_forward.1}
  #allocation0 [shape = 'u32[]', space=smem, size = 0x4, offset = 0x4, fixed_abs, tag = 'smem constant byte address 0x4 - core index']
  #allocation1 [shape = 'u32[144,128]{1,0:T(1,128)}', space=vmem, size = 0x12000, scoped, tag = 'internal scratch']
  #allocation2 [shape = 'bf16[288,64]{1,0:T(16,128)(2,1)}', space=vmem, size = 0x12000, scoped, tag = 'scratch operand']
  #allocation3 [shape = 'bf16[288,64]{1,0:T(16,128)(2,1)}', space=vmem, size = 0x12000, scoped, tag = 'scratch operand']
  %s0 = inlined_call_operand.vmem [shape: f32[480,9], index: 0, kind: input, shape index: {}]
  %s1 = inlined_call_operand.vmem [shape: f32[9,64], index: 1, kind: input, shape index: {}]
  %s2 = inlined_call_operand.vmem [shape: f32[1,64], index: 2, kind: input, shape index: {}]
  %s3 = inlined_call_operand.vmem [shape: bf16[3,64,192], index: 3, kind: input, shape index: {}]
  %s4 = inlined_call_operand.vmem [shape: f32[1,64], index: 4, kind: input, shape index: {}]
  %s5 = inlined_call_operand.vmem [shape: bf16[3,64,192], index: 5, kind: input, shape index: {}]
  %s6 = inlined_call_operand.vmem [shape: f32[1,64], index: 6, kind: input, shape index: {}]
  %s7 = inlined_call_operand.vmem [shape: bf16[3,64,192], index: 7, kind: input, shape index: {}]
  %s8 = inlined_call_operand.vmem [shape: f32[1,64], index: 8, kind: input, shape index: {}]
  %s9 = inlined_call_operand.vmem [shape: f32[256,64], index: 9, kind: output, shape index: {}]
  %s10 = sld [smem:[#allocation0]]
  $region69: #{stereo_matching_forward.1} parent=0
    _
  %s12 = ssub.s32 1, %s10
  %s13 = scalar_select 0, %s12, %s10
  loop: start=0, step=1, limit=4
  $region2: #{stereo_matching_forward.1} parent=0 // loop_pre_header
    _
  $region3: #{stereo_matching_forward.1} parent=0 // loop_header
    %s15 = sphi 0, %s19
    %p16 = scmp.ge.s32.totalorder %s15, 4
    %s25 = sphi 0, %s27
    %s28 = sphi 0, %s25
    %s29 = sphi 0, %s28
    %s45 = sphi 0, %s29
    %s49 = sphi 0, %s49
    %s51 = sphi 0, %s49
    %s52 = sphi 0, %s51
    %s66 = sphi 0, %s52
    %s70 = sphi 0, %s70
    %s72 = sphi 0, %s70
    %s73 = sphi 0, %s72
    %s87 = sphi 0, %s73
    %s91 = sphi 0, %s91
    %s93 = sphi 0, %s91
    %s94 = sphi 0, %s93
    %s108 = sphi 0, %s94
    %s112 = sphi 0, %s112
    %s114 = sphi 0, %s112
    %s115 = sphi 0, %s114
    %s129 = sphi 0, %s115
    %s133 = sphi 0, %s133
    %s135 = sphi 0, %s133
    %s136 = sphi 0, %s135
    %s150 = sphi 0, %s136
    %s154 = sphi 0, %s154
    %s156 = sphi 0, %s154
    %s157 = sphi 0, %s156
    %s171 = sphi 0, %s157
    %s175 = sphi 0, %s175
    %s177 = sphi 0, %s175
    %s178 = sphi 0, %s177
    %s192 = sphi 0, %s178
    %s196 = sphi 0, %s196
    %s198 = sphi 0, %s196
    %s199 = sphi 0, %s198
    %s213 = sphi 0, %s199
    %s219 = sphi 0, %s221
    %s222 = sphi 0, %s219
    %s223 = sphi 0, %s222
    %s239 = sphi 0, %s223
  $region4: #{stereo_matching_forward.1} parent=0 // loop_header_branch
    %18 = sbr.rel (%p16) target = $region8
  $region5: #{stereo_matching_forward.1} parent=0 // loop_body
    %s20 = ssub.s32 %s15, 1
    %s21 = ssub.s32 %s15, 2
    %s22 = sadd.s32 %s15, 1
    %s23 = ssub.s32 %s15, %s22
    %p24 = scmp.eq.s32.totalorder %s23, 0
    %s26 = sadd.s32 %s25, 1
    %s27 = scalar_select %p24, %s25, %s26
    %p30 = pneg %p24
    %p31 = scmp.eq.s32.totalorder %s15, 1
    %p32 = por %p30, %p31
    %p33 = scmp.ne.s32.totalorder %s25, %s28
    %p34 = scmp.eq.s32.totalorder %s15, 0
    %p35 = por %p33, %p34
    %p36 = scmp.ne.s32.totalorder %s25, %s28
    %p37 = scmp.eq.s32.totalorder %s20, 1
    %p38 = por %p36, %p37
    %p39 = scmp.ne.s32.totalorder %s28, %s29
    %p40 = scmp.eq.s32.totalorder %s20, 0
    %p41 = por %p39, %p40
    %p42 = scmp.ne.s32.totalorder %s28, %s29
    %p43 = scmp.eq.s32.totalorder %s21, 1
    %p44 = por %p42, %p43
    %p46 = scmp.ne.s32.totalorder %s29, %s45
    %p47 = scmp.eq.s32.totalorder %s21, 0
    %p48 = por %p46, %p47
    %s50 = sadd.s32 %s49, 1
    %p53 = scmp.eq.s32.totalorder %s15, 1
    %p54 = scmp.ne.s32.totalorder %s49, %s51
    %p55 = scmp.eq.s32.totalorder %s15, 0
    %p56 = por %p54, %p55
    %p57 = scmp.ne.s32.totalorder %s49, %s51
    %p58 = scmp.eq.s32.totalorder %s20, 1
    %p59 = por %p57, %p58
    %p60 = scmp.ne.s32.totalorder %s51, %s52
    %p61 = scmp.eq.s32.totalorder %s20, 0
    %p62 = por %p60, %p61
    %p63 = scmp.ne.s32.totalorder %s51, %s52
    %p64 = scmp.eq.s32.totalorder %s21, 1
    %p65 = por %p63, %p64
    %p67 = scmp.ne.s32.totalorder %s52, %s66
    %p68 = scmp.eq.s32.totalorder %s21, 0
    %p69 = por %p67, %p68
    %s71 = sadd.s32 %s70, 1
    %p74 = scmp.eq.s32.totalorder %s15, 1
    %p75 = scmp.ne.s32.totalorder %s70, %s72
    %p76 = scmp.eq.s32.totalorder %s15, 0
    %p77 = por %p75, %p76
    %p78 = scmp.ne.s32.totalorder %s70, %s72
    %p79 = scmp.eq.s32.totalorder %s20, 1
    %p80 = por %p78, %p79
    %p81 = scmp.ne.s32.totalorder %s72, %s73
    %p82 = scmp.eq.s32.totalorder %s20, 0
    %p83 = por %p81, %p82
    %p84 = scmp.ne.s32.totalorder %s72, %s73
    %p85 = scmp.eq.s32.totalorder %s21, 1
    %p86 = por %p84, %p85
    %p88 = scmp.ne.s32.totalorder %s73, %s87
    %p89 = scmp.eq.s32.totalorder %s21, 0
    %p90 = por %p88, %p89
    %s92 = sadd.s32 %s91, 1
    %p95 = scmp.eq.s32.totalorder %s15, 1
    %p96 = scmp.ne.s32.totalorder %s91, %s93
    %p97 = scmp.eq.s32.totalorder %s15, 0
    %p98 = por %p96, %p97
    %p99 = scmp.ne.s32.totalorder %s91, %s93
    %p100 = scmp.eq.s32.totalorder %s20, 1
    %p101 = por %p99, %p100
    %p102 = scmp.ne.s32.totalorder %s93, %s94
    %p103 = scmp.eq.s32.totalorder %s20, 0
    %p104 = por %p102, %p103
    %p105 = scmp.ne.s32.totalorder %s93, %s94
    %p106 = scmp.eq.s32.totalorder %s21, 1
    %p107 = por %p105, %p106
    %p109 = scmp.ne.s32.totalorder %s94, %s108
    %p110 = scmp.eq.s32.totalorder %s21, 0
    %p111 = por %p109, %p110
    %s113 = sadd.s32 %s112, 1
    %p116 = scmp.eq.s32.totalorder %s15, 1
    %p117 = scmp.ne.s32.totalorder %s112, %s114
    %p118 = scmp.eq.s32.totalorder %s15, 0
    %p119 = por %p117, %p118
    %p120 = scmp.ne.s32.totalorder %s112, %s114
    %p121 = scmp.eq.s32.totalorder %s20, 1
    %p122 = por %p120, %p121
    %p123 = scmp.ne.s32.totalorder %s114, %s115
    %p124 = scmp.eq.s32.totalorder %s20, 0
    %p125 = por %p123, %p124
    %p126 = scmp.ne.s32.totalorder %s114, %s115
    %p127 = scmp.eq.s32.totalorder %s21, 1
    %p128 = por %p126, %p127
    %p130 = scmp.ne.s32.totalorder %s115, %s129
    %p131 = scmp.eq.s32.totalorder %s21, 0
    %p132 = por %p130, %p131
    %s134 = sadd.s32 %s133, 1
    %p137 = scmp.eq.s32.totalorder %s15, 1
    %p138 = scmp.ne.s32.totalorder %s133, %s135
    %p139 = scmp.eq.s32.totalorder %s15, 0
    %p140 = por %p138, %p139
    %p141 = scmp.ne.s32.totalorder %s133, %s135
    %p142 = scmp.eq.s32.totalorder %s20, 1
    %p143 = por %p141, %p142
    %p144 = scmp.ne.s32.totalorder %s135, %s136
    %p145 = scmp.eq.s32.totalorder %s20, 0
    %p146 = por %p144, %p145
    %p147 = scmp.ne.s32.totalorder %s135, %s136
    %p148 = scmp.eq.s32.totalorder %s21, 1
    %p149 = por %p147, %p148
    %p151 = scmp.ne.s32.totalorder %s136, %s150
    %p152 = scmp.eq.s32.totalorder %s21, 0
    %p153 = por %p151, %p152
    %s155 = sadd.s32 %s154, 1
    %p158 = scmp.eq.s32.totalorder %s15, 1
    %p159 = scmp.ne.s32.totalorder %s154, %s156
    %p160 = scmp.eq.s32.totalorder %s15, 0
    %p161 = por %p159, %p160
    %p162 = scmp.ne.s32.totalorder %s154, %s156
    %p163 = scmp.eq.s32.totalorder %s20, 1
    %p164 = por %p162, %p163
    %p165 = scmp.ne.s32.totalorder %s156, %s157
    %p166 = scmp.eq.s32.totalorder %s20, 0
    %p167 = por %p165, %p166
    %p168 = scmp.ne.s32.totalorder %s156, %s157
    %p169 = scmp.eq.s32.totalorder %s21, 1
    %p170 = por %p168, %p169
    %p172 = scmp.ne.s32.totalorder %s157, %s171
    %p173 = scmp.eq.s32.totalorder %s21, 0
    %p174 = por %p172, %p173
    %s176 = sadd.s32 %s175, 1
    %p179 = scmp.eq.s32.totalorder %s15, 1
    %p180 = scmp.ne.s32.totalorder %s175, %s177
    %p181 = scmp.eq.s32.totalorder %s15, 0
    %p182 = por %p180, %p181
    %p183 = scmp.ne.s32.totalorder %s175, %s177
    %p184 = scmp.eq.s32.totalorder %s20, 1
    %p185 = por %p183, %p184
    %p186 = scmp.ne.s32.totalorder %s177, %s178
    %p187 = scmp.eq.s32.totalorder %s20, 0
    %p188 = por %p186, %p187
    %p189 = scmp.ne.s32.totalorder %s177, %s178
    %p190 = scmp.eq.s32.totalorder %s21, 1
    %p191 = por %p189, %p190
    %p193 = scmp.ne.s32.totalorder %s178, %s192
    %p194 = scmp.eq.s32.totalorder %s21, 0
    %p195 = por %p193, %p194
    %s197 = sadd.s32 %s196, 1
    %p200 = scmp.eq.s32.totalorder %s15, 1
    %p201 = scmp.ne.s32.totalorder %s196, %s198
    %p202 = scmp.eq.s32.totalorder %s15, 0
    %p203 = por %p201, %p202
    %p204 = scmp.ne.s32.totalorder %s196, %s198
    %p205 = scmp.eq.s32.totalorder %s20, 1
    %p206 = por %p204, %p205
    %p207 = scmp.ne.s32.totalorder %s198, %s199
    %p208 = scmp.eq.s32.totalorder %s20, 0
    %p209 = por %p207, %p208
    %p210 = scmp.ne.s32.totalorder %s198, %s199
    %p211 = scmp.eq.s32.totalorder %s21, 1
    %p212 = por %p210, %p211
    %p214 = scmp.ne.s32.totalorder %s199, %s213
    %p215 = scmp.eq.s32.totalorder %s21, 0
    %p216 = por %p214, %p215
    %s217 = ssub.s32 %s15, %s22
    %p218 = scmp.eq.s32.totalorder %s217, 0
    %s220 = sadd.s32 %s219, 1
    %s221 = scalar_select %p218, %s219, %s220
    %p224 = pneg %p218
    %p225 = scmp.eq.s32.totalorder %s15, 1
    %p226 = por %p224, %p225
    %p227 = scmp.ne.s32.totalorder %s219, %s222
    %p228 = scmp.eq.s32.totalorder %s15, 0
    %p229 = por %p227, %p228
    %p230 = scmp.ne.s32.totalorder %s219, %s222
    %p231 = scmp.eq.s32.totalorder %s20, 1
    %p232 = por %p230, %p231
    %p233 = scmp.ne.s32.totalorder %s222, %s223
    %p234 = scmp.eq.s32.totalorder %s20, 0
    %p235 = por %p233, %p234
    %p236 = scmp.ne.s32.totalorder %s222, %s223
    %p237 = scmp.eq.s32.totalorder %s21, 1
    %p238 = por %p236, %p237
    %p240 = scmp.ne.s32.totalorder %s223, %s239
    %p241 = scmp.eq.s32.totalorder %s21, 0
    %p242 = por %p240, %p241
    %p243 = scmp.le.s32.totalorder 1, %s15
    %p244 = scmp.lt.s32.totalorder %s15, 3
    %p245 = pnand %p243, %p244
    %p246 = pneg %p245
    // Predicated region
    $region9: #{stereo_matching_forward.1} parent=5 // pred_check
      _
    $region10: #{stereo_matching_forward.1} parent=5 // pred_check_branch
      %248 = sbr.rel (%p245) target = $region12
    $region11: #{stereo_matching_forward.1} parent=5 // pred_region
      %s249 = ssub.s32 %s15, 1
      // Predicated region
      $region13: #{stereo_matching_forward.1} parent=11 // pred_check
        %p250 = pneg %p62
      $region14: #{stereo_matching_forward.1} parent=11 // pred_check_branch
        %252 = sbr.rel (%p250) target = $region16
      $region15: #{stereo_matching_forward.1} parent=11 // pred_region
        _
      $region16: #{stereo_matching_forward.1} parent=11 // pred_fallthru
        _
      // Predicated region
      $region17: #{stereo_matching_forward.1} parent=11 // pred_check
        %p253 = pneg %p83
      $region18: #{stereo_matching_forward.1} parent=11 // pred_check_branch
        %255 = sbr.rel (%p253) target = $region20
      $region19: #{stereo_matching_forward.1} parent=11 // pred_region
        _
      $region20: #{stereo_matching_forward.1} parent=11 // pred_fallthru
        _
      // Predicated region
      $region21: #{stereo_matching_forward.1} parent=11 // pred_check
        %p256 = pneg %p104
      $region22: #{stereo_matching_forward.1} parent=11 // pred_check_branch
        %258 = sbr.rel (%p256) target = $region24
      $region23: #{stereo_matching_forward.1} parent=11 // pred_region
        _
      $region24: #{stereo_matching_forward.1} parent=11 // pred_fallthru
        _
      // Predicated region
      $region25: #{stereo_matching_forward.1} parent=11 // pred_check
        %p259 = pneg %p125
      $region26: #{stereo_matching_forward.1} parent=11 // pred_check_branch
        %261 = sbr.rel (%p259) target = $region28
      $region27: #{stereo_matching_forward.1} parent=11 // pred_region
        _
      $region28: #{stereo_matching_forward.1} parent=11 // pred_fallthru
        _
      // Predicated region
      $region29: #{stereo_matching_forward.1} parent=11 // pred_check
        %p262 = pneg %p146
      $region30: #{stereo_matching_forward.1} parent=11 // pred_check_branch
        %264 = sbr.rel (%p262) target = $region32
      $region31: #{stereo_matching_forward.1} parent=11 // pred_region
        _
      $region32: #{stereo_matching_forward.1} parent=11 // pred_fallthru
        _
      // Predicated region
      $region33: #{stereo_matching_forward.1} parent=11 // pred_check
        %p265 = pneg %p167
      $region34: #{stereo_matching_forward.1} parent=11 // pred_check_branch
        %267 = sbr.rel (%p265) target = $region36
      $region35: #{stereo_matching_forward.1} parent=11 // pred_region
        _
      $region36: #{stereo_matching_forward.1} parent=11 // pred_fallthru
        _
      // Predicated region
      $region37: #{stereo_matching_forward.1} parent=11 // pred_check
        %p268 = pneg %p188
      $region38: #{stereo_matching_forward.1} parent=11 // pred_check_branch
        %270 = sbr.rel (%p268) target = $region40
      $region39: #{stereo_matching_forward.1} parent=11 // pred_region
        _
      $region40: #{stereo_matching_forward.1} parent=11 // pred_fallthru
        _
      // Predicated region
      $region41: #{stereo_matching_forward.1} parent=11 // pred_check
        %p271 = pneg %p209
      $region42: #{stereo_matching_forward.1} parent=11 // pred_check_branch
        %273 = sbr.rel (%p271) target = $region44
      $region43: #{stereo_matching_forward.1} parent=11 // pred_region
        _
      $region44: #{stereo_matching_forward.1} parent=11 // pred_fallthru
        _
    $region12: #{stereo_matching_forward.1} parent=5 // pred_fallthru
      _
    %p274 = scmp.lt.s32.totalorder %s15, 2
    // Predicated region
    $region45: #{stereo_matching_forward.1} parent=5 // pred_check
      %p275 = pneg %p274
    $region46: #{stereo_matching_forward.1} parent=5 // pred_check_branch
      %277 = sbr.rel (%p275) target = $region48
    $region47: #{stereo_matching_forward.1} parent=5 // pred_region
      // Predicated region
      $region49: #{stereo_matching_forward.1} parent=47 // pred_check
        %p278 = pneg %p35
      $region50: #{stereo_matching_forward.1} parent=47 // pred_check_branch
        %280 = sbr.rel (%p278) target = $region52
      $region51: #{stereo_matching_forward.1} parent=47 // pred_region
        %s281 = smul.u32 30, %s15
        %p282 = scmp.lt.s32.totalorder %s281, 59
        %s283 = scalar_select %p282, %s281, 59
        %s284 = smul.addr %s283, 8
        %s285 = scalar_lea.vmem %s0, %s284
        %s286 = smul.u32 30, %s15
      $region52: #{stereo_matching_forward.1} parent=47 // pred_fallthru
        _
    $region48: #{stereo_matching_forward.1} parent=5 // pred_fallthru
      _
    %p287 = scmp.le.s32.totalorder 1, %s15
    %p288 = scmp.lt.s32.totalorder %s15, 3
    %p289 = pnand %p287, %p288
    %p290 = pneg %p289
    // Predicated region
    $region53: #{stereo_matching_forward.1} parent=5 // pred_check
      _
    $region54: #{stereo_matching_forward.1} parent=5 // pred_check_branch
      %292 = sbr.rel (%p289) target = $region56
    $region55: #{stereo_matching_forward.1} parent=5 // pred_region
      %s293 = ssub.s32 %s15, 1
      %s294 = smul.u32 30, %s20
      %p295 = scmp.lt.s32.totalorder %s294, 59
      %s296 = scalar_select %p295, %s294, 59
      %s297 = smul.addr %s296, 8
      %s298 = scalar_lea.vmem %s0, %s297
      %p299 = pneg %p41
      %p300 = pneg %p38
      %p301 = pneg %p62
      %p302 = pneg %p59
      %p303 = pneg %p83
      %p304 = pneg %p80
      %p305 = pneg %p104
      %p306 = pneg %p101
      %p307 = pneg %p125
      %p308 = pneg %p122
      %p309 = pneg %p146
      %p310 = pneg %p143
      %p311 = pneg %p167
      %p312 = pneg %p164
      %p313 = pneg %p188
      %p314 = pneg %p185
      %p315 = pneg %p209
      %p316 = pneg %p206
      %p317 = pneg %p235
      %p318 = pneg %p232
      %s319 = smul.u32 16, %s20
      %p320 = scmp.lt.s32.totalorder %s319, 31
      %s321 = scalar_select %p320, %s319, 31
      %s322 = smul.addr %s321, 8
      %s323 = scalar_lea.vmem %s9, %s322
      %s324 = smul.u32 30, %s20
      %p325 = scmp.lt.s32.totalorder %s324, 59
      %s326 = scalar_select %p325, %s324, 59
      %s327 = smul.addr %s326, 8
      %s328 = scalar_lea.vmem %s0, %s327
      %s329 = smul.u32 30, %s20
      %s330 = smul.u32 16, %s20
      %p331 = scmp.lt.s32.totalorder %s330, 31
      %s332 = scalar_select %p331, %s330, 31
      %s333 = smul.addr %s332, 8
      %s334 = scalar_lea.vmem %s9, %s333
      %s335 = smul.u32 16, %s20
      %vm337 = vcmask 523264
      %338 = vst.msk [vmem:[#allocation2 + $0x78] sm:$0xff] %vm337, 0
      %339 = vst.msk [vmem:[#allocation2 + $0x80] sm:$0xff] %vm337, 0
      %340 = vst.msk [vmem:[#allocation2 + $0x88] sm:$0xff] %vm337, 0
      %341 = vst.msk [vmem:[#allocation3 + $0x78] sm:$0xff] %vm337, 0
      %342 = vst.msk [vmem:[#allocation3 + $0x80] sm:$0xff] %vm337, 0
      %343 = vst.msk [vmem:[#allocation3 + $0x88] sm:$0xff] %vm337, 0
      %v344 = vld [vmem:[%s328] sm:$0xff]
      %v345 = vld [vmem:[%s328 + $0x8] sm:$0xff]
      %v346 = vld [vmem:[%s328 + $0x10] sm:$0xff]
      %v347 = vld [vmem:[%s328 + $0x18] sm:$0xff]
      %v348 = vld [vmem:[%s328 + $0x20] sm:$0xff]
      %v349 = vld [vmem:[%s328 + $0x28] sm:$0xff]
      %v350 = vld [vmem:[%s328 + $0x30] sm:$0xff]
      %v351 = vld [vmem:[%s328 + $0x38] sm:$0xff]
      %v352 = vld [vmem:[%s328 + $0x40] sm:$0xff]
      %v353 = vld [vmem:[%s328 + $0x48] sm:$0xff]
      %v354 = vld [vmem:[%s328 + $0x50] sm:$0xff]
      %v355 = vld [vmem:[%s328 + $0x58] sm:$0xff]
      %v356 = vld [vmem:[%s328 + $0x60] sm:$0xff]
      %v357 = vld [vmem:[%s328 + $0x68] sm:$0xff]
      %v358 = vld [vmem:[%s328 + $0x70] sm:$0xff]
      %v359 = vld [vmem:[%s328 + $0x78] sm:$0xff]
      %v360 = vld [vmem:[%s328 + $0x80] sm:$0xff]
      %v361 = vld [vmem:[%s328 + $0x88] sm:$0xff]
      %v362 = vld [vmem:[%s328 + $0x90] sm:$0xff]
      %v363 = vld [vmem:[%s328 + $0x98] sm:$0xff]
      %v364 = vld [vmem:[%s328 + $0xa0] sm:$0xff]
      %v365 = vld [vmem:[%s328 + $0xa8] sm:$0xff]
      %v366 = vld [vmem:[%s328 + $0xb0] sm:$0xff]
      %v367 = vld [vmem:[%s328 + $0xb8] sm:$0xff]
      %v368 = vld [vmem:[%s328 + $0xc0] sm:$0xff]
      %v369 = vld [vmem:[%s328 + $0xc8] sm:$0xff]
      %v370 = vld [vmem:[%s328 + $0xd0] sm:$0xff]
      %v371 = vld [vmem:[%s328 + $0xd8] sm:$0xff]
      %v372 = vld [vmem:[%s328 + $0xe0] sm:$0xff]
      %v373 = vld [vmem:[%s328 + $0xe8] sm:$0xff]
      %v374 = vld [vmem:[%s1] sm:$0xff]
      %v375 = vld [vmem:[%s1 + $0x8] sm:$0x1]
      %v376 = vld [vmem:[%s2] sm:$0x1]
      %v378 = vlaneseq
      %v379 = vshrl.u32 %v378, 7
      %v380 = vsub.s32 0, %v379
      %v381 = vrot.slane %v376, %v380
      %vm383 = vcmask 72704
      %v385 = vsel %vm383, %v344, 0
      %v388 = vsel %vm383, %v345, 0
      %v391 = vsel %vm383, %v346, 0
      %v394 = vsel %vm383, %v347, 0
      %v397 = vsel %vm383, %v348, 0
      %v400 = vsel %vm383, %v349, 0
      %v403 = vsel %vm383, %v350, 0
      %v406 = vsel %vm383, %v351, 0
      %v409 = vsel %vm383, %v352, 0
      %v412 = vsel %vm383, %v353, 0
      %v415 = vsel %vm383, %v354, 0
      %v418 = vsel %vm383, %v355, 0
      %v421 = vsel %vm383, %v356, 0
      %v424 = vsel %vm383, %v357, 0
      %v427 = vsel %vm383, %v358, 0
      %v430 = vsel %vm383, %v359, 0
      %v433 = vsel %vm383, %v360, 0
      %v436 = vsel %vm383, %v361, 0
      %v439 = vsel %vm383, %v362, 0
      %v442 = vsel %vm383, %v363, 0
      %v445 = vsel %vm383, %v364, 0
      %v448 = vsel %vm383, %v365, 0
      %v451 = vsel %vm383, %v366, 0
      %v454 = vsel %vm383, %v367, 0
      %v457 = vsel %vm383, %v368, 0
      %v460 = vsel %vm383, %v369, 0
      %v463 = vsel %vm383, %v370, 0
      %v466 = vsel %vm383, %v371, 0
      %v469 = vsel %vm383, %v372, 0
      %v472 = vsel %vm383, %v373, 0
      %vm474 = vcmask 1040384
      %v476 = vsel %vm474, %v375, 0
      %478 = vmatprep.subr.mxu0 0.0
      %479 = vmatpush1.msra.mxu0 %v374
      %480 = vmatprep.subr.mxu0 0.0
      %481 = vmatpush1.msra.mxu0 %v476
      %482 = vmatprep.subr.mxu0 0.0
      %483 = vmatpush1.msra.mxu0 0.0
      %484 = vmatprep.subr.mxu0 0.0
      %485 = vmatpush1.msra.mxu0 0.0
      %486 = vmatprep.subr.mxu0 0.0
      %487 = vmatpush1.msra.mxu0 0.0
      %488 = vmatprep.subr.mxu0 0.0
      %489 = vmatpush1.msra.mxu0 0.0
      %490 = vmatprep.subr.mxu0 0.0
      %491 = vmatpush1.msra.mxu0 0.0
      %492 = vmatprep.subr.mxu0 0.0
      %493 = vmatpush1.msra.mxu0 0.0
      %494 = vmatprep.subr.mxu0 0.0
      %495 = vmatpush1.msra.mxu0 0.0
      %496 = vmatprep.subr.mxu0 0.0
      %497 = vmatpush1.msra.mxu0 0.0
      %498 = vmatprep.subr.mxu0 0.0
      %499 = vmatpush1.msra.mxu0 0.0
      %500 = vmatprep.subr.mxu0 0.0
      %501 = vmatpush1.msra.mxu0 0.0
      %502 = vmatprep.subr.mxu0 0.0
      %503 = vmatpush1.msra.mxu0 0.0
      %504 = vmatprep.subr.mxu0 0.0
      %505 = vmatpush1.msra.mxu0 0.0
      %506 = vmatprep.subr.mxu0 0.0
      %507 = vmatpush1.msra.mxu0 0.0
      %508 = vmatprep.subr.mxu0 0.0
      %509 = vmatpush1.msra.mxu0 0.0
      %510 = vmatprep.subr.mxu0 0.0
      %511 = vmatpush1.msra.mxu0 0.0
      %512 = vmatprep.subr.mxu0 0.0
      %513 = vmatpush1.msra.mxu0 0.0
      %514 = vmatprep.subr.mxu0 0.0
      %515 = vmatpush1.msra.mxu0 0.0
      %516 = vmatprep.subr.mxu0 0.0
      %517 = vmatpush1.msra.mxu0 0.0
      %518 = vmatprep.subr.mxu0 0.0
      %519 = vmatpush1.msra.mxu0 0.0
      %520 = vmatprep.subr.mxu0 0.0
      %521 = vmatpush1.msra.mxu0 0.0
      %522 = vmatprep.subr.mxu0 0.0
      %523 = vmatpush1.msra.mxu0 0.0
      %524 = vmatprep.subr.mxu0 0.0
      %525 = vmatpush1.msra.mxu0 0.0
      %526 = vmatprep.subr.mxu0 0.0
      %527 = vmatpush1.msra.mxu0 0.0
      %528 = vmatprep.subr.mxu0 0.0
      %529 = vmatpush1.msra.mxu0 0.0
      %530 = vmatprep.subr.mxu0 0.0
      %531 = vmatpush1.msra.mxu0 0.0
      %532 = vmatprep.subr.mxu0 0.0
      %533 = vmatpush1.msra.mxu0 0.0
      %534 = vmatprep.subr.mxu0 0.0
      %535 = vmatpush1.msra.mxu0 0.0
      %536 = vmatprep.subr.mxu0 0.0
      %537 = vmatpush1.msra.mxu0 0.0
      %538 = vmatprep.subr.mxu0 0.0
      %539 = vmatpush1.msra.mxu0 0.0
      %540 = vmatprep.subr.mxu0 0.0
      %541 = vmatpush1.msra.mxu0 0.0
      %542 = vmatprep.mubr.f32.mxu0 0.0
      %543 = vmatmul.mubr.f32.gmra.mrb[0].mxu0 %v385
      %v544 = vpop.f32.mrb[0].mxu0
      %v545 = vadd.f32 %v381, %v544
      %v546 = vpop.f32.mrb[0].mxu0
      %547 = vmatprep.mubr.f32.mxu0 0.0
      %548 = vmatmul.mubr.f32.gmra.mrb[0].mxu0 %v388
      %v549 = vpop.f32.mrb[0].mxu0
      %v550 = vadd.f32 %v381, %v549
      %v551 = vpop.f32.mrb[0].mxu0
      %552 = vmatprep.mubr.f32.mxu0 0.0
      %553 = vmatmul.mubr.f32.gmra.mrb[0].mxu0 %v391
      %v554 = vpop.f32.mrb[0].mxu0
      %v555 = vadd.f32 %v381, %v554
      %v556 = vpop.f32.mrb[0].mxu0
      %557 = vmatprep.mubr.f32.mxu0 0.0
      %558 = vmatmul.mubr.f32.gmra.mrb[0].mxu0 %v394
      %v559 = vpop.f32.mrb[0].mxu0
      %v560 = vadd.f32 %v381, %v559
      %v561 = vpop.f32.mrb[0].mxu0
      %562 = vmatprep.mubr.f32.mxu0 0.0
      %563 = vmatmul.mubr.f32.gmra.mrb[0].mxu0 %v397
      %v564 = vpop.f32.mrb[0].mxu0
      %v565 = vadd.f32 %v381, %v564
      %v566 = vpop.f32.mrb[0].mxu0
      %567 = vmatprep.mubr.f32.mxu0 0.0
      %568 = vmatmul.mubr.f32.gmra.mrb[0].mxu0 %v400
      %v569 = vpop.f32.mrb[0].mxu0
      %v570 = vadd.f32 %v381, %v569
      %v571 = vpop.f32.mrb[0].mxu0
      %572 = vmatprep.mubr.f32.mxu0 0.0
      %573 = vmatmul.mubr.f32.gmra.mrb[0].mxu0 %v403
      %v574 = vpop.f32.mrb[0].mxu0
      %v575 = vadd.f32 %v381, %v574
      %v576 = vpop.f32.mrb[0].mxu0
      %577 = vmatprep.mubr.f32.mxu0 0.0
      %578 = vmatmul.mubr.f32.gmra.mrb[0].mxu0 %v406
      %v579 = vpop.f32.mrb[0].mxu0
      %v580 = vadd.f32 %v381, %v579
      %v581 = vpop.f32.mrb[0].mxu0
      %582 = vmatprep.mubr.f32.mxu0 0.0
      %583 = vmatmul.mubr.f32.gmra.mrb[0].mxu0 %v409
      %v584 = vpop.f32.mrb[0].mxu0
      %v585 = vadd.f32 %v381, %v584
      %v586 = vpop.f32.mrb[0].mxu0
      %587 = vmatprep.mubr.f32.mxu0 0.0
      %588 = vmatmul.mubr.f32.gmra.mrb[0].mxu0 %v412
      %v589 = vpop.f32.mrb[0].mxu0
      %v590 = vadd.f32 %v381, %v589
      %v591 = vpop.f32.mrb[0].mxu0
      %592 = vmatprep.mubr.f32.mxu0 0.0
      %593 = vmatmul.mubr.f32.gmra.mrb[0].mxu0 %v415
      %v594 = vpop.f32.mrb[0].mxu0
      %v595 = vadd.f32 %v381, %v594
      %v596 = vpop.f32.mrb[0].mxu0
      %597 = vmatprep.mubr.f32.mxu0 0.0
      %598 = vmatmul.mubr.f32.gmra.mrb[0].mxu0 %v418
      %v599 = vpop.f32.mrb[0].mxu0
      %v600 = vadd.f32 %v381, %v599
      %v601 = vpop.f32.mrb[0].mxu0
      %602 = vmatprep.mubr.f32.mxu0 0.0
      %603 = vmatmul.mubr.f32.gmra.mrb[0].mxu0 %v421
      %v604 = vpop.f32.mrb[0].mxu0
      %v605 = vadd.f32 %v381, %v604
      %v606 = vpop.f32.mrb[0].mxu0
      %607 = vmatprep.mubr.f32.mxu0 0.0
      %608 = vmatmul.mubr.f32.gmra.mrb[0].mxu0 %v424
      %v609 = vpop.f32.mrb[0].mxu0
      %v610 = vadd.f32 %v381, %v609
      %v611 = vpop.f32.mrb[0].mxu0
      %612 = vmatprep.mubr.f32.mxu0 0.0
      %613 = vmatmul.mubr.f32.gmra.mrb[0].mxu0 %v427
      %v614 = vpop.f32.mrb[0].mxu0
      %v615 = vadd.f32 %v381, %v614
      %v616 = vpop.f32.mrb[0].mxu0
      %617 = vmatprep.mubr.f32.mxu0 0.0
      %618 = vmatmul.mubr.f32.gmra.mrb[0].mxu0 %v430
      %v619 = vpop.f32.mrb[0].mxu0
      %v620 = vadd.f32 %v381, %v619
      %v621 = vpop.f32.mrb[0].mxu0
      %622 = vmatprep.mubr.f32.mxu0 0.0
      %623 = vmatmul.mubr.f32.gmra.mrb[0].mxu0 %v433
      %v624 = vpop.f32.mrb[0].mxu0
      %v625 = vadd.f32 %v381, %v624
      %v626 = vpop.f32.mrb[0].mxu0
      %627 = vmatprep.mubr.f32.mxu0 0.0
      %628 = vmatmul.mubr.f32.gmra.mrb[0].mxu0 %v436
      %v629 = vpop.f32.mrb[0].mxu0
      %v630 = vadd.f32 %v381, %v629
      %v631 = vpop.f32.mrb[0].mxu0
      %632 = vmatprep.mubr.f32.mxu0 0.0
      %633 = vmatmul.mubr.f32.gmra.mrb[0].mxu0 %v439
      %v634 = vpop.f32.mrb[0].mxu0
      %v635 = vadd.f32 %v381, %v634
      %v636 = vpop.f32.mrb[0].mxu0
      %637 = vmatprep.mubr.f32.mxu0 0.0
      %638 = vmatmul.mubr.f32.gmra.mrb[0].mxu0 %v442
      %v639 = vpop.f32.mrb[0].mxu0
      %v640 = vadd.f32 %v381, %v639
      %v641 = vpop.f32.mrb[0].mxu0
      %642 = vmatprep.mubr.f32.mxu0 0.0
      %643 = vmatmul.mubr.f32.gmra.mrb[0].mxu0 %v445
      %v644 = vpop.f32.mrb[0].mxu0
      %v645 = vadd.f32 %v381, %v644
      %v646 = vpop.f32.mrb[0].mxu0
      %647 = vmatprep.mubr.f32.mxu0 0.0
      %648 = vmatmul.mubr.f32.gmra.mrb[0].mxu0 %v448
      %v649 = vpop.f32.mrb[0].mxu0
      %v650 = vadd.f32 %v381, %v649
      %v651 = vpop.f32.mrb[0].mxu0
      %652 = vmatprep.mubr.f32.mxu0 0.0
      %653 = vmatmul.mubr.f32.gmra.mrb[0].mxu0 %v451
      %v654 = vpop.f32.mrb[0].mxu0
      %v655 = vadd.f32 %v381, %v654
      %v656 = vpop.f32.mrb[0].mxu0
      %657 = vmatprep.mubr.f32.mxu0 0.0
      %658 = vmatmul.mubr.f32.gmra.mrb[0].mxu0 %v454
      %v659 = vpop.f32.mrb[0].mxu0
      %v660 = vadd.f32 %v381, %v659
      %v661 = vpop.f32.mrb[0].mxu0
      %662 = vmatprep.mubr.f32.mxu0 0.0
      %663 = vmatmul.mubr.f32.gmra.mrb[0].mxu0 %v457
      %v664 = vpop.f32.mrb[0].mxu0
      %v665 = vadd.f32 %v381, %v664
      %v666 = vpop.f32.mrb[0].mxu0
      %667 = vmatprep.mubr.f32.mxu0 0.0
      %668 = vmatmul.mubr.f32.gmra.mrb[0].mxu0 %v460
      %v669 = vpop.f32.mrb[0].mxu0
      %v670 = vadd.f32 %v381, %v669
      %v671 = vpop.f32.mrb[0].mxu0
      %672 = vmatprep.mubr.f32.mxu0 0.0
      %673 = vmatmul.mubr.f32.gmra.mrb[0].mxu0 %v463
      %v674 = vpop.f32.mrb[0].mxu0
      %v675 = vadd.f32 %v381, %v674
      %v676 = vpop.f32.mrb[0].mxu0
      %677 = vmatprep.mubr.f32.mxu0 0.0
      %678 = vmatmul.mubr.f32.gmra.mrb[0].mxu0 %v466
      %v679 = vpop.f32.mrb[0].mxu0
      %v680 = vadd.f32 %v381, %v679
      %v681 = vpop.f32.mrb[0].mxu0
      %682 = vmatprep.mubr.f32.mxu0 0.0
      %683 = vmatmul.mubr.f32.gmra.mrb[0].mxu0 %v469
      %v684 = vpop.f32.mrb[0].mxu0
      %v685 = vadd.f32 %v381, %v684
      %v686 = vpop.f32.mrb[0].mxu0
      %687 = vmatprep.mubr.f32.mxu0 0.0
      %688 = vmatmul.mubr.f32.gmra.mrb[0].mxu0 %v472
      %v689 = vpop.f32.mrb[0].mxu0
      %v690 = vadd.f32 %v381, %v689
      %v691 = vpop.f32.mrb[0].mxu0
      %692 = vdwg.mxu0
      %v693 = vmax.f32 %v545, 0.0
      %v694 = vmax.f32 %v550, 0.0
      %v695 = vmax.f32 %v555, 0.0
      %v696 = vmax.f32 %v560, 0.0
      %v697 = vmax.f32 %v565, 0.0
      %v698 = vmax.f32 %v570, 0.0
      %v699 = vmax.f32 %v575, 0.0
      %v700 = vmax.f32 %v580, 0.0
      %v701 = vmax.f32 %v585, 0.0
      %v702 = vmax.f32 %v590, 0.0
      %v703 = vmax.f32 %v595, 0.0
      %v704 = vmax.f32 %v600, 0.0
      %v705 = vmax.f32 %v605, 0.0
      %v706 = vmax.f32 %v610, 0.0
      %v707 = vmax.f32 %v615, 0.0
      %v708 = vmax.f32 %v620, 0.0
      %v709 = vmax.f32 %v625, 0.0
      %v710 = vmax.f32 %v630, 0.0
      %v711 = vmax.f32 %v635, 0.0
      %v712 = vmax.f32 %v640, 0.0
      %v713 = vmax.f32 %v645, 0.0
      %v714 = vmax.f32 %v650, 0.0
      %v715 = vmax.f32 %v655, 0.0
      %v716 = vmax.f32 %v660, 0.0
      %v717 = vmax.f32 %v665, 0.0
      %v718 = vmax.f32 %v670, 0.0
      %v719 = vmax.f32 %v675, 0.0
      %v720 = vmax.f32 %v680, 0.0
      %v721 = vmax.f32 %v685, 0.0
      %v722 = vmax.f32 %v690, 0.0
      %v723 = vpack.c.bf16 %v694, %v693
      %v724 = vpack.c.bf16 %v696, %v695
      %v725 = vpack.c.bf16 %v698, %v697
      %v726 = vpack.c.bf16 %v700, %v699
      %v727 = vpack.c.bf16 %v702, %v701
      %v728 = vpack.c.bf16 %v704, %v703
      %v729 = vpack.c.bf16 %v706, %v705
      %v730 = vpack.c.bf16 %v708, %v707
      %v731 = vpack.c.bf16 %v710, %v709
      %v732 = vpack.c.bf16 %v712, %v711
      %v733 = vpack.c.bf16 %v714, %v713
      %v734 = vpack.c.bf16 %v716, %v715
      %v735 = vpack.c.bf16 %v718, %v717
      %v736 = vpack.c.bf16 %v720, %v719
      %v737 = vpack.c.bf16 %v722, %v721
      %738 = vst.msk [vmem:[#allocation2] sm:$0xff] %vm337, %v723
      %739 = vst.msk [vmem:[#allocation2 + $0x8] sm:$0xff] %vm337, %v724
      %740 = vst.msk [vmem:[#allocation2 + $0x10] sm:$0xff] %vm337, %v725
      %741 = vst.msk [vmem:[#allocation2 + $0x18] sm:$0xff] %vm337, %v726
      %742 = vst.msk [vmem:[#allocation2 + $0x20] sm:$0xff] %vm337, %v727
      %743 = vst.msk [vmem:[#allocation2 + $0x28] sm:$0xff] %vm337, %v728
      %744 = vst.msk [vmem:[#allocation2 + $0x30] sm:$0xff] %vm337, %v729
      %745 = vst.msk [vmem:[#allocation2 + $0x38] sm:$0xff] %vm337, %v730
      %746 = vst.msk [vmem:[#allocation2 + $0x40] sm:$0xff] %vm337, %v731
      %747 = vst.msk [vmem:[#allocation2 + $0x48] sm:$0xff] %vm337, %v732
      %748 = vst.msk [vmem:[#allocation2 + $0x50] sm:$0xff] %vm337, %v733
      %749 = vst.msk [vmem:[#allocation2 + $0x58] sm:$0xff] %vm337, %v734
      %750 = vst.msk [vmem:[#allocation2 + $0x60] sm:$0xff] %vm337, %v735
      %751 = vst.msk [vmem:[#allocation2 + $0x68] sm:$0xff] %vm337, %v736
      %752 = vst.msk [vmem:[#allocation2 + $0x70] sm:$0xff] %vm337, %v737
      %v753 = vld [vmem:[#allocation2] sm:$0xff]
      %v754 = vld [vmem:[#allocation2 + $0x8] sm:$0xff]
      %v755 = vld [vmem:[#allocation2 + $0x10] sm:$0xff]
      %v756 = vld [vmem:[#allocation2 + $0x18] sm:$0xff]
      %v757 = vld [vmem:[#allocation2 + $0x20] sm:$0xff]
      %v758 = vld [vmem:[#allocation2 + $0x28] sm:$0xff]
      %v759 = vld [vmem:[#allocation2 + $0x30] sm:$0xff]
      %v760 = vld [vmem:[#allocation2 + $0x38] sm:$0xff]
      %v761 = vld [vmem:[#allocation2 + $0x40] sm:$0xff]
      %v762 = vld [vmem:[#allocation2 + $0x48] sm:$0xff]
      %v763 = vld [vmem:[#allocation2 + $0x50] sm:$0xff]
      %v764 = vld [vmem:[#allocation2 + $0x58] sm:$0xff]
      %v765 = vld [vmem:[#allocation2 + $0x60] sm:$0xff]
      %v766 = vld [vmem:[#allocation2 + $0x68] sm:$0xff]
      %v767 = vld [vmem:[#allocation2 + $0x70] sm:$0xff]
      %v768 = vld [vmem:[#allocation2 + $0x78] sm:$0xff]
      %v769 = vld [vmem:[%s3] sm:$0xff]
      %v770 = vld [vmem:[%s3 + $0x8] sm:$0xff]
      %v771 = vld [vmem:[%s3 + $0x10] sm:$0xff]
      %v772 = vld [vmem:[%s3 + $0x18] sm:$0xff]
      %v773 = vld [vmem:[%s3 + $0x20] sm:$0xff]
      %v774 = vld [vmem:[%s3 + $0x28] sm:$0xff]
      %v775 = vld [vmem:[%s3 + $0x30] sm:$0xff]
      %v776 = vld [vmem:[%s3 + $0x38] sm:$0xff]
      %v777 = vld [vmem:[#allocation2 + $0x80] sm:$0xff]
      %s778 = scalar_lea.vmem %s3, 64
      %v779 = vld [vmem:[%s778] sm:$0xff]
      %v780 = vld [vmem:[%s778 + $0x8] sm:$0xff]
      %v781 = vld [vmem:[%s778 + $0x10] sm:$0xff]
      %v782 = vld [vmem:[%s778 + $0x18] sm:$0xff]
      %v783 = vld [vmem:[%s778 + $0x20] sm:$0xff]
      %v784 = vld [vmem:[%s778 + $0x28] sm:$0xff]
      %v785 = vld [vmem:[%s778 + $0x30] sm:$0xff]
      %v786 = vld [vmem:[%s778 + $0x38] sm:$0xff]
      %v795 = vunpack.c.l.b16 %v779
      %v796 = vunpack.c.h.b16 %v779
      %v797 = vunpack.c.l.b16 %v780
      %v798 = vunpack.c.h.b16 %v780
      %v799 = vunpack.c.l.b16 %v781
      %v800 = vunpack.c.h.b16 %v781
      %v801 = vunpack.c.l.b16 %v782
      %v802 = vunpack.c.h.b16 %v782
      %v803 = vunpack.c.l.b16 %v783
      %v804 = vunpack.c.h.b16 %v783
      %v805 = vunpack.c.l.b16 %v784
      %v806 = vunpack.c.h.b16 %v784
      %v807 = vunpack.c.l.b16 %v785
      %v808 = vunpack.c.h.b16 %v785
      %v809 = vunpack.c.l.b16 %v786
      %v810 = vunpack.c.h.b16 %v786
      %v811 = vpack.c.b16 %v797, %v795
      %v812 = vpack.c.b16 %v798, %v796
      %v813 = vpack.c.b16 %v801, %v799
      %v814 = vpack.c.b16 %v802, %v800
      %v815 = vpack.c.b16 %v805, %v803
      %v816 = vpack.c.b16 %v806, %v804
      %v817 = vpack.c.b16 %v809, %v807
      %v818 = vpack.c.b16 %v810, %v808
      %v828 = vsel %vm337, %v754, 0
      %v831 = vsel %vm337, %v755, 0
      %v834 = vsel %vm337, %v756, 0
      %v837 = vsel %vm337, %v757, 0
      %v840 = vsel %vm337, %v758, 0
      %v843 = vsel %vm337, %v759, 0
      %v846 = vsel %vm337, %v760, 0
      %v849 = vsel %vm337, %v761, 0
      %v852 = vsel %vm337, %v762, 0
      %v855 = vsel %vm337, %v763, 0
      %v858 = vsel %vm337, %v764, 0
      %v861 = vsel %vm337, %v765, 0
      %v864 = vsel %vm337, %v766, 0
      %v867 = vsel %vm337, %v767, 0
      %v870 = vsel %vm337, %v768, 0
      %v873 = vsel %vm337, %v777, 0
      %875 = vmatprep.subr.bf16.mxu0 %v812
      %876 = vmatpush1.bf16.msra.mxu0 %v811
      %877 = vmatprep.subr.bf16.mxu0 %v814
      %878 = vmatpush1.bf16.msra.mxu0 %v813
      %879 = vmatprep.subr.bf16.mxu0 %v816
      %880 = vmatpush1.bf16.msra.mxu0 %v815
      %881 = vmatprep.subr.bf16.mxu0 %v818
      %882 = vmatpush1.bf16.msra.mxu0 %v817
      %883 = vmatprep.subr.bf16.mxu0 0
      %884 = vmatpush1.bf16.msra.mxu0 0
      %885 = vmatprep.subr.bf16.mxu0 0
      %886 = vmatpush1.bf16.msra.mxu0 0
      %887 = vmatprep.subr.bf16.mxu0 0
      %888 = vmatpush1.bf16.msra.mxu0 0
      %889 = vmatprep.subr.bf16.mxu0 0
      %890 = vmatpush1.bf16.msra.mxu0 0
      %891 = vmatprep.subr.bf16.mxu0 0
      %892 = vmatpush1.bf16.msra.mxu0 0
      %893 = vmatprep.subr.bf16.mxu0 0
      %894 = vmatpush1.bf16.msra.mxu0 0
      %895 = vmatprep.subr.bf16.mxu0 0
      %896 = vmatpush1.bf16.msra.mxu0 0
      %897 = vmatprep.subr.bf16.mxu0 0
      %898 = vmatpush1.bf16.msra.mxu0 0
      %899 = vmatprep.subr.bf16.mxu0 0
      %900 = vmatpush1.bf16.msra.mxu0 0
      %901 = vmatprep.subr.bf16.mxu0 0
      %902 = vmatpush1.bf16.msra.mxu0 0
      %903 = vmatprep.subr.bf16.mxu0 0
      %904 = vmatpush1.bf16.msra.mxu0 0
      %905 = vmatprep.subr.bf16.mxu0 0
      %906 = vmatpush1.bf16.msra.mxu0 0
      %907 = vmatprep.mubr.bf16.mxu0 0
      %908 = vmatmul.mubr.bf16.gmra.mrb[0].mxu0 %v828
      %v909 = vpop.f32.mrb[0].mxu0
      %v910 = vadd.f32 0.0, %v909
      %v911 = vpop.f32.mrb[0].mxu0
      %v912 = vadd.f32 0.0, %v911
      %v913 = vpop.f32.mrb[0].mxu0
      %v914 = vadd.f32 0.0, %v913
      %v915 = vpop.f32.mrb[0].mxu0
      %v916 = vadd.f32 0.0, %v915
      %917 = vmatprep.mubr.bf16.mxu0 0
      %918 = vmatmul.mubr.bf16.gmra.mrb[0].mxu0 %v831
      %v919 = vpop.f32.mrb[0].mxu0
      %v920 = vadd.f32 0.0, %v919
      %v921 = vpop.f32.mrb[0].mxu0
      %v922 = vadd.f32 0.0, %v921
      %v923 = vpop.f32.mrb[0].mxu0
      %v924 = vadd.f32 0.0, %v923
      %v925 = vpop.f32.mrb[0].mxu0
      %v926 = vadd.f32 0.0, %v925
      %927 = vmatprep.mubr.bf16.mxu0 0
      %928 = vmatmul.mubr.bf16.gmra.mrb[0].mxu0 %v834
      %v929 = vpop.f32.mrb[0].mxu0
      %v930 = vadd.f32 0.0, %v929
      %v931 = vpop.f32.mrb[0].mxu0
      %v932 = vadd.f32 0.0, %v931
      %v933 = vpop.f32.mrb[0].mxu0
      %v934 = vadd.f32 0.0, %v933
      %v935 = vpop.f32.mrb[0].mxu0
      %v936 = vadd.f32 0.0, %v935
      %937 = vmatprep.mubr.bf16.mxu0 0
      %938 = vmatmul.mubr.bf16.gmra.mrb[0].mxu0 %v837
      %v939 = vpop.f32.mrb[0].mxu0
      %v940 = vadd.f32 0.0, %v939
      %v941 = vpop.f32.mrb[0].mxu0
      %v942 = vadd.f32 0.0, %v941
      %v943 = vpop.f32.mrb[0].mxu0
      %v944 = vadd.f32 0.0, %v943
      %v945 = vpop.f32.mrb[0].mxu0
      %v946 = vadd.f32 0.0, %v945
      %947 = vmatprep.mubr.bf16.mxu0 0
      %948 = vmatmul.mubr.bf16.gmra.mrb[0].mxu0 %v840
      %v949 = vpop.f32.mrb[0].mxu0
      %v950 = vadd.f32 0.0, %v949
      %v951 = vpop.f32.mrb[0].mxu0
      %v952 = vadd.f32 0.0, %v951
      %v953 = vpop.f32.mrb[0].mxu0
      %v954 = vadd.f32 0.0, %v953
      %v955 = vpop.f32.mrb[0].mxu0
      %v956 = vadd.f32 0.0, %v955
      %957 = vmatprep.mubr.bf16.mxu0 0
      %958 = vmatmul.mubr.bf16.gmra.mrb[0].mxu0 %v843
      %v959 = vpop.f32.mrb[0].mxu0
      %v960 = vadd.f32 0.0, %v959
      %v961 = vpop.f32.mrb[0].mxu0
      %v962 = vadd.f32 0.0, %v961
      %v963 = vpop.f32.mrb[0].mxu0
      %v964 = vadd.f32 0.0, %v963
      %v965 = vpop.f32.mrb[0].mxu0
      %v966 = vadd.f32 0.0, %v965
      %967 = vmatprep.mubr.bf16.mxu0 0
      %968 = vmatmul.mubr.bf16.gmra.mrb[0].mxu0 %v846
      %v969 = vpop.f32.mrb[0].mxu0
      %v970 = vadd.f32 0.0, %v969
      %v971 = vpop.f32.mrb[0].mxu0
      %v972 = vadd.f32 0.0, %v971
      %v973 = vpop.f32.mrb[0].mxu0
      %v974 = vadd.f32 0.0, %v973
      %v975 = vpop.f32.mrb[0].mxu0
      %v976 = vadd.f32 0.0, %v975
      %977 = vmatprep.mubr.bf16.mxu0 0
      %978 = vmatmul.mubr.bf16.gmra.mrb[0].mxu0 %v849
      %v979 = vpop.f32.mrb[0].mxu0
      %v980 = vadd.f32 0.0, %v979
      %v981 = vpop.f32.mrb[0].mxu0
      %v982 = vadd.f32 0.0, %v981
      %v983 = vpop.f32.mrb[0].mxu0
      %v984 = vadd.f32 0.0, %v983
      %v985 = vpop.f32.mrb[0].mxu0
      %v986 = vadd.f32 0.0, %v985
      %987 = vmatprep.mubr.bf16.mxu0 0
      %988 = vmatmul.mubr.bf16.gmra.mrb[0].mxu0 %v852
      %v989 = vpop.f32.mrb[0].mxu0
      %v990 = vadd.f32 0.0, %v989
      %v991 = vpop.f32.mrb[0].mxu0
      %v992 = vadd.f32 0.0, %v991
      %v993 = vpop.f32.mrb[0].mxu0
      %v994 = vadd.f32 0.0, %v993
      %v995 = vpop.f32.mrb[0].mxu0
      %v996 = vadd.f32 0.0, %v995
      %997 = vmatprep.mubr.bf16.mxu0 0
      %998 = vmatmul.mubr.bf16.gmra.mrb[0].mxu0 %v855
      %v999 = vpop.f32.mrb[0].mxu0
      %v1000 = vadd.f32 0.0, %v999
      %v1001 = vpop.f32.mrb[0].mxu0
      %v1002 = vadd.f32 0.0, %v1001
      %v1003 = vpop.f32.mrb[0].mxu0
      %v1004 = vadd.f32 0.0, %v1003
      %v1005 = vpop.f32.mrb[0].mxu0
      %v1006 = vadd.f32 0.0, %v1005
      %1007 = vmatprep.mubr.bf16.mxu0 0
      %1008 = vmatmul.mubr.bf16.gmra.mrb[0].mxu0 %v858
      %v1009 = vpop.f32.mrb[0].mxu0
      %v1010 = vadd.f32 0.0, %v1009
      %v1011 = vpop.f32.mrb[0].mxu0
      %v1012 = vadd.f32 0.0, %v1011
      %v1013 = vpop.f32.mrb[0].mxu0
      %v1014 = vadd.f32 0.0, %v1013
      %v1015 = vpop.f32.mrb[0].mxu0
      %v1016 = vadd.f32 0.0, %v1015
      %1017 = vmatprep.mubr.bf16.mxu0 0
      %1018 = vmatmul.mubr.bf16.gmra.mrb[0].mxu0 %v861
      %v1019 = vpop.f32.mrb[0].mxu0
      %v1020 = vadd.f32 0.0, %v1019
      %v1021 = vpop.f32.mrb[0].mxu0
      %v1022 = vadd.f32 0.0, %v1021
      %v1023 = vpop.f32.mrb[0].mxu0
      %v1024 = vadd.f32 0.0, %v1023
      %v1025 = vpop.f32.mrb[0].mxu0
      %v1026 = vadd.f32 0.0, %v1025
      %1027 = vmatprep.mubr.bf16.mxu0 0
      %1028 = vmatmul.mubr.bf16.gmra.mrb[0].mxu0 %v864
      %v1029 = vpop.f32.mrb[0].mxu0
      %v1030 = vadd.f32 0.0, %v1029
      %v1031 = vpop.f32.mrb[0].mxu0
      %v1032 = vadd.f32 0.0, %v1031
      %v1033 = vpop.f32.mrb[0].mxu0
      %v1034 = vadd.f32 0.0, %v1033
      %v1035 = vpop.f32.mrb[0].mxu0
      %v1036 = vadd.f32 0.0, %v1035
      %1037 = vmatprep.mubr.bf16.mxu0 0
      %1038 = vmatmul.mubr.bf16.gmra.mrb[0].mxu0 %v867
      %v1039 = vpop.f32.mrb[0].mxu0
      %v1040 = vadd.f32 0.0, %v1039
      %v1041 = vpop.f32.mrb[0].mxu0
      %v1042 = vadd.f32 0.0, %v1041
      %v1043 = vpop.f32.mrb[0].mxu0
      %v1044 = vadd.f32 0.0, %v1043
      %v1045 = vpop.f32.mrb[0].mxu0
      %v1046 = vadd.f32 0.0, %v1045
      %1047 = vmatprep.mubr.bf16.mxu0 0
      %1048 = vmatmul.mubr.bf16.gmra.mrb[0].mxu0 %v870
      %v1049 = vpop.f32.mrb[0].mxu0
      %v1050 = vadd.f32 0.0, %v1049
      %v1051 = vpop.f32.mrb[0].mxu0
      %v1052 = vadd.f32 0.0, %v1051
      %v1053 = vpop.f32.mrb[0].mxu0
      %v1054 = vadd.f32 0.0, %v1053
      %v1055 = vpop.f32.mrb[0].mxu0
      %v1056 = vadd.f32 0.0, %v1055
      %1057 = vmatprep.mubr.bf16.mxu0 0
      %1058 = vmatmul.mubr.bf16.gmra.mrb[0].mxu0 %v873
      %v1059 = vpop.f32.mrb[0].mxu0
      %v1060 = vadd.f32 0.0, %v1059
      %v1061 = vpop.f32.mrb[0].mxu0
      %v1062 = vadd.f32 0.0, %v1061
      %v1063 = vpop.f32.mrb[0].mxu0
      %v1064 = vpop.f32.mrb[0].mxu0
      %1065 = vdwg.mxu0
      %v1074 = vunpack.c.l.b16 %v769
      %v1075 = vunpack.c.h.b16 %v769
      %v1076 = vunpack.c.l.b16 %v770
      %v1077 = vunpack.c.h.b16 %v770
      %v1078 = vunpack.c.l.b16 %v771
      %v1079 = vunpack.c.h.b16 %v771
      %v1080 = vunpack.c.l.b16 %v772
      %v1081 = vunpack.c.h.b16 %v772
      %v1082 = vunpack.c.l.b16 %v773
      %v1083 = vunpack.c.h.b16 %v773
      %v1084 = vunpack.c.l.b16 %v774
      %v1085 = vunpack.c.h.b16 %v774
      %v1086 = vunpack.c.l.b16 %v775
      %v1087 = vunpack.c.h.b16 %v775
      %v1088 = vunpack.c.l.b16 %v776
      %v1089 = vunpack.c.h.b16 %v776
      %v1090 = vpack.c.b16 %v1076, %v1074
      %v1091 = vpack.c.b16 %v1077, %v1075
      %v1092 = vpack.c.b16 %v1080, %v1078
      %v1093 = vpack.c.b16 %v1081, %v1079
      %v1094 = vpack.c.b16 %v1084, %v1082
      %v1095 = vpack.c.b16 %v1085, %v1083
      %v1096 = vpack.c.b16 %v1088, %v1086
      %v1097 = vpack.c.b16 %v1089, %v1087
      %v1107 = vsel %vm337, %v753, 0
      %1109 = vmatprep.subr.bf16.mxu0 %v1091
      %1110 = vmatpush1.bf16.msra.mxu0 %v1090
      %1111 = vmatprep.subr.bf16.mxu0 %v1093
      %1112 = vmatpush1.bf16.msra.mxu0 %v1092
      %1113 = vmatprep.subr.bf16.mxu0 %v1095
      %1114 = vmatpush1.bf16.msra.mxu0 %v1094
      %1115 = vmatprep.subr.bf16.mxu0 %v1097
      %1116 = vmatpush1.bf16.msra.mxu0 %v1096
      %1117 = vmatprep.subr.bf16.mxu0 0
      %1118 = vmatpush1.bf16.msra.mxu0 0
      %1119 = vmatprep.subr.bf16.mxu0 0
      %1120 = vmatpush1.bf16.msra.mxu0 0
      %1121 = vmatprep.subr.bf16.mxu0 0
      %1122 = vmatpush1.bf16.msra.mxu0 0
      %1123 = vmatprep.subr.bf16.mxu0 0
      %1124 = vmatpush1.bf16.msra.mxu0 0
      %1125 = vmatprep.subr.bf16.mxu0 0
      %1126 = vmatpush1.bf16.msra.mxu0 0
      %1127 = vmatprep.subr.bf16.mxu0 0
      %1128 = vmatpush1.bf16.msra.mxu0 0
      %1129 = vmatprep.subr.bf16.mxu0 0
      %1130 = vmatpush1.bf16.msra.mxu0 0
      %1131 = vmatprep.subr.bf16.mxu0 0
      %1132 = vmatpush1.bf16.msra.mxu0 0
      %1133 = vmatprep.subr.bf16.mxu0 0
      %1134 = vmatpush1.bf16.msra.mxu0 0
      %1135 = vmatprep.subr.bf16.mxu0 0
      %1136 = vmatpush1.bf16.msra.mxu0 0
      %1137 = vmatprep.subr.bf16.mxu0 0
      %1138 = vmatpush1.bf16.msra.mxu0 0
      %1139 = vmatprep.subr.bf16.mxu0 0
      %1140 = vmatpush1.bf16.msra.mxu0 0
      %1141 = vmatprep.mubr.bf16.mxu0 0
      %1142 = vmatmul.mubr.bf16.gmra.mrb[0].mxu0 %v1107
      %v1143 = vpop.f32.mrb[0].mxu0
      %v1144 = vadd.f32 %v910, %v1143
      %v1145 = vpop.f32.mrb[0].mxu0
      %v1146 = vadd.f32 %v912, %v1145
      %v1147 = vpop.f32.mrb[0].mxu0
      %v1148 = vadd.f32 %v914, %v1147
      %v1149 = vpop.f32.mrb[0].mxu0
      %v1150 = vadd.f32 %v916, %v1149
      %1151 = vmatprep.mubr.bf16.mxu0 0
      %1152 = vmatmul.mubr.bf16.gmra.mrb[0].mxu0 %v828
      %v1153 = vpop.f32.mrb[0].mxu0
      %v1154 = vadd.f32 %v920, %v1153
      %v1155 = vpop.f32.mrb[0].mxu0
      %v1156 = vadd.f32 %v922, %v1155
      %v1157 = vpop.f32.mrb[0].mxu0
      %v1158 = vadd.f32 %v924, %v1157
      %v1159 = vpop.f32.mrb[0].mxu0
      %v1160 = vadd.f32 %v926, %v1159
      %1161 = vmatprep.mubr.bf16.mxu0 0
      %1162 = vmatmul.mubr.bf16.gmra.mrb[0].mxu0 %v831
      %v1163 = vpop.f32.mrb[0].mxu0
      %v1164 = vadd.f32 %v930, %v1163
      %v1165 = vpop.f32.mrb[0].mxu0
      %v1166 = vadd.f32 %v932, %v1165
      %v1167 = vpop.f32.mrb[0].mxu0
      %v1168 = vadd.f32 %v934, %v1167
      %v1169 = vpop.f32.mrb[0].mxu0
      %v1170 = vadd.f32 %v936, %v1169
      %1171 = vmatprep.mubr.bf16.mxu0 0
      %1172 = vmatmul.mubr.bf16.gmra.mrb[0].mxu0 %v834
      %v1173 = vpop.f32.mrb[0].mxu0
      %v1174 = vadd.f32 %v940, %v1173
      %v1175 = vpop.f32.mrb[0].mxu0
      %v1176 = vadd.f32 %v942, %v1175
      %v1177 = vpop.f32.mrb[0].mxu0
      %v1178 = vadd.f32 %v944, %v1177
      %v1179 = vpop.f32.mrb[0].mxu0
      %v1180 = vadd.f32 %v946, %v1179
      %1181 = vmatprep.mubr.bf16.mxu0 0
      %1182 = vmatmul.mubr.bf16.gmra.mrb[0].mxu0 %v837
      %v1183 = vpop.f32.mrb[0].mxu0
      %v1184 = vadd.f32 %v950, %v1183
      %v1185 = vpop.f32.mrb[0].mxu0
      %v1186 = vadd.f32 %v952, %v1185
      %v1187 = vpop.f32.mrb[0].mxu0
      %v1188 = vadd.f32 %v954, %v1187
      %v1189 = vpop.f32.mrb[0].mxu0
      %v1190 = vadd.f32 %v956, %v1189
      %1191 = vmatprep.mubr.bf16.mxu0 0
      %1192 = vmatmul.mubr.bf16.gmra.mrb[0].mxu0 %v840
      %v1193 = vpop.f32.mrb[0].mxu0
      %v1194 = vadd.f32 %v960, %v1193
      %v1195 = vpop.f32.mrb[0].mxu0
      %v1196 = vadd.f32 %v962, %v1195
      %v1197 = vpop.f32.mrb[0].mxu0
      %v1198 = vadd.f32 %v964, %v1197
      %v1199 = vpop.f32.mrb[0].mxu0
      %v1200 = vadd.f32 %v966, %v1199
      %1201 = vmatprep.mubr.bf16.mxu0 0
      %1202 = vmatmul.mubr.bf16.gmra.mrb[0].mxu0 %v843
      %v1203 = vpop.f32.mrb[0].mxu0
      %v1204 = vadd.f32 %v970, %v1203
      %v1205 = vpop.f32.mrb[0].mxu0
      %v1206 = vadd.f32 %v972, %v1205
      %v1207 = vpop.f32.mrb[0].mxu0
      %v1208 = vadd.f32 %v974, %v1207
      %v1209 = vpop.f32.mrb[0].mxu0
      %v1210 = vadd.f32 %v976, %v1209
      %1211 = vmatprep.mubr.bf16.mxu0 0
      %1212 = vmatmul.mubr.bf16.gmra.mrb[0].mxu0 %v846
      %v1213 = vpop.f32.mrb[0].mxu0
      %v1214 = vadd.f32 %v980, %v1213
      %v1215 = vpop.f32.mrb[0].mxu0
      %v1216 = vadd.f32 %v982, %v1215
      %v1217 = vpop.f32.mrb[0].mxu0
      %v1218 = vadd.f32 %v984, %v1217
      %v1219 = vpop.f32.mrb[0].mxu0
      %v1220 = vadd.f32 %v986, %v1219
      %1221 = vmatprep.mubr.bf16.mxu0 0
      %1222 = vmatmul.mubr.bf16.gmra.mrb[0].mxu0 %v849
      %v1223 = vpop.f32.mrb[0].mxu0
      %v1224 = vadd.f32 %v990, %v1223
      %v1225 = vpop.f32.mrb[0].mxu0
      %v1226 = vadd.f32 %v992, %v1225
      %v1227 = vpop.f32.mrb[0].mxu0
      %v1228 = vadd.f32 %v994, %v1227
      %v1229 = vpop.f32.mrb[0].mxu0
      %v1230 = vadd.f32 %v996, %v1229
      %1231 = vmatprep.mubr.bf16.mxu0 0
      %1232 = vmatmul.mubr.bf16.gmra.mrb[0].mxu0 %v852
      %v1233 = vpop.f32.mrb[0].mxu0
      %v1234 = vadd.f32 %v1000, %v1233
      %v1235 = vpop.f32.mrb[0].mxu0
      %v1236 = vadd.f32 %v1002, %v1235
      %v1237 = vpop.f32.mrb[0].mxu0
      %v1238 = vadd.f32 %v1004, %v1237
      %v1239 = vpop.f32.mrb[0].mxu0
      %v1240 = vadd.f32 %v1006, %v1239
      %1241 = vmatprep.mubr.bf16.mxu0 0
      %1242 = vmatmul.mubr.bf16.gmra.mrb[0].mxu0 %v855
      %v1243 = vpop.f32.mrb[0].mxu0
      %v1244 = vadd.f32 %v1010, %v1243
      %v1245 = vpop.f32.mrb[0].mxu0
      %v1246 = vadd.f32 %v1012, %v1245
      %v1247 = vpop.f32.mrb[0].mxu0
      %v1248 = vadd.f32 %v1014, %v1247
      %v1249 = vpop.f32.mrb[0].mxu0
      %v1250 = vadd.f32 %v1016, %v1249
      %1251 = vmatprep.mubr.bf16.mxu0 0
      %1252 = vmatmul.mubr.bf16.gmra.mrb[0].mxu0 %v858
      %v1253 = vpop.f32.mrb[0].mxu0
      %v1254 = vadd.f32 %v1020, %v1253
      %v1255 = vpop.f32.mrb[0].mxu0
      %v1256 = vadd.f32 %v1022, %v1255
      %v1257 = vpop.f32.mrb[0].mxu0
      %v1258 = vadd.f32 %v1024, %v1257
      %v1259 = vpop.f32.mrb[0].mxu0
      %v1260 = vadd.f32 %v1026, %v1259
      %1261 = vmatprep.mubr.bf16.mxu0 0
      %1262 = vmatmul.mubr.bf16.gmra.mrb[0].mxu0 %v861
      %v1263 = vpop.f32.mrb[0].mxu0
      %v1264 = vadd.f32 %v1030, %v1263
      %v1265 = vpop.f32.mrb[0].mxu0
      %v1266 = vadd.f32 %v1032, %v1265
      %v1267 = vpop.f32.mrb[0].mxu0
      %v1268 = vadd.f32 %v1034, %v1267
      %v1269 = vpop.f32.mrb[0].mxu0
      %v1270 = vadd.f32 %v1036, %v1269
      %1271 = vmatprep.mubr.bf16.mxu0 0
      %1272 = vmatmul.mubr.bf16.gmra.mrb[0].mxu0 %v864
      %v1273 = vpop.f32.mrb[0].mxu0
      %v1274 = vadd.f32 %v1040, %v1273
      %v1275 = vpop.f32.mrb[0].mxu0
      %v1276 = vadd.f32 %v1042, %v1275
      %v1277 = vpop.f32.mrb[0].mxu0
      %v1278 = vadd.f32 %v1044, %v1277
      %v1279 = vpop.f32.mrb[0].mxu0
      %v1280 = vadd.f32 %v1046, %v1279
      %1281 = vmatprep.mubr.bf16.mxu0 0
      %1282 = vmatmul.mubr.bf16.gmra.mrb[0].mxu0 %v867
      %v1283 = vpop.f32.mrb[0].mxu0
      %v1284 = vadd.f32 %v1050, %v1283
      %v1285 = vpop.f32.mrb[0].mxu0
      %v1286 = vadd.f32 %v1052, %v1285
      %v1287 = vpop.f32.mrb[0].mxu0
      %v1288 = vadd.f32 %v1054, %v1287
      %v1289 = vpop.f32.mrb[0].mxu0
      %v1290 = vadd.f32 %v1056, %v1289
      %1291 = vmatprep.mubr.bf16.mxu0 0
      %1292 = vmatmul.mubr.bf16.gmra.mrb[0].mxu0 %v870
      %v1293 = vpop.f32.mrb[0].mxu0
      %v1294 = vadd.f32 %v1060, %v1293
      %v1295 = vpop.f32.mrb[0].mxu0
      %v1296 = vadd.f32 %v1062, %v1295
      %v1297 = vpop.f32.mrb[0].mxu0
      %v1298 = vpop.f32.mrb[0].mxu0
      %1299 = vdwg.mxu0
      %v1300 = vld [vmem:[#allocation2 + $0x10] sm:$0xff]
      %v1301 = vld [vmem:[#allocation2 + $0x18] sm:$0xff]
      %v1302 = vld [vmem:[#allocation2 + $0x20] sm:$0xff]
      %v1303 = vld [vmem:[#allocation2 + $0x28] sm:$0xff]
      %v1304 = vld [vmem:[#allocation2 + $0x30] sm:$0xff]
      %v1305 = vld [vmem:[#allocation2 + $0x38] sm:$0xff]
      %v1306 = vld [vmem:[#allocation2 + $0x40] sm:$0xff]
      %v1307 = vld [vmem:[#allocation2 + $0x48] sm:$0xff]
      %v1308 = vld [vmem:[#allocation2 + $0x50] sm:$0xff]
      %v1309 = vld [vmem:[#allocation2 + $0x58] sm:$0xff]
      %v1310 = vld [vmem:[#allocation2 + $0x60] sm:$0xff]
      %v1311 = vld [vmem:[#allocation2 + $0x68] sm:$0xff]
      %v1312 = vld [vmem:[#allocation2 + $0x70] sm:$0xff]
      %v1313 = vld [vmem:[#allocation2 + $0x78] sm:$0xff]
      %v1314 = vld [vmem:[#allocation2 + $0x80] sm:$0xff]
      %v1315 = vld [vmem:[#allocation2 + $0x88] sm:$0xff]
      %s1316 = scalar_lea.vmem %s3, 128
      %v1317 = vld [vmem:[%s1316] sm:$0xff]
      %v1318 = vld [vmem:[%s1316 + $0x8] sm:$0xff]
      %v1319 = vld [vmem:[%s1316 + $0x10] sm:$0xff]
      %v1320 = vld [vmem:[%s1316 + $0x18] sm:$0xff]
      %v1321 = vld [vmem:[%s1316 + $0x20] sm:$0xff]
      %v1322 = vld [vmem:[%s1316 + $0x28] sm:$0xff]
      %v1323 = vld [vmem:[%s1316 + $0x30] sm:$0xff]
      %v1324 = vld [vmem:[%s1316 + $0x38] sm:$0xff]
      %v1333 = vunpack.c.l.b16 %v1317
      %v1334 = vunpack.c.h.b16 %v1317
      %v1335 = vunpack.c.l.b16 %v1318
      %v1336 = vunpack.c.h.b16 %v1318
      %v1337 = vunpack.c.l.b16 %v1319
      %v1338 = vunpack.c.h.b16 %v1319
      %v1339 = vunpack.c.l.b16 %v1320
      %v1340 = vunpack.c.h.b16 %v1320
      %v1341 = vunpack.c.l.b16 %v1321
      %v1342 = vunpack.c.h.b16 %v1321
      %v1343 = vunpack.c.l.b16 %v1322
      %v1344 = vunpack.c.h.b16 %v1322
      %v1345 = vunpack.c.l.b16 %v1323
      %v1346 = vunpack.c.h.b16 %v1323
      %v1347 = vunpack.c.l.b16 %v1324
      %v1348 = vunpack.c.h.b16 %v1324
      %v1349 = vpack.c.b16 %v1335, %v1333
      %v1350 = vpack.c.b16 %v1336, %v1334
      %v1351 = vpack.c.b16 %v1339, %v1337
      %v1352 = vpack.c.b16 %v1340, %v1338
      %v1353 = vpack.c.b16 %v1343, %v1341
      %v1354 = vpack.c.b16 %v1344, %v1342
      %v1355 = vpack.c.b16 %v1347, %v1345
      %v1356 = vpack.c.b16 %v1348, %v1346
      %v1366 = vsel %vm337, %v1300, 0
      %v1369 = vsel %vm337, %v1301, 0
      %v1372 = vsel %vm337, %v1302, 0
      %v1375 = vsel %vm337, %v1303, 0
      %v1378 = vsel %vm337, %v1304, 0
      %v1381 = vsel %vm337, %v1305, 0
      %v1384 = vsel %vm337, %v1306, 0
      %v1387 = vsel %vm337, %v1307, 0
      %v1390 = vsel %vm337, %v1308, 0
      %v1393 = vsel %vm337, %v1309, 0
      %v1396 = vsel %vm337, %v1310, 0
      %v1399 = vsel %vm337, %v1311, 0
      %v1402 = vsel %vm337, %v1312, 0
      %v1405 = vsel %vm337, %v1313, 0
      %v1408 = vsel %vm337, %v1314, 0
      %v1411 = vsel %vm337, %v1315, 0
      %1413 = vmatprep.subr.bf16.mxu0 %v1350
      %1414 = vmatpush1.bf16.msra.mxu0 %v1349
      %1415 = vmatprep.subr.bf16.mxu0 %v1352
      %1416 = vmatpush1.bf16.msra.mxu0 %v1351
      %1417 = vmatprep.subr.bf16.mxu0 %v1354
      %1418 = vmatpush1.bf16.msra.mxu0 %v1353
      %1419 = vmatprep.subr.bf16.mxu0 %v1356
      %1420 = vmatpush1.bf16.msra.mxu0 %v1355
      %1421 = vmatprep.subr.bf16.mxu0 0
      %1422 = vmatpush1.bf16.msra.mxu0 0
      %1423 = vmatprep.subr.bf16.mxu0 0
      %1424 = vmatpush1.bf16.msra.mxu0 0
      %1425 = vmatprep.subr.bf16.mxu0 0
      %1426 = vmatpush1.bf16.msra.mxu0 0
      %1427 = vmatprep.subr.bf16.mxu0 0
      %1428 = vmatpush1.bf16.msra.mxu0 0
      %1429 = vmatprep.subr.bf16.mxu0 0
      %1430 = vmatpush1.bf16.msra.mxu0 0
      %1431 = vmatprep.subr.bf16.mxu0 0
      %1432 = vmatpush1.bf16.msra.mxu0 0
      %1433 = vmatprep.subr.bf16.mxu0 0
      %1434 = vmatpush1.bf16.msra.mxu0 0
      %1435 = vmatprep.subr.bf16.mxu0 0
      %1436 = vmatpush1.bf16.msra.mxu0 0
      %1437 = vmatprep.subr.bf16.mxu0 0
      %1438 = vmatpush1.bf16.msra.mxu0 0
      %1439 = vmatprep.subr.bf16.mxu0 0
      %1440 = vmatpush1.bf16.msra.mxu0 0
      %1441 = vmatprep.subr.bf16.mxu0 0
      %1442 = vmatpush1.bf16.msra.mxu0 0
      %1443 = vmatprep.subr.bf16.mxu0 0
      %1444 = vmatpush1.bf16.msra.mxu0 0
      %1445 = vmatprep.mubr.bf16.mxu0 0
      %1446 = vmatmul.mubr.bf16.gmra.mrb[0].mxu0 %v1366
      %v1447 = vpop.f32.mrb[0].mxu0
      %v1448 = vadd.f32 0.0, %v1447
      %v1449 = vpop.f32.mrb[0].mxu0
      %v1450 = vadd.f32 0.0, %v1449
      %v1451 = vpop.f32.mrb[0].mxu0
      %v1452 = vadd.f32 0.0, %v1451
      %v1453 = vpop.f32.mrb[0].mxu0
      %v1454 = vadd.f32 0.0, %v1453
      %1455 = vmatprep.mubr.bf16.mxu0 0
      %1456 = vmatmul.mubr.bf16.gmra.mrb[0].mxu0 %v1369
      %v1457 = vpop.f32.mrb[0].mxu0
      %v1458 = vadd.f32 0.0, %v1457
      %v1459 = vpop.f32.mrb[0].mxu0
      %v1460 = vadd.f32 0.0, %v1459
      %v1461 = vpop.f32.mrb[0].mxu0
      %v1462 = vadd.f32 0.0, %v1461
      %v1463 = vpop.f32.mrb[0].mxu0
      %v1464 = vadd.f32 0.0, %v1463
      %1465 = vmatprep.mubr.bf16.mxu0 0
      %1466 = vmatmul.mubr.bf16.gmra.mrb[0].mxu0 %v1372
      %v1467 = vpop.f32.mrb[0].mxu0
      %v1468 = vadd.f32 0.0, %v1467
      %v1469 = vpop.f32.mrb[0].mxu0
      %v1470 = vadd.f32 0.0, %v1469
      %v1471 = vpop.f32.mrb[0].mxu0
      %v1472 = vadd.f32 0.0, %v1471
      %v1473 = vpop.f32.mrb[0].mxu0
      %v1474 = vadd.f32 0.0, %v1473
      %1475 = vmatprep.mubr.bf16.mxu0 0
      %1476 = vmatmul.mubr.bf16.gmra.mrb[0].mxu0 %v1375
      %v1477 = vpop.f32.mrb[0].mxu0
      %v1478 = vadd.f32 0.0, %v1477
      %v1479 = vpop.f32.mrb[0].mxu0
      %v1480 = vadd.f32 0.0, %v1479
      %v1481 = vpop.f32.mrb[0].mxu0
      %v1482 = vadd.f32 0.0, %v1481
      %v1483 = vpop.f32.mrb[0].mxu0
      %v1484 = vadd.f32 0.0, %v1483
      %1485 = vmatprep.mubr.bf16.mxu0 0
      %1486 = vmatmul.mubr.bf16.gmra.mrb[0].mxu0 %v1378
      %v1487 = vpop.f32.mrb[0].mxu0
      %v1488 = vadd.f32 0.0, %v1487
      %v1489 = vpop.f32.mrb[0].mxu0
      %v1490 = vadd.f32 0.0, %v1489
      %v1491 = vpop.f32.mrb[0].mxu0
      %v1492 = vadd.f32 0.0, %v1491
      %v1493 = vpop.f32.mrb[0].mxu0
      %v1494 = vadd.f32 0.0, %v1493
      %1495 = vmatprep.mubr.bf16.mxu0 0
      %1496 = vmatmul.mubr.bf16.gmra.mrb[0].mxu0 %v1381
      %v1497 = vpop.f32.mrb[0].mxu0
      %v1498 = vadd.f32 0.0, %v1497
      %v1499 = vpop.f32.mrb[0].mxu0
      %v1500 = vadd.f32 0.0, %v1499
      %v1501 = vpop.f32.mrb[0].mxu0
      %v1502 = vadd.f32 0.0, %v1501
      %v1503 = vpop.f32.mrb[0].mxu0
      %v1504 = vadd.f32 0.0, %v1503
      %1505 = vmatprep.mubr.bf16.mxu0 0
      %1506 = vmatmul.mubr.bf16.gmra.mrb[0].mxu0 %v1384
      %v1507 = vpop.f32.mrb[0].mxu0
      %v1508 = vadd.f32 0.0, %v1507
      %v1509 = vpop.f32.mrb[0].mxu0
      %v1510 = vadd.f32 0.0, %v1509
      %v1511 = vpop.f32.mrb[0].mxu0
      %v1512 = vadd.f32 0.0, %v1511
      %v1513 = vpop.f32.mrb[0].mxu0
      %v1514 = vadd.f32 0.0, %v1513
      %1515 = vmatprep.mubr.bf16.mxu0 0
      %1516 = vmatmul.mubr.bf16.gmra.mrb[0].mxu0 %v1387
      %v1517 = vpop.f32.mrb[0].mxu0
      %v1518 = vadd.f32 0.0, %v1517
      %v1519 = vpop.f32.mrb[0].mxu0
      %v1520 = vadd.f32 0.0, %v1519
      %v1521 = vpop.f32.mrb[0].mxu0
      %v1522 = vadd.f32 0.0, %v1521
      %v1523 = vpop.f32.mrb[0].mxu0
      %v1524 = vadd.f32 0.0, %v1523
      %1525 = vmatprep.mubr.bf16.mxu0 0
      %1526 = vmatmul.mubr.bf16.gmra.mrb[0].mxu0 %v1390
      %v1527 = vpop.f32.mrb[0].mxu0
      %v1528 = vadd.f32 0.0, %v1527
      %v1529 = vpop.f32.mrb[0].mxu0
      %v1530 = vadd.f32 0.0, %v1529
      %v1531 = vpop.f32.mrb[0].mxu0
      %v1532 = vadd.f32 0.0, %v1531
      %v1533 = vpop.f32.mrb[0].mxu0
      %v1534 = vadd.f32 0.0, %v1533
      %1535 = vmatprep.mubr.bf16.mxu0 0
      %1536 = vmatmul.mubr.bf16.gmra.mrb[0].mxu0 %v1393
      %v1537 = vpop.f32.mrb[0].mxu0
      %v1538 = vadd.f32 0.0, %v1537
      %v1539 = vpop.f32.mrb[0].mxu0
      %v1540 = vadd.f32 0.0, %v1539
      %v1541 = vpop.f32.mrb[0].mxu0
      %v1542 = vadd.f32 0.0, %v1541
      %v1543 = vpop.f32.mrb[0].mxu0
      %v1544 = vadd.f32 0.0, %v1543
      %1545 = vmatprep.mubr.bf16.mxu0 0
      %1546 = vmatmul.mubr.bf16.gmra.mrb[0].mxu0 %v1396
      %v1547 = vpop.f32.mrb[0].mxu0
      %v1548 = vadd.f32 0.0, %v1547
      %v1549 = vpop.f32.mrb[0].mxu0
      %v1550 = vadd.f32 0.0, %v1549
      %v1551 = vpop.f32.mrb[0].mxu0
      %v1552 = vadd.f32 0.0, %v1551
      %v1553 = vpop.f32.mrb[0].mxu0
      %v1554 = vadd.f32 0.0, %v1553
      %1555 = vmatprep.mubr.bf16.mxu0 0
      %1556 = vmatmul.mubr.bf16.gmra.mrb[0].mxu0 %v1399
      %v1557 = vpop.f32.mrb[0].mxu0
      %v1558 = vadd.f32 0.0, %v1557
      %v1559 = vpop.f32.mrb[0].mxu0
      %v1560 = vadd.f32 0.0, %v1559
      %v1561 = vpop.f32.mrb[0].mxu0
      %v1562 = vadd.f32 0.0, %v1561
      %v1563 = vpop.f32.mrb[0].mxu0
      %v1564 = vadd.f32 0.0, %v1563
      %1565 = vmatprep.mubr.bf16.mxu0 0
      %1566 = vmatmul.mubr.bf16.gmra.mrb[0].mxu0 %v1402
      %v1567 = vpop.f32.mrb[0].mxu0
      %v1568 = vadd.f32 0.0, %v1567
      %v1569 = vpop.f32.mrb[0].mxu0
      %v1570 = vadd.f32 0.0, %v1569
      %v1571 = vpop.f32.mrb[0].mxu0
      %v1572 = vadd.f32 0.0, %v1571
      %v1573 = vpop.f32.mrb[0].mxu0
      %v1574 = vadd.f32 0.0, %v1573
      %1575 = vmatprep.mubr.bf16.mxu0 0
      %1576 = vmatmul.mubr.bf16.gmra.mrb[0].mxu0 %v1405
      %v1577 = vpop.f32.mrb[0].mxu0
      %v1578 = vadd.f32 0.0, %v1577
      %v1579 = vpop.f32.mrb[0].mxu0
      %v1580 = vadd.f32 0.0, %v1579
      %v1581 = vpop.f32.mrb[0].mxu0
      %v1582 = vadd.f32 0.0, %v1581
      %v1583 = vpop.f32.mrb[0].mxu0
      %v1584 = vadd.f32 0.0, %v1583
      %1585 = vmatprep.mubr.bf16.mxu0 0
      %1586 = vmatmul.mubr.bf16.gmra.mrb[0].mxu0 %v1408
      %v1587 = vpop.f32.mrb[0].mxu0
      %v1588 = vadd.f32 0.0, %v1587
      %v1589 = vpop.f32.mrb[0].mxu0
      %v1590 = vadd.f32 0.0, %v1589
      %v1591 = vpop.f32.mrb[0].mxu0
      %v1592 = vadd.f32 0.0, %v1591
      %v1593 = vpop.f32.mrb[0].mxu0
      %v1594 = vadd.f32 0.0, %v1593
      %1595 = vmatprep.mubr.bf16.mxu0 0
      %1596 = vmatmul.mubr.bf16.gmra.mrb[0].mxu0 %v1411
      %v1597 = vpop.f32.mrb[0].mxu0
      %v1598 = vadd.f32 0.0, %v1597
      %v1599 = vpop.f32.mrb[0].mxu0
      %v1600 = vadd.f32 0.0, %v1599
      %v1601 = vpop.f32.mrb[0].mxu0
      %v1602 = vpop.f32.mrb[0].mxu0
      %1603 = vdwg.mxu0
      %v1604 = vadd.f32 %v1144, %v1448
      %v1605 = vadd.f32 %v1146, %v1450
      %v1606 = vadd.f32 %v1148, %v1452
      %v1607 = vadd.f32 %v1150, %v1454
      %v1608 = vadd.f32 %v1154, %v1458
      %v1609 = vadd.f32 %v1156, %v1460
      %v1610 = vadd.f32 %v1158, %v1462
      %v1611 = vadd.f32 %v1160, %v1464
      %v1612 = vadd.f32 %v1164, %v1468
      %v1613 = vadd.f32 %v1166, %v1470
      %v1614 = vadd.f32 %v1168, %v1472
      %v1615 = vadd.f32 %v1170, %v1474
      %v1616 = vadd.f32 %v1174, %v1478
      %v1617 = vadd.f32 %v1176, %v1480
      %v1618 = vadd.f32 %v1178, %v1482
      %v1619 = vadd.f32 %v1180, %v1484
      %v1620 = vadd.f32 %v1184, %v1488
      %v1621 = vadd.f32 %v1186, %v1490
      %v1622 = vadd.f32 %v1188, %v1492
      %v1623 = vadd.f32 %v1190, %v1494
      %v1624 = vadd.f32 %v1194, %v1498
      %v1625 = vadd.f32 %v1196, %v1500
      %v1626 = vadd.f32 %v1198, %v1502
      %v1627 = vadd.f32 %v1200, %v1504
      %v1628 = vadd.f32 %v1204, %v1508
      %v1629 = vadd.f32 %v1206, %v1510
      %v1630 = vadd.f32 %v1208, %v1512
      %v1631 = vadd.f32 %v1210, %v1514
      %v1632 = vadd.f32 %v1214, %v1518
      %v1633 = vadd.f32 %v1216, %v1520
      %v1634 = vadd.f32 %v1218, %v1522
      %v1635 = vadd.f32 %v1220, %v1524
      %v1636 = vadd.f32 %v1224, %v1528
      %v1637 = vadd.f32 %v1226, %v1530
      %v1638 = vadd.f32 %v1228, %v1532
      %v1639 = vadd.f32 %v1230, %v1534
      %v1640 = vadd.f32 %v1234, %v1538
      %v1641 = vadd.f32 %v1236, %v1540
      %v1642 = vadd.f32 %v1238, %v1542
      %v1643 = vadd.f32 %v1240, %v1544
      %v1644 = vadd.f32 %v1244, %v1548
      %v1645 = vadd.f32 %v1246, %v1550
      %v1646 = vadd.f32 %v1248, %v1552
      %v1647 = vadd.f32 %v1250, %v1554
      %v1648 = vadd.f32 %v1254, %v1558
      %v1649 = vadd.f32 %v1256, %v1560
      %v1650 = vadd.f32 %v1258, %v1562
      %v1651 = vadd.f32 %v1260, %v1564
      %v1652 = vadd.f32 %v1264, %v1568
      %v1653 = vadd.f32 %v1266, %v1570
      %v1654 = vadd.f32 %v1268, %v1572
      %v1655 = vadd.f32 %v1270, %v1574
      %v1656 = vadd.f32 %v1274, %v1578
      %v1657 = vadd.f32 %v1276, %v1580
      %v1658 = vadd.f32 %v1278, %v1582
      %v1659 = vadd.f32 %v1280, %v1584
      %v1660 = vadd.f32 %v1284, %v1588
      %v1661 = vadd.f32 %v1286, %v1590
      %v1662 = vadd.f32 %v1288, %v1592
      %v1663 = vadd.f32 %v1290, %v1594
      %v1664 = vadd.f32 %v1294, %v1598
      %v1665 = vadd.f32 %v1296, %v1600
      %v1666 = vld [vmem:[%s4] sm:$0x1]
      %v1668 = vlaneseq
      %v1669 = vshrl.u32 %v1668, 7
      %v1670 = vsub.s32 0, %v1669
      %v1671 = vrot.slane %v1666, %v1670
      %v1673 = vadd.f32 %v1671, %v1604
      %v1674 = vadd.f32 %v1671, %v1606
      %v1675 = vadd.f32 %v1671, %v1608
      %v1676 = vadd.f32 %v1671, %v1610
      %v1677 = vadd.f32 %v1671, %v1612
      %v1678 = vadd.f32 %v1671, %v1614
      %v1679 = vadd.f32 %v1671, %v1616
      %v1680 = vadd.f32 %v1671, %v1618
      %v1681 = vadd.f32 %v1671, %v1620
      %v1682 = vadd.f32 %v1671, %v1622
      %v1683 = vadd.f32 %v1671, %v1624
      %v1684 = vadd.f32 %v1671, %v1626
      %v1685 = vadd.f32 %v1671, %v1628
      %v1686 = vadd.f32 %v1671, %v1630
      %v1687 = vadd.f32 %v1671, %v1632
      %v1688 = vadd.f32 %v1671, %v1634
      %v1689 = vadd.f32 %v1671, %v1636
      %v1690 = vadd.f32 %v1671, %v1638
      %v1691 = vadd.f32 %v1671, %v1640
      %v1692 = vadd.f32 %v1671, %v1642
      %v1693 = vadd.f32 %v1671, %v1644
      %v1694 = vadd.f32 %v1671, %v1646
      %v1695 = vadd.f32 %v1671, %v1648
      %v1696 = vadd.f32 %v1671, %v1650
      %v1697 = vadd.f32 %v1671, %v1652
      %v1698 = vadd.f32 %v1671, %v1654
      %v1699 = vadd.f32 %v1671, %v1656
      %v1700 = vadd.f32 %v1671, %v1658
      %v1701 = vadd.f32 %v1671, %v1660
      %v1702 = vadd.f32 %v1671, %v1662
      %vm1734 = vcmask 1046528
      %v1735 = vrot.slane %v1604, 1
      %v1736 = vrot.slane %v1606, 1
      %v1737 = vsel %vm1734, %v1735, %v1736
      %v1738 = vrot.slane %v1608, 1
      %v1739 = vsel %vm1734, %v1736, %v1738
      %v1740 = vrot.slane %v1610, 1
      %v1741 = vsel %vm1734, %v1738, %v1740
      %v1742 = vrot.slane %v1612, 1
      %v1743 = vsel %vm1734, %v1740, %v1742
      %v1744 = vrot.slane %v1614, 1
      %v1745 = vsel %vm1734, %v1742, %v1744
      %v1746 = vrot.slane %v1616, 1
      %v1747 = vsel %vm1734, %v1744, %v1746
      %v1748 = vrot.slane %v1618, 1
      %v1749 = vsel %vm1734, %v1746, %v1748
      %v1750 = vrot.slane %v1620, 1
      %v1751 = vsel %vm1734, %v1748, %v1750
      %v1752 = vrot.slane %v1622, 1
      %v1753 = vsel %vm1734, %v1750, %v1752
      %v1754 = vrot.slane %v1624, 1
      %v1755 = vsel %vm1734, %v1752, %v1754
      %v1756 = vrot.slane %v1626, 1
      %v1757 = vsel %vm1734, %v1754, %v1756
      %v1758 = vrot.slane %v1628, 1
      %v1759 = vsel %vm1734, %v1756, %v1758
      %v1760 = vrot.slane %v1630, 1
      %v1761 = vsel %vm1734, %v1758, %v1760
      %v1762 = vrot.slane %v1632, 1
      %v1763 = vsel %vm1734, %v1760, %v1762
      %v1764 = vrot.slane %v1634, 1
      %v1765 = vsel %vm1734, %v1762, %v1764
      %v1766 = vrot.slane %v1636, 1
      %v1767 = vsel %vm1734, %v1764, %v1766
      %v1768 = vrot.slane %v1638, 1
      %v1769 = vsel %vm1734, %v1766, %v1768
      %v1770 = vrot.slane %v1640, 1
      %v1771 = vsel %vm1734, %v1768, %v1770
      %v1772 = vrot.slane %v1642, 1
      %v1773 = vsel %vm1734, %v1770, %v1772
      %v1774 = vrot.slane %v1644, 1
      %v1775 = vsel %vm1734, %v1772, %v1774
      %v1776 = vrot.slane %v1646, 1
      %v1777 = vsel %vm1734, %v1774, %v1776
      %v1778 = vrot.slane %v1648, 1
      %v1779 = vsel %vm1734, %v1776, %v1778
      %v1780 = vrot.slane %v1650, 1
      %v1781 = vsel %vm1734, %v1778, %v1780
      %v1782 = vrot.slane %v1652, 1
      %v1783 = vsel %vm1734, %v1780, %v1782
      %v1784 = vrot.slane %v1654, 1
      %v1785 = vsel %vm1734, %v1782, %v1784
      %v1786 = vrot.slane %v1656, 1
      %v1787 = vsel %vm1734, %v1784, %v1786
      %v1788 = vrot.slane %v1658, 1
      %v1789 = vsel %vm1734, %v1786, %v1788
      %v1790 = vrot.slane %v1660, 1
      %v1791 = vsel %vm1734, %v1788, %v1790
      %v1792 = vrot.slane %v1662, 1
      %v1793 = vsel %vm1734, %v1790, %v1792
      %v1794 = vrot.slane %v1664, 1
      %v1795 = vsel %vm1734, %v1792, %v1794
      %1796 = vrot.lane.b32.xlu0 %v1737, 64
      %v1797 = vpop.permute.xlu0 %1796
      %1798 = vrot.lane.b32.xlu0 %v1739, 64
      %v1799 = vpop.permute.xlu0 %1798
      %1800 = vrot.lane.b32.xlu0 %v1741, 64
      %v1801 = vpop.permute.xlu0 %1800
      %1802 = vrot.lane.b32.xlu0 %v1743, 64
      %v1803 = vpop.permute.xlu0 %1802
      %1804 = vrot.lane.b32.xlu0 %v1745, 64
      %v1805 = vpop.permute.xlu0 %1804
      %1806 = vrot.lane.b32.xlu0 %v1747, 64
      %v1807 = vpop.permute.xlu0 %1806
      %1808 = vrot.lane.b32.xlu0 %v1749, 64
      %v1809 = vpop.permute.xlu0 %1808
      %1810 = vrot.lane.b32.xlu0 %v1751, 64
      %v1811 = vpop.permute.xlu0 %1810
      %1812 = vrot.lane.b32.xlu0 %v1753, 64
      %v1813 = vpop.permute.xlu0 %1812
      %1814 = vrot.lane.b32.xlu0 %v1755, 64
      %v1815 = vpop.permute.xlu0 %1814
      %1816 = vrot.lane.b32.xlu0 %v1757, 64
      %v1817 = vpop.permute.xlu0 %1816
      %1818 = vrot.lane.b32.xlu0 %v1759, 64
      %v1819 = vpop.permute.xlu0 %1818
      %1820 = vrot.lane.b32.xlu0 %v1761, 64
      %v1821 = vpop.permute.xlu0 %1820
      %1822 = vrot.lane.b32.xlu0 %v1763, 64
      %v1823 = vpop.permute.xlu0 %1822
      %1824 = vrot.lane.b32.xlu0 %v1765, 64
      %v1825 = vpop.permute.xlu0 %1824
      %1826 = vrot.lane.b32.xlu0 %v1767, 64
      %v1827 = vpop.permute.xlu0 %1826
      %1828 = vrot.lane.b32.xlu0 %v1769, 64
      %v1829 = vpop.permute.xlu0 %1828
      %1830 = vrot.lane.b32.xlu0 %v1771, 64
      %v1831 = vpop.permute.xlu0 %1830
      %1832 = vrot.lane.b32.xlu0 %v1773, 64
      %v1833 = vpop.permute.xlu0 %1832
      %1834 = vrot.lane.b32.xlu0 %v1775, 64
      %v1835 = vpop.permute.xlu0 %1834
      %1836 = vrot.lane.b32.xlu0 %v1777, 64
      %v1837 = vpop.permute.xlu0 %1836
      %1838 = vrot.lane.b32.xlu0 %v1779, 64
      %v1839 = vpop.permute.xlu0 %1838
      %1840 = vrot.lane.b32.xlu0 %v1781, 64
      %v1841 = vpop.permute.xlu0 %1840
      %1842 = vrot.lane.b32.xlu0 %v1783, 64
      %v1843 = vpop.permute.xlu0 %1842
      %1844 = vrot.lane.b32.xlu0 %v1785, 64
      %v1845 = vpop.permute.xlu0 %1844
      %1846 = vrot.lane.b32.xlu0 %v1787, 64
      %v1847 = vpop.permute.xlu0 %1846
      %1848 = vrot.lane.b32.xlu0 %v1789, 64
      %v1849 = vpop.permute.xlu0 %1848
      %1850 = vrot.lane.b32.xlu0 %v1791, 64
      %v1851 = vpop.permute.xlu0 %1850
      %1852 = vrot.lane.b32.xlu0 %v1793, 64
      %v1853 = vpop.permute.xlu0 %1852
      %1854 = vrot.lane.b32.xlu0 %v1795, 64
      %v1855 = vpop.permute.xlu0 %1854
      %v1886 = vadd.f32 %v1673, %v1797
      %v1887 = vadd.f32 %v1674, %v1799
      %v1888 = vadd.f32 %v1675, %v1801
      %v1889 = vadd.f32 %v1676, %v1803
      %v1890 = vadd.f32 %v1677, %v1805
      %v1891 = vadd.f32 %v1678, %v1807
      %v1892 = vadd.f32 %v1679, %v1809
      %v1893 = vadd.f32 %v1680, %v1811
      %v1894 = vadd.f32 %v1681, %v1813
      %v1895 = vadd.f32 %v1682, %v1815
      %v1896 = vadd.f32 %v1683, %v1817
      %v1897 = vadd.f32 %v1684, %v1819
      %v1898 = vadd.f32 %v1685, %v1821
      %v1899 = vadd.f32 %v1686, %v1823
      %v1900 = vadd.f32 %v1687, %v1825
      %v1901 = vadd.f32 %v1688, %v1827
      %v1902 = vadd.f32 %v1689, %v1829
      %v1903 = vadd.f32 %v1690, %v1831
      %v1904 = vadd.f32 %v1691, %v1833
      %v1905 = vadd.f32 %v1692, %v1835
      %v1906 = vadd.f32 %v1693, %v1837
      %v1907 = vadd.f32 %v1694, %v1839
      %v1908 = vadd.f32 %v1695, %v1841
      %v1909 = vadd.f32 %v1696, %v1843
      %v1910 = vadd.f32 %v1697, %v1845
      %v1911 = vadd.f32 %v1698, %v1847
      %v1912 = vadd.f32 %v1699, %v1849
      %v1913 = vadd.f32 %v1700, %v1851
      %v1914 = vadd.f32 %v1701, %v1853
      %v1915 = vadd.f32 %v1702, %v1855
      %vm1947 = vcmask 1045504
      %v1948 = vrot.slane %v1605, 2
      %v1949 = vrot.slane %v1607, 2
      %v1950 = vsel %vm1947, %v1948, %v1949
      %v1951 = vrot.slane %v1609, 2
      %v1952 = vsel %vm1947, %v1949, %v1951
      %v1953 = vrot.slane %v1611, 2
      %v1954 = vsel %vm1947, %v1951, %v1953
      %v1955 = vrot.slane %v1613, 2
      %v1956 = vsel %vm1947, %v1953, %v1955
      %v1957 = vrot.slane %v1615, 2
      %v1958 = vsel %vm1947, %v1955, %v1957
      %v1959 = vrot.slane %v1617, 2
      %v1960 = vsel %vm1947, %v1957, %v1959
      %v1961 = vrot.slane %v1619, 2
      %v1962 = vsel %vm1947, %v1959, %v1961
      %v1963 = vrot.slane %v1621, 2
      %v1964 = vsel %vm1947, %v1961, %v1963
      %v1965 = vrot.slane %v1623, 2
      %v1966 = vsel %vm1947, %v1963, %v1965
      %v1967 = vrot.slane %v1625, 2
      %v1968 = vsel %vm1947, %v1965, %v1967
      %v1969 = vrot.slane %v1627, 2
      %v1970 = vsel %vm1947, %v1967, %v1969
      %v1971 = vrot.slane %v1629, 2
      %v1972 = vsel %vm1947, %v1969, %v1971
      %v1973 = vrot.slane %v1631, 2
      %v1974 = vsel %vm1947, %v1971, %v1973
      %v1975 = vrot.slane %v1633, 2
      %v1976 = vsel %vm1947, %v1973, %v1975
      %v1977 = vrot.slane %v1635, 2
      %v1978 = vsel %vm1947, %v1975, %v1977
      %v1979 = vrot.slane %v1637, 2
      %v1980 = vsel %vm1947, %v1977, %v1979
      %v1981 = vrot.slane %v1639, 2
      %v1982 = vsel %vm1947, %v1979, %v1981
      %v1983 = vrot.slane %v1641, 2
      %v1984 = vsel %vm1947, %v1981, %v1983
      %v1985 = vrot.slane %v1643, 2
      %v1986 = vsel %vm1947, %v1983, %v1985
      %v1987 = vrot.slane %v1645, 2
      %v1988 = vsel %vm1947, %v1985, %v1987
      %v1989 = vrot.slane %v1647, 2
      %v1990 = vsel %vm1947, %v1987, %v1989
      %v1991 = vrot.slane %v1649, 2
      %v1992 = vsel %vm1947, %v1989, %v1991
      %v1993 = vrot.slane %v1651, 2
      %v1994 = vsel %vm1947, %v1991, %v1993
      %v1995 = vrot.slane %v1653, 2
      %v1996 = vsel %vm1947, %v1993, %v1995
      %v1997 = vrot.slane %v1655, 2
      %v1998 = vsel %vm1947, %v1995, %v1997
      %v1999 = vrot.slane %v1657, 2
      %v2000 = vsel %vm1947, %v1997, %v1999
      %v2001 = vrot.slane %v1659, 2
      %v2002 = vsel %vm1947, %v1999, %v2001
      %v2003 = vrot.slane %v1661, 2
      %v2004 = vsel %vm1947, %v2001, %v2003
      %v2005 = vrot.slane %v1663, 2
      %v2006 = vsel %vm1947, %v2003, %v2005
      %v2007 = vrot.slane %v1665, 2
      %v2008 = vsel %vm1947, %v2005, %v2007
      %v2039 = vadd.f32 %v1886, %v1950
      %v2040 = vadd.f32 %v1887, %v1952
      %v2041 = vadd.f32 %v1888, %v1954
      %v2042 = vadd.f32 %v1889, %v1956
      %v2043 = vadd.f32 %v1890, %v1958
      %v2044 = vadd.f32 %v1891, %v1960
      %v2045 = vadd.f32 %v1892, %v1962
      %v2046 = vadd.f32 %v1893, %v1964
      %v2047 = vadd.f32 %v1894, %v1966
      %v2048 = vadd.f32 %v1895, %v1968
      %v2049 = vadd.f32 %v1896, %v1970
      %v2050 = vadd.f32 %v1897, %v1972
      %v2051 = vadd.f32 %v1898, %v1974
      %v2052 = vadd.f32 %v1899, %v1976
      %v2053 = vadd.f32 %v1900, %v1978
      %v2054 = vadd.f32 %v1901, %v1980
      %v2055 = vadd.f32 %v1902, %v1982
      %v2056 = vadd.f32 %v1903, %v1984
      %v2057 = vadd.f32 %v1904, %v1986
      %v2058 = vadd.f32 %v1905, %v1988
      %v2059 = vadd.f32 %v1906, %v1990
      %v2060 = vadd.f32 %v1907, %v1992
      %v2061 = vadd.f32 %v1908, %v1994
      %v2062 = vadd.f32 %v1909, %v1996
      %v2063 = vadd.f32 %v1910, %v1998
      %v2064 = vadd.f32 %v1911, %v2000
      %v2065 = vadd.f32 %v1912, %v2002
      %v2066 = vadd.f32 %v1913, %v2004
      %v2067 = vadd.f32 %v1914, %v2006
      %v2068 = vadd.f32 %v1915, %v2008
      %v2069 = vmax.f32 %v2039, 0.0
      %v2070 = vmax.f32 %v2040, 0.0
      %v2071 = vmax.f32 %v2041, 0.0
      %v2072 = vmax.f32 %v2042, 0.0
      %v2073 = vmax.f32 %v2043, 0.0
      %v2074 = vmax.f32 %v2044, 0.0
      %v2075 = vmax.f32 %v2045, 0.0
      %v2076 = vmax.f32 %v2046, 0.0
      %v2077 = vmax.f32 %v2047, 0.0
      %v2078 = vmax.f32 %v2048, 0.0
      %v2079 = vmax.f32 %v2049, 0.0
      %v2080 = vmax.f32 %v2050, 0.0
      %v2081 = vmax.f32 %v2051, 0.0
      %v2082 = vmax.f32 %v2052, 0.0
      %v2083 = vmax.f32 %v2053, 0.0
      %v2084 = vmax.f32 %v2054, 0.0
      %v2085 = vmax.f32 %v2055, 0.0
      %v2086 = vmax.f32 %v2056, 0.0
      %v2087 = vmax.f32 %v2057, 0.0
      %v2088 = vmax.f32 %v2058, 0.0
      %v2089 = vmax.f32 %v2059, 0.0
      %v2090 = vmax.f32 %v2060, 0.0
      %v2091 = vmax.f32 %v2061, 0.0
      %v2092 = vmax.f32 %v2062, 0.0
      %v2093 = vmax.f32 %v2063, 0.0
      %v2094 = vmax.f32 %v2064, 0.0
      %v2095 = vmax.f32 %v2065, 0.0
      %v2096 = vmax.f32 %v2066, 0.0
      %v2097 = vmax.f32 %v2067, 0.0
      %v2098 = vmax.f32 %v2068, 0.0
      %v2099 = vpack.c.bf16 %v2070, %v2069
      %v2100 = vpack.c.bf16 %v2072, %v2071
      %v2101 = vpack.c.bf16 %v2074, %v2073
      %v2102 = vpack.c.bf16 %v2076, %v2075
      %v2103 = vpack.c.bf16 %v2078, %v2077
      %v2104 = vpack.c.bf16 %v2080, %v2079
      %v2105 = vpack.c.bf16 %v2082, %v2081
      %v2106 = vpack.c.bf16 %v2084, %v2083
      %v2107 = vpack.c.bf16 %v2086, %v2085
      %v2108 = vpack.c.bf16 %v2088, %v2087
      %v2109 = vpack.c.bf16 %v2090, %v2089
      %v2110 = vpack.c.bf16 %v2092, %v2091
      %v2111 = vpack.c.bf16 %v2094, %v2093
      %v2112 = vpack.c.bf16 %v2096, %v2095
      %v2113 = vpack.c.bf16 %v2098, %v2097
      %2114 = vst.msk [vmem:[#allocation3] sm:$0xff] %vm337, %v2099
      %2115 = vst.msk [vmem:[#allocation3 + $0x8] sm:$0xff] %vm337, %v2100
      %2116 = vst.msk [vmem:[#allocation3 + $0x10] sm:$0xff] %vm337, %v2101
      %2117 = vst.msk [vmem:[#allocation3 + $0x18] sm:$0xff] %vm337, %v2102
      %2118 = vst.msk [vmem:[#allocation3 + $0x20] sm:$0xff] %vm337, %v2103
      %2119 = vst.msk [vmem:[#allocation3 + $0x28] sm:$0xff] %vm337, %v2104
      %2120 = vst.msk [vmem:[#allocation3 + $0x30] sm:$0xff] %vm337, %v2105
      %2121 = vst.msk [vmem:[#allocation3 + $0x38] sm:$0xff] %vm337, %v2106
      %2122 = vst.msk [vmem:[#allocation3 + $0x40] sm:$0xff] %vm337, %v2107
      %2123 = vst.msk [vmem:[#allocation3 + $0x48] sm:$0xff] %vm337, %v2108
      %2124 = vst.msk [vmem:[#allocation3 + $0x50] sm:$0xff] %vm337, %v2109
      %2125 = vst.msk [vmem:[#allocation3 + $0x58] sm:$0xff] %vm337, %v2110
      %2126 = vst.msk [vmem:[#allocation3 + $0x60] sm:$0xff] %vm337, %v2111
      %2127 = vst.msk [vmem:[#allocation3 + $0x68] sm:$0xff] %vm337, %v2112
      %2128 = vst.msk [vmem:[#allocation3 + $0x70] sm:$0xff] %vm337, %v2113
      %v2129 = vld [vmem:[#allocation3] sm:$0xff]
      %v2130 = vld [vmem:[#allocation3 + $0x8] sm:$0xff]
      %v2131 = vld [vmem:[#allocation3 + $0x10] sm:$0xff]
      %v2132 = vld [vmem:[#allocation3 + $0x18] sm:$0xff]
      %v2133 = vld [vmem:[#allocation3 + $0x20] sm:$0xff]
      %v2134 = vld [vmem:[#allocation3 + $0x28] sm:$0xff]
      %v2135 = vld [vmem:[#allocation3 + $0x30] sm:$0xff]
      %v2136 = vld [vmem:[#allocation3 + $0x38] sm:$0xff]
      %v2137 = vld [vmem:[#allocation3 + $0x40] sm:$0xff]
      %v2138 = vld [vmem:[#allocation3 + $0x48] sm:$0xff]
      %v2139 = vld [vmem:[#allocation3 + $0x50] sm:$0xff]
      %v2140 = vld [vmem:[#allocation3 + $0x58] sm:$0xff]
      %v2141 = vld [vmem:[#allocation3 + $0x60] sm:$0xff]
      %v2142 = vld [vmem:[#allocation3 + $0x68] sm:$0xff]
      %v2143 = vld [vmem:[#allocation3 + $0x70] sm:$0xff]
      %v2144 = vld [vmem:[#allocation3 + $0x78] sm:$0xff]
      %v2145 = vld [vmem:[%s5] sm:$0xff]
      %v2146 = vld [vmem:[%s5 + $0x8] sm:$0xff]
      %v2147 = vld [vmem:[%s5 + $0x10] sm:$0xff]
      %v2148 = vld [vmem:[%s5 + $0x18] sm:$0xff]
      %v2149 = vld [vmem:[%s5 + $0x20] sm:$0xff]
      %v2150 = vld [vmem:[%s5 + $0x28] sm:$0xff]
      %v2151 = vld [vmem:[%s5 + $0x30] sm:$0xff]
      %v2152 = vld [vmem:[%s5 + $0x38] sm:$0xff]
      %v2153 = vld [vmem:[#allocation3 + $0x80] sm:$0xff]
      %s2154 = scalar_lea.vmem %s5, 64
      %v2155 = vld [vmem:[%s2154] sm:$0xff]
      %v2156 = vld [vmem:[%s2154 + $0x8] sm:$0xff]
      %v2157 = vld [vmem:[%s2154 + $0x10] sm:$0xff]
      %v2158 = vld [vmem:[%s2154 + $0x18] sm:$0xff]
      %v2159 = vld [vmem:[%s2154 + $0x20] sm:$0xff]
      %v2160 = vld [vmem:[%s2154 + $0x28] sm:$0xff]
      %v2161 = vld [vmem:[%s2154 + $0x30] sm:$0xff]
      %v2162 = vld [vmem:[%s2154 + $0x38] sm:$0xff]
      %v2171 = vunpack.c.l.b16 %v2155
      %v2172 = vunpack.c.h.b16 %v2155
      %v2173 = vunpack.c.l.b16 %v2156
      %v2174 = vunpack.c.h.b16 %v2156
      %v2175 = vunpack.c.l.b16 %v2157
      %v2176 = vunpack.c.h.b16 %v2157
      %v2177 = vunpack.c.l.b16 %v2158
      %v2178 = vunpack.c.h.b16 %v2158
      %v2179 = vunpack.c.l.b16 %v2159
      %v2180 = vunpack.c.h.b16 %v2159
      %v2181 = vunpack.c.l.b16 %v2160
      %v2182 = vunpack.c.h.b16 %v2160
      %v2183 = vunpack.c.l.b16 %v2161
      %v2184 = vunpack.c.h.b16 %v2161
      %v2185 = vunpack.c.l.b16 %v2162
      %v2186 = vunpack.c.h.b16 %v2162
      %v2187 = vpack.c.b16 %v2173, %v2171
      %v2188 = vpack.c.b16 %v2174, %v2172
      %v2189 = vpack.c.b16 %v2177, %v2175
      %v2190 = vpack.c.b16 %v2178, %v2176
      %v2191 = vpack.c.b16 %v2181, %v2179
      %v2192 = vpack.c.b16 %v2182, %v2180
      %v2193 = vpack.c.b16 %v2185, %v2183
      %v2194 = vpack.c.b16 %v2186, %v2184
      %v2204 = vsel %vm337, %v2130, 0
      %v2207 = vsel %vm337, %v2131, 0
      %v2210 = vsel %vm337, %v2132, 0
      %v2213 = vsel %vm337, %v2133, 0
      %v2216 = vsel %vm337, %v2134, 0
      %v2219 = vsel %vm337, %v2135, 0
      %v2222 = vsel %vm337, %v2136, 0
      %v2225 = vsel %vm337, %v2137, 0
      %v2228 = vsel %vm337, %v2138, 0
      %v2231 = vsel %vm337, %v2139, 0
      %v2234 = vsel %vm337, %v2140, 0
      %v2237 = vsel %vm337, %v2141, 0
      %v2240 = vsel %vm337, %v2142, 0
      %v2243 = vsel %vm337, %v2143, 0
      %v2246 = vsel %vm337, %v2144, 0
      %v2249 = vsel %vm337, %v2153, 0
      %2251 = vmatprep.subr.bf16.mxu0 %v2188
      %2252 = vmatpush1.bf16.msra.mxu0 %v2187
      %2253 = vmatprep.subr.bf16.mxu0 %v2190
      %2254 = vmatpush1.bf16.msra.mxu0 %v2189
      %2255 = vmatprep.subr.bf16.mxu0 %v2192
      %2256 = vmatpush1.bf16.msra.mxu0 %v2191
      %2257 = vmatprep.subr.bf16.mxu0 %v2194
      %2258 = vmatpush1.bf16.msra.mxu0 %v2193
      %2259 = vmatprep.subr.bf16.mxu0 0
      %2260 = vmatpush1.bf16.msra.mxu0 0
      %2261 = vmatprep.subr.bf16.mxu0 0
      %2262 = vmatpush1.bf16.msra.mxu0 0
      %2263 = vmatprep.subr.bf16.mxu0 0
      %2264 = vmatpush1.bf16.msra.mxu0 0
      %2265 = vmatprep.subr.bf16.mxu0 0
      %2266 = vmatpush1.bf16.msra.mxu0 0
      %2267 = vmatprep.subr.bf16.mxu0 0
      %2268 = vmatpush1.bf16.msra.mxu0 0
      %2269 = vmatprep.subr.bf16.mxu0 0
      %2270 = vmatpush1.bf16.msra.mxu0 0
      %2271 = vmatprep.subr.bf16.mxu0 0
      %2272 = vmatpush1.bf16.msra.mxu0 0
      %2273 = vmatprep.subr.bf16.mxu0 0
      %2274 = vmatpush1.bf16.msra.mxu0 0
      %2275 = vmatprep.subr.bf16.mxu0 0
      %2276 = vmatpush1.bf16.msra.mxu0 0
      %2277 = vmatprep.subr.bf16.mxu0 0
      %2278 = vmatpush1.bf16.msra.mxu0 0
      %2279 = vmatprep.subr.bf16.mxu0 0
      %2280 = vmatpush1.bf16.msra.mxu0 0
      %2281 = vmatprep.subr.bf16.mxu0 0
      %2282 = vmatpush1.bf16.msra.mxu0 0
      %2283 = vmatprep.mubr.bf16.mxu0 0
      %2284 = vmatmul.mubr.bf16.gmra.mrb[0].mxu0 %v2204
      %v2285 = vpop.f32.mrb[0].mxu0
      %v2286 = vadd.f32 0.0, %v2285
      %v2287 = vpop.f32.mrb[0].mxu0
      %v2288 = vadd.f32 0.0, %v2287
      %v2289 = vpop.f32.mrb[0].mxu0
      %v2290 = vadd.f32 0.0, %v2289
      %v2291 = vpop.f32.mrb[0].mxu0
      %v2292 = vadd.f32 0.0, %v2291
      %2293 = vmatprep.mubr.bf16.mxu0 0
      %2294 = vmatmul.mubr.bf16.gmra.mrb[0].mxu0 %v2207
      %v2295 = vpop.f32.mrb[0].mxu0
      %v2296 = vadd.f32 0.0, %v2295
      %v2297 = vpop.f32.mrb[0].mxu0
      %v2298 = vadd.f32 0.0, %v2297
      %v2299 = vpop.f32.mrb[0].mxu0
      %v2300 = vadd.f32 0.0, %v2299
      %v2301 = vpop.f32.mrb[0].mxu0
      %v2302 = vadd.f32 0.0, %v2301
      %2303 = vmatprep.mubr.bf16.mxu0 0
      %2304 = vmatmul.mubr.bf16.gmra.mrb[0].mxu0 %v2210
      %v2305 = vpop.f32.mrb[0].mxu0
      %v2306 = vadd.f32 0.0, %v2305
      %v2307 = vpop.f32.mrb[0].mxu0
      %v2308 = vadd.f32 0.0, %v2307
      %v2309 = vpop.f32.mrb[0].mxu0
      %v2310 = vadd.f32 0.0, %v2309
      %v2311 = vpop.f32.mrb[0].mxu0
      %v2312 = vadd.f32 0.0, %v2311
      %2313 = vmatprep.mubr.bf16.mxu0 0
      %2314 = vmatmul.mubr.bf16.gmra.mrb[0].mxu0 %v2213
      %v2315 = vpop.f32.mrb[0].mxu0
      %v2316 = vadd.f32 0.0, %v2315
      %v2317 = vpop.f32.mrb[0].mxu0
      %v2318 = vadd.f32 0.0, %v2317
      %v2319 = vpop.f32.mrb[0].mxu0
      %v2320 = vadd.f32 0.0, %v2319
      %v2321 = vpop.f32.mrb[0].mxu0
      %v2322 = vadd.f32 0.0, %v2321
      %2323 = vmatprep.mubr.bf16.mxu0 0
      %2324 = vmatmul.mubr.bf16.gmra.mrb[0].mxu0 %v2216
      %v2325 = vpop.f32.mrb[0].mxu0
      %v2326 = vadd.f32 0.0, %v2325
      %v2327 = vpop.f32.mrb[0].mxu0
      %v2328 = vadd.f32 0.0, %v2327
      %v2329 = vpop.f32.mrb[0].mxu0
      %v2330 = vadd.f32 0.0, %v2329
      %v2331 = vpop.f32.mrb[0].mxu0
      %v2332 = vadd.f32 0.0, %v2331
      %2333 = vmatprep.mubr.bf16.mxu0 0
      %2334 = vmatmul.mubr.bf16.gmra.mrb[0].mxu0 %v2219
      %v2335 = vpop.f32.mrb[0].mxu0
      %v2336 = vadd.f32 0.0, %v2335
      %v2337 = vpop.f32.mrb[0].mxu0
      %v2338 = vadd.f32 0.0, %v2337
      %v2339 = vpop.f32.mrb[0].mxu0
      %v2340 = vadd.f32 0.0, %v2339
      %v2341 = vpop.f32.mrb[0].mxu0
      %v2342 = vadd.f32 0.0, %v2341
      %2343 = vmatprep.mubr.bf16.mxu0 0
      %2344 = vmatmul.mubr.bf16.gmra.mrb[0].mxu0 %v2222
      %v2345 = vpop.f32.mrb[0].mxu0
      %v2346 = vadd.f32 0.0, %v2345
      %v2347 = vpop.f32.mrb[0].mxu0
      %v2348 = vadd.f32 0.0, %v2347
      %v2349 = vpop.f32.mrb[0].mxu0
      %v2350 = vadd.f32 0.0, %v2349
      %v2351 = vpop.f32.mrb[0].mxu0
      %v2352 = vadd.f32 0.0, %v2351
      %2353 = vmatprep.mubr.bf16.mxu0 0
      %2354 = vmatmul.mubr.bf16.gmra.mrb[0].mxu0 %v2225
      %v2355 = vpop.f32.mrb[0].mxu0
      %v2356 = vadd.f32 0.0, %v2355
      %v2357 = vpop.f32.mrb[0].mxu0
      %v2358 = vadd.f32 0.0, %v2357
      %v2359 = vpop.f32.mrb[0].mxu0
      %v2360 = vadd.f32 0.0, %v2359
      %v2361 = vpop.f32.mrb[0].mxu0
      %v2362 = vadd.f32 0.0, %v2361
      %2363 = vmatprep.mubr.bf16.mxu0 0
      %2364 = vmatmul.mubr.bf16.gmra.mrb[0].mxu0 %v2228
      %v2365 = vpop.f32.mrb[0].mxu0
      %v2366 = vadd.f32 0.0, %v2365
      %v2367 = vpop.f32.mrb[0].mxu0
      %v2368 = vadd.f32 0.0, %v2367
      %v2369 = vpop.f32.mrb[0].mxu0
      %v2370 = vadd.f32 0.0, %v2369
      %v2371 = vpop.f32.mrb[0].mxu0
      %v2372 = vadd.f32 0.0, %v2371
      %2373 = vmatprep.mubr.bf16.mxu0 0
      %2374 = vmatmul.mubr.bf16.gmra.mrb[0].mxu0 %v2231
      %v2375 = vpop.f32.mrb[0].mxu0
      %v2376 = vadd.f32 0.0, %v2375
      %v2377 = vpop.f32.mrb[0].mxu0
      %v2378 = vadd.f32 0.0, %v2377
      %v2379 = vpop.f32.mrb[0].mxu0
      %v2380 = vadd.f32 0.0, %v2379
      %v2381 = vpop.f32.mrb[0].mxu0
      %v2382 = vadd.f32 0.0, %v2381
      %2383 = vmatprep.mubr.bf16.mxu0 0
      %2384 = vmatmul.mubr.bf16.gmra.mrb[0].mxu0 %v2234
      %v2385 = vpop.f32.mrb[0].mxu0
      %v2386 = vadd.f32 0.0, %v2385
      %v2387 = vpop.f32.mrb[0].mxu0
      %v2388 = vadd.f32 0.0, %v2387
      %v2389 = vpop.f32.mrb[0].mxu0
      %v2390 = vadd.f32 0.0, %v2389
      %v2391 = vpop.f32.mrb[0].mxu0
      %v2392 = vadd.f32 0.0, %v2391
      %2393 = vmatprep.mubr.bf16.mxu0 0
      %2394 = vmatmul.mubr.bf16.gmra.mrb[0].mxu0 %v2237
      %v2395 = vpop.f32.mrb[0].mxu0
      %v2396 = vadd.f32 0.0, %v2395
      %v2397 = vpop.f32.mrb[0].mxu0
      %v2398 = vadd.f32 0.0, %v2397
      %v2399 = vpop.f32.mrb[0].mxu0
      %v2400 = vadd.f32 0.0, %v2399
      %v2401 = vpop.f32.mrb[0].mxu0
      %v2402 = vadd.f32 0.0, %v2401
      %2403 = vmatprep.mubr.bf16.mxu0 0
      %2404 = vmatmul.mubr.bf16.gmra.mrb[0].mxu0 %v2240
      %v2405 = vpop.f32.mrb[0].mxu0
      %v2406 = vadd.f32 0.0, %v2405
      %v2407 = vpop.f32.mrb[0].mxu0
      %v2408 = vadd.f32 0.0, %v2407
      %v2409 = vpop.f32.mrb[0].mxu0
      %v2410 = vadd.f32 0.0, %v2409
      %v2411 = vpop.f32.mrb[0].mxu0
      %v2412 = vadd.f32 0.0, %v2411
      %2413 = vmatprep.mubr.bf16.mxu0 0
      %2414 = vmatmul.mubr.bf16.gmra.mrb[0].mxu0 %v2243
      %v2415 = vpop.f32.mrb[0].mxu0
      %v2416 = vadd.f32 0.0, %v2415
      %v2417 = vpop.f32.mrb[0].mxu0
      %v2418 = vadd.f32 0.0, %v2417
      %v2419 = vpop.f32.mrb[0].mxu0
      %v2420 = vadd.f32 0.0, %v2419
      %v2421 = vpop.f32.mrb[0].mxu0
      %v2422 = vadd.f32 0.0, %v2421
      %2423 = vmatprep.mubr.bf16.mxu0 0
      %2424 = vmatmul.mubr.bf16.gmra.mrb[0].mxu0 %v2246
      %v2425 = vpop.f32.mrb[0].mxu0
      %v2426 = vadd.f32 0.0, %v2425
      %v2427 = vpop.f32.mrb[0].mxu0
      %v2428 = vadd.f32 0.0, %v2427
      %v2429 = vpop.f32.mrb[0].mxu0
      %v2430 = vadd.f32 0.0, %v2429
      %v2431 = vpop.f32.mrb[0].mxu0
      %v2432 = vadd.f32 0.0, %v2431
      %2433 = vmatprep.mubr.bf16.mxu0 0
      %2434 = vmatmul.mubr.bf16.gmra.mrb[0].mxu0 %v2249
      %v2435 = vpop.f32.mrb[0].mxu0
      %v2436 = vadd.f32 0.0, %v2435
      %v2437 = vpop.f32.mrb[0].mxu0
      %v2438 = vadd.f32 0.0, %v2437
      %v2439 = vpop.f32.mrb[0].mxu0
      %v2440 = vpop.f32.mrb[0].mxu0
      %2441 = vdwg.mxu0
      %v2450 = vunpack.c.l.b16 %v2145
      %v2451 = vunpack.c.h.b16 %v2145
      %v2452 = vunpack.c.l.b16 %v2146
      %v2453 = vunpack.c.h.b16 %v2146
      %v2454 = vunpack.c.l.b16 %v2147
      %v2455 = vunpack.c.h.b16 %v2147
      %v2456 = vunpack.c.l.b16 %v2148
      %v2457 = vunpack.c.h.b16 %v2148
      %v2458 = vunpack.c.l.b16 %v2149
      %v2459 = vunpack.c.h.b16 %v2149
      %v2460 = vunpack.c.l.b16 %v2150
      %v2461 = vunpack.c.h.b16 %v2150
      %v2462 = vunpack.c.l.b16 %v2151
      %v2463 = vunpack.c.h.b16 %v2151
      %v2464 = vunpack.c.l.b16 %v2152
      %v2465 = vunpack.c.h.b16 %v2152
      %v2466 = vpack.c.b16 %v2452, %v2450
      %v2467 = vpack.c.b16 %v2453, %v2451
      %v2468 = vpack.c.b16 %v2456, %v2454
      %v2469 = vpack.c.b16 %v2457, %v2455
      %v2470 = vpack.c.b16 %v2460, %v2458
      %v2471 = vpack.c.b16 %v2461, %v2459
      %v2472 = vpack.c.b16 %v2464, %v2462
      %v2473 = vpack.c.b16 %v2465, %v2463
      %v2483 = vsel %vm337, %v2129, 0
      %2485 = vmatprep.subr.bf16.mxu0 %v2467
      %2486 = vmatpush1.bf16.msra.mxu0 %v2466
      %2487 = vmatprep.subr.bf16.mxu0 %v2469
      %2488 = vmatpush1.bf16.msra.mxu0 %v2468
      %2489 = vmatprep.subr.bf16.mxu0 %v2471
      %2490 = vmatpush1.bf16.msra.mxu0 %v2470
      %2491 = vmatprep.subr.bf16.mxu0 %v2473
      %2492 = vmatpush1.bf16.msra.mxu0 %v2472
      %2493 = vmatprep.subr.bf16.mxu0 0
      %2494 = vmatpush1.bf16.msra.mxu0 0
      %2495 = vmatprep.subr.bf16.mxu0 0
      %2496 = vmatpush1.bf16.msra.mxu0 0
      %2497 = vmatprep.subr.bf16.mxu0 0
      %2498 = vmatpush1.bf16.msra.mxu0 0
      %2499 = vmatprep.subr.bf16.mxu0 0
      %2500 = vmatpush1.bf16.msra.mxu0 0
      %2501 = vmatprep.subr.bf16.mxu0 0
      %2502 = vmatpush1.bf16.msra.mxu0 0
      %2503 = vmatprep.subr.bf16.mxu0 0
      %2504 = vmatpush1.bf16.msra.mxu0 0
      %2505 = vmatprep.subr.bf16.mxu0 0
      %2506 = vmatpush1.bf16.msra.mxu0 0
      %2507 = vmatprep.subr.bf16.mxu0 0
      %2508 = vmatpush1.bf16.msra.mxu0 0
      %2509 = vmatprep.subr.bf16.mxu0 0
      %2510 = vmatpush1.bf16.msra.mxu0 0
      %2511 = vmatprep.subr.bf16.mxu0 0
      %2512 = vmatpush1.bf16.msra.mxu0 0
      %2513 = vmatprep.subr.bf16.mxu0 0
      %2514 = vmatpush1.bf16.msra.mxu0 0
      %2515 = vmatprep.subr.bf16.mxu0 0
      %2516 = vmatpush1.bf16.msra.mxu0 0
      %2517 = vmatprep.mubr.bf16.mxu0 0
      %2518 = vmatmul.mubr.bf16.gmra.mrb[0].mxu0 %v2483
      %v2519 = vpop.f32.mrb[0].mxu0
      %v2520 = vadd.f32 %v2286, %v2519
      %v2521 = vpop.f32.mrb[0].mxu0
      %v2522 = vadd.f32 %v2288, %v2521
      %v2523 = vpop.f32.mrb[0].mxu0
      %v2524 = vadd.f32 %v2290, %v2523
      %v2525 = vpop.f32.mrb[0].mxu0
      %v2526 = vadd.f32 %v2292, %v2525
      %2527 = vmatprep.mubr.bf16.mxu0 0
      %2528 = vmatmul.mubr.bf16.gmra.mrb[0].mxu0 %v2204
      %v2529 = vpop.f32.mrb[0].mxu0
      %v2530 = vadd.f32 %v2296, %v2529
      %v2531 = vpop.f32.mrb[0].mxu0
      %v2532 = vadd.f32 %v2298, %v2531
      %v2533 = vpop.f32.mrb[0].mxu0
      %v2534 = vadd.f32 %v2300, %v2533
      %v2535 = vpop.f32.mrb[0].mxu0
      %v2536 = vadd.f32 %v2302, %v2535
      %2537 = vmatprep.mubr.bf16.mxu0 0
      %2538 = vmatmul.mubr.bf16.gmra.mrb[0].mxu0 %v2207
      %v2539 = vpop.f32.mrb[0].mxu0
      %v2540 = vadd.f32 %v2306, %v2539
      %v2541 = vpop.f32.mrb[0].mxu0
      %v2542 = vadd.f32 %v2308, %v2541
      %v2543 = vpop.f32.mrb[0].mxu0
      %v2544 = vadd.f32 %v2310, %v2543
      %v2545 = vpop.f32.mrb[0].mxu0
      %v2546 = vadd.f32 %v2312, %v2545
      %2547 = vmatprep.mubr.bf16.mxu0 0
      %2548 = vmatmul.mubr.bf16.gmra.mrb[0].mxu0 %v2210
      %v2549 = vpop.f32.mrb[0].mxu0
      %v2550 = vadd.f32 %v2316, %v2549
      %v2551 = vpop.f32.mrb[0].mxu0
      %v2552 = vadd.f32 %v2318, %v2551
      %v2553 = vpop.f32.mrb[0].mxu0
      %v2554 = vadd.f32 %v2320, %v2553
      %v2555 = vpop.f32.mrb[0].mxu0
      %v2556 = vadd.f32 %v2322, %v2555
      %2557 = vmatprep.mubr.bf16.mxu0 0
      %2558 = vmatmul.mubr.bf16.gmra.mrb[0].mxu0 %v2213
      %v2559 = vpop.f32.mrb[0].mxu0
      %v2560 = vadd.f32 %v2326, %v2559
      %v2561 = vpop.f32.mrb[0].mxu0
      %v2562 = vadd.f32 %v2328, %v2561
      %v2563 = vpop.f32.mrb[0].mxu0
      %v2564 = vadd.f32 %v2330, %v2563
      %v2565 = vpop.f32.mrb[0].mxu0
      %v2566 = vadd.f32 %v2332, %v2565
      %2567 = vmatprep.mubr.bf16.mxu0 0
      %2568 = vmatmul.mubr.bf16.gmra.mrb[0].mxu0 %v2216
      %v2569 = vpop.f32.mrb[0].mxu0
      %v2570 = vadd.f32 %v2336, %v2569
      %v2571 = vpop.f32.mrb[0].mxu0
      %v2572 = vadd.f32 %v2338, %v2571
      %v2573 = vpop.f32.mrb[0].mxu0
      %v2574 = vadd.f32 %v2340, %v2573
      %v2575 = vpop.f32.mrb[0].mxu0
      %v2576 = vadd.f32 %v2342, %v2575
      %2577 = vmatprep.mubr.bf16.mxu0 0
      %2578 = vmatmul.mubr.bf16.gmra.mrb[0].mxu0 %v2219
      %v2579 = vpop.f32.mrb[0].mxu0
      %v2580 = vadd.f32 %v2346, %v2579
      %v2581 = vpop.f32.mrb[0].mxu0
      %v2582 = vadd.f32 %v2348, %v2581
      %v2583 = vpop.f32.mrb[0].mxu0
      %v2584 = vadd.f32 %v2350, %v2583
      %v2585 = vpop.f32.mrb[0].mxu0
      %v2586 = vadd.f32 %v2352, %v2585
      %2587 = vmatprep.mubr.bf16.mxu0 0
      %2588 = vmatmul.mubr.bf16.gmra.mrb[0].mxu0 %v2222
      %v2589 = vpop.f32.mrb[0].mxu0
      %v2590 = vadd.f32 %v2356, %v2589
      %v2591 = vpop.f32.mrb[0].mxu0
      %v2592 = vadd.f32 %v2358, %v2591
      %v2593 = vpop.f32.mrb[0].mxu0
      %v2594 = vadd.f32 %v2360, %v2593
      %v2595 = vpop.f32.mrb[0].mxu0
      %v2596 = vadd.f32 %v2362, %v2595
      %2597 = vmatprep.mubr.bf16.mxu0 0
      %2598 = vmatmul.mubr.bf16.gmra.mrb[0].mxu0 %v2225
      %v2599 = vpop.f32.mrb[0].mxu0
      %v2600 = vadd.f32 %v2366, %v2599
      %v2601 = vpop.f32.mrb[0].mxu0
      %v2602 = vadd.f32 %v2368, %v2601
      %v2603 = vpop.f32.mrb[0].mxu0
      %v2604 = vadd.f32 %v2370, %v2603
      %v2605 = vpop.f32.mrb[0].mxu0
      %v2606 = vadd.f32 %v2372, %v2605
      %2607 = vmatprep.mubr.bf16.mxu0 0
      %2608 = vmatmul.mubr.bf16.gmra.mrb[0].mxu0 %v2228
      %v2609 = vpop.f32.mrb[0].mxu0
      %v2610 = vadd.f32 %v2376, %v2609
      %v2611 = vpop.f32.mrb[0].mxu0
      %v2612 = vadd.f32 %v2378, %v2611
      %v2613 = vpop.f32.mrb[0].mxu0
      %v2614 = vadd.f32 %v2380, %v2613
      %v2615 = vpop.f32.mrb[0].mxu0
      %v2616 = vadd.f32 %v2382, %v2615
      %2617 = vmatprep.mubr.bf16.mxu0 0
      %2618 = vmatmul.mubr.bf16.gmra.mrb[0].mxu0 %v2231
      %v2619 = vpop.f32.mrb[0].mxu0
      %v2620 = vadd.f32 %v2386, %v2619
      %v2621 = vpop.f32.mrb[0].mxu0
      %v2622 = vadd.f32 %v2388, %v2621
      %v2623 = vpop.f32.mrb[0].mxu0
      %v2624 = vadd.f32 %v2390, %v2623
      %v2625 = vpop.f32.mrb[0].mxu0
      %v2626 = vadd.f32 %v2392, %v2625
      %2627 = vmatprep.mubr.bf16.mxu0 0
      %2628 = vmatmul.mubr.bf16.gmra.mrb[0].mxu0 %v2234
      %v2629 = vpop.f32.mrb[0].mxu0
      %v2630 = vadd.f32 %v2396, %v2629
      %v2631 = vpop.f32.mrb[0].mxu0
      %v2632 = vadd.f32 %v2398, %v2631
      %v2633 = vpop.f32.mrb[0].mxu0
      %v2634 = vadd.f32 %v2400, %v2633
      %v2635 = vpop.f32.mrb[0].mxu0
      %v2636 = vadd.f32 %v2402, %v2635
      %2637 = vmatprep.mubr.bf16.mxu0 0
      %2638 = vmatmul.mubr.bf16.gmra.mrb[0].mxu0 %v2237
      %v2639 = vpop.f32.mrb[0].mxu0
      %v2640 = vadd.f32 %v2406, %v2639
      %v2641 = vpop.f32.mrb[0].mxu0
      %v2642 = vadd.f32 %v2408, %v2641
      %v2643 = vpop.f32.mrb[0].mxu0
      %v2644 = vadd.f32 %v2410, %v2643
      %v2645 = vpop.f32.mrb[0].mxu0
      %v2646 = vadd.f32 %v2412, %v2645
      %2647 = vmatprep.mubr.bf16.mxu0 0
      %2648 = vmatmul.mubr.bf16.gmra.mrb[0].mxu0 %v2240
      %v2649 = vpop.f32.mrb[0].mxu0
      %v2650 = vadd.f32 %v2416, %v2649
      %v2651 = vpop.f32.mrb[0].mxu0
      %v2652 = vadd.f32 %v2418, %v2651
      %v2653 = vpop.f32.mrb[0].mxu0
      %v2654 = vadd.f32 %v2420, %v2653
      %v2655 = vpop.f32.mrb[0].mxu0
      %v2656 = vadd.f32 %v2422, %v2655
      %2657 = vmatprep.mubr.bf16.mxu0 0
      %2658 = vmatmul.mubr.bf16.gmra.mrb[0].mxu0 %v2243
      %v2659 = vpop.f32.mrb[0].mxu0
      %v2660 = vadd.f32 %v2426, %v2659
      %v2661 = vpop.f32.mrb[0].mxu0
      %v2662 = vadd.f32 %v2428, %v2661
      %v2663 = vpop.f32.mrb[0].mxu0
      %v2664 = vadd.f32 %v2430, %v2663
      %v2665 = vpop.f32.mrb[0].mxu0
      %v2666 = vadd.f32 %v2432, %v2665
      %2667 = vmatprep.mubr.bf16.mxu0 0
      %2668 = vmatmul.mubr.bf16.gmra.mrb[0].mxu0 %v2246
      %v2669 = vpop.f32.mrb[0].mxu0
      %v2670 = vadd.f32 %v2436, %v2669
      %v2671 = vpop.f32.mrb[0].mxu0
      %v2672 = vadd.f32 %v2438, %v2671
      %v2673 = vpop.f32.mrb[0].mxu0
      %v2674 = vpop.f32.mrb[0].mxu0
      %2675 = vdwg.mxu0
      %v2676 = vld [vmem:[#allocation3 + $0x10] sm:$0xff]
      %v2677 = vld [vmem:[#allocation3 + $0x18] sm:$0xff]
      %v2678 = vld [vmem:[#allocation3 + $0x20] sm:$0xff]
      %v2679 = vld [vmem:[#allocation3 + $0x28] sm:$0xff]
      %v2680 = vld [vmem:[#allocation3 + $0x30] sm:$0xff]
      %v2681 = vld [vmem:[#allocation3 + $0x38] sm:$0xff]
      %v2682 = vld [vmem:[#allocation3 + $0x40] sm:$0xff]
      %v2683 = vld [vmem:[#allocation3 + $0x48] sm:$0xff]
      %v2684 = vld [vmem:[#allocation3 + $0x50] sm:$0xff]
      %v2685 = vld [vmem:[#allocation3 + $0x58] sm:$0xff]
      %v2686 = vld [vmem:[#allocation3 + $0x60] sm:$0xff]
      %v2687 = vld [vmem:[#allocation3 + $0x68] sm:$0xff]
      %v2688 = vld [vmem:[#allocation3 + $0x70] sm:$0xff]
      %v2689 = vld [vmem:[#allocation3 + $0x78] sm:$0xff]
      %v2690 = vld [vmem:[#allocation3 + $0x80] sm:$0xff]
      %v2691 = vld [vmem:[#allocation3 + $0x88] sm:$0xff]
      %s2692 = scalar_lea.vmem %s5, 128
      %v2693 = vld [vmem:[%s2692] sm:$0xff]
      %v2694 = vld [vmem:[%s2692 + $0x8] sm:$0xff]
      %v2695 = vld [vmem:[%s2692 + $0x10] sm:$0xff]
      %v2696 = vld [vmem:[%s2692 + $0x18] sm:$0xff]
      %v2697 = vld [vmem:[%s2692 + $0x20] sm:$0xff]
      %v2698 = vld [vmem:[%s2692 + $0x28] sm:$0xff]
      %v2699 = vld [vmem:[%s2692 + $0x30] sm:$0xff]
      %v2700 = vld [vmem:[%s2692 + $0x38] sm:$0xff]
      %v2709 = vunpack.c.l.b16 %v2693
      %v2710 = vunpack.c.h.b16 %v2693
      %v2711 = vunpack.c.l.b16 %v2694
      %v2712 = vunpack.c.h.b16 %v2694
      %v2713 = vunpack.c.l.b16 %v2695
      %v2714 = vunpack.c.h.b16 %v2695
      %v2715 = vunpack.c.l.b16 %v2696
      %v2716 = vunpack.c.h.b16 %v2696
      %v2717 = vunpack.c.l.b16 %v2697
      %v2718 = vunpack.c.h.b16 %v2697
      %v2719 = vunpack.c.l.b16 %v2698
      %v2720 = vunpack.c.h.b16 %v2698
      %v2721 = vunpack.c.l.b16 %v2699
      %v2722 = vunpack.c.h.b16 %v2699
      %v2723 = vunpack.c.l.b16 %v2700
      %v2724 = vunpack.c.h.b16 %v2700
      %v2725 = vpack.c.b16 %v2711, %v2709
      %v2726 = vpack.c.b16 %v2712, %v2710
      %v2727 = vpack.c.b16 %v2715, %v2713
      %v2728 = vpack.c.b16 %v2716, %v2714
      %v2729 = vpack.c.b16 %v2719, %v2717
      %v2730 = vpack.c.b16 %v2720, %v2718
      %v2731 = vpack.c.b16 %v2723, %v2721
      %v2732 = vpack.c.b16 %v2724, %v2722
      %v2742 = vsel %vm337, %v2676, 0
      %v2745 = vsel %vm337, %v2677, 0
      %v2748 = vsel %vm337, %v2678, 0
      %v2751 = vsel %vm337, %v2679, 0
      %v2754 = vsel %vm337, %v2680, 0
      %v2757 = vsel %vm337, %v2681, 0
      %v2760 = vsel %vm337, %v2682, 0
      %v2763 = vsel %vm337, %v2683, 0
      %v2766 = vsel %vm337, %v2684, 0
      %v2769 = vsel %vm337, %v2685, 0
      %v2772 = vsel %vm337, %v2686, 0
      %v2775 = vsel %vm337, %v2687, 0
      %v2778 = vsel %vm337, %v2688, 0
      %v2781 = vsel %vm337, %v2689, 0
      %v2784 = vsel %vm337, %v2690, 0
      %v2787 = vsel %vm337, %v2691, 0
      %2789 = vmatprep.subr.bf16.mxu0 %v2726
      %2790 = vmatpush1.bf16.msra.mxu0 %v2725
      %2791 = vmatprep.subr.bf16.mxu0 %v2728
      %2792 = vmatpush1.bf16.msra.mxu0 %v2727
      %2793 = vmatprep.subr.bf16.mxu0 %v2730
      %2794 = vmatpush1.bf16.msra.mxu0 %v2729
      %2795 = vmatprep.subr.bf16.mxu0 %v2732
      %2796 = vmatpush1.bf16.msra.mxu0 %v2731
      %2797 = vmatprep.subr.bf16.mxu0 0
      %2798 = vmatpush1.bf16.msra.mxu0 0
      %2799 = vmatprep.subr.bf16.mxu0 0
      %2800 = vmatpush1.bf16.msra.mxu0 0
      %2801 = vmatprep.subr.bf16.mxu0 0
      %2802 = vmatpush1.bf16.msra.mxu0 0
      %2803 = vmatprep.subr.bf16.mxu0 0
      %2804 = vmatpush1.bf16.msra.mxu0 0
      %2805 = vmatprep.subr.bf16.mxu0 0
      %2806 = vmatpush1.bf16.msra.mxu0 0
      %2807 = vmatprep.subr.bf16.mxu0 0
      %2808 = vmatpush1.bf16.msra.mxu0 0
      %2809 = vmatprep.subr.bf16.mxu0 0
      %2810 = vmatpush1.bf16.msra.mxu0 0
      %2811 = vmatprep.subr.bf16.mxu0 0
      %2812 = vmatpush1.bf16.msra.mxu0 0
      %2813 = vmatprep.subr.bf16.mxu0 0
      %2814 = vmatpush1.bf16.msra.mxu0 0
      %2815 = vmatprep.subr.bf16.mxu0 0
      %2816 = vmatpush1.bf16.msra.mxu0 0
      %2817 = vmatprep.subr.bf16.mxu0 0
      %2818 = vmatpush1.bf16.msra.mxu0 0
      %2819 = vmatprep.subr.bf16.mxu0 0
      %2820 = vmatpush1.bf16.msra.mxu0 0
      %2821 = vmatprep.mubr.bf16.mxu0 0
      %2822 = vmatmul.mubr.bf16.gmra.mrb[0].mxu0 %v2742
      %v2823 = vpop.f32.mrb[0].mxu0
      %v2824 = vadd.f32 0.0, %v2823
      %v2825 = vpop.f32.mrb[0].mxu0
      %v2826 = vadd.f32 0.0, %v2825
      %v2827 = vpop.f32.mrb[0].mxu0
      %v2828 = vadd.f32 0.0, %v2827
      %v2829 = vpop.f32.mrb[0].mxu0
      %v2830 = vadd.f32 0.0, %v2829
      %2831 = vmatprep.mubr.bf16.mxu0 0
      %2832 = vmatmul.mubr.bf16.gmra.mrb[0].mxu0 %v2745
      %v2833 = vpop.f32.mrb[0].mxu0
      %v2834 = vadd.f32 0.0, %v2833
      %v2835 = vpop.f32.mrb[0].mxu0
      %v2836 = vadd.f32 0.0, %v2835
      %v2837 = vpop.f32.mrb[0].mxu0
      %v2838 = vadd.f32 0.0, %v2837
      %v2839 = vpop.f32.mrb[0].mxu0
      %v2840 = vadd.f32 0.0, %v2839
      %2841 = vmatprep.mubr.bf16.mxu0 0
      %2842 = vmatmul.mubr.bf16.gmra.mrb[0].mxu0 %v2748
      %v2843 = vpop.f32.mrb[0].mxu0
      %v2844 = vadd.f32 0.0, %v2843
      %v2845 = vpop.f32.mrb[0].mxu0
      %v2846 = vadd.f32 0.0, %v2845
      %v2847 = vpop.f32.mrb[0].mxu0
      %v2848 = vadd.f32 0.0, %v2847
      %v2849 = vpop.f32.mrb[0].mxu0
      %v2850 = vadd.f32 0.0, %v2849
      %2851 = vmatprep.mubr.bf16.mxu0 0
      %2852 = vmatmul.mubr.bf16.gmra.mrb[0].mxu0 %v2751
      %v2853 = vpop.f32.mrb[0].mxu0
      %v2854 = vadd.f32 0.0, %v2853
      %v2855 = vpop.f32.mrb[0].mxu0
      %v2856 = vadd.f32 0.0, %v2855
      %v2857 = vpop.f32.mrb[0].mxu0
      %v2858 = vadd.f32 0.0, %v2857
      %v2859 = vpop.f32.mrb[0].mxu0
      %v2860 = vadd.f32 0.0, %v2859
      %2861 = vmatprep.mubr.bf16.mxu0 0
      %2862 = vmatmul.mubr.bf16.gmra.mrb[0].mxu0 %v2754
      %v2863 = vpop.f32.mrb[0].mxu0
      %v2864 = vadd.f32 0.0, %v2863
      %v2865 = vpop.f32.mrb[0].mxu0
      %v2866 = vadd.f32 0.0, %v2865
      %v2867 = vpop.f32.mrb[0].mxu0
      %v2868 = vadd.f32 0.0, %v2867
      %v2869 = vpop.f32.mrb[0].mxu0
      %v2870 = vadd.f32 0.0, %v2869
      %2871 = vmatprep.mubr.bf16.mxu0 0
      %2872 = vmatmul.mubr.bf16.gmra.mrb[0].mxu0 %v2757
      %v2873 = vpop.f32.mrb[0].mxu0
      %v2874 = vadd.f32 0.0, %v2873
      %v2875 = vpop.f32.mrb[0].mxu0
      %v2876 = vadd.f32 0.0, %v2875
      %v2877 = vpop.f32.mrb[0].mxu0
      %v2878 = vadd.f32 0.0, %v2877
      %v2879 = vpop.f32.mrb[0].mxu0
      %v2880 = vadd.f32 0.0, %v2879
      %2881 = vmatprep.mubr.bf16.mxu0 0
      %2882 = vmatmul.mubr.bf16.gmra.mrb[0].mxu0 %v2760
      %v2883 = vpop.f32.mrb[0].mxu0
      %v2884 = vadd.f32 0.0, %v2883
      %v2885 = vpop.f32.mrb[0].mxu0
      %v2886 = vadd.f32 0.0, %v2885
      %v2887 = vpop.f32.mrb[0].mxu0
      %v2888 = vadd.f32 0.0, %v2887
      %v2889 = vpop.f32.mrb[0].mxu0
      %v2890 = vadd.f32 0.0, %v2889
      %2891 = vmatprep.mubr.bf16.mxu0 0
      %2892 = vmatmul.mubr.bf16.gmra.mrb[0].mxu0 %v2763
      %v2893 = vpop.f32.mrb[0].mxu0
      %v2894 = vadd.f32 0.0, %v2893
      %v2895 = vpop.f32.mrb[0].mxu0
      %v2896 = vadd.f32 0.0, %v2895
      %v2897 = vpop.f32.mrb[0].mxu0
      %v2898 = vadd.f32 0.0, %v2897
      %v2899 = vpop.f32.mrb[0].mxu0
      %v2900 = vadd.f32 0.0, %v2899
      %2901 = vmatprep.mubr.bf16.mxu0 0
      %2902 = vmatmul.mubr.bf16.gmra.mrb[0].mxu0 %v2766
      %v2903 = vpop.f32.mrb[0].mxu0
      %v2904 = vadd.f32 0.0, %v2903
      %v2905 = vpop.f32.mrb[0].mxu0
      %v2906 = vadd.f32 0.0, %v2905
      %v2907 = vpop.f32.mrb[0].mxu0
      %v2908 = vadd.f32 0.0, %v2907
      %v2909 = vpop.f32.mrb[0].mxu0
      %v2910 = vadd.f32 0.0, %v2909
      %2911 = vmatprep.mubr.bf16.mxu0 0
      %2912 = vmatmul.mubr.bf16.gmra.mrb[0].mxu0 %v2769
      %v2913 = vpop.f32.mrb[0].mxu0
      %v2914 = vadd.f32 0.0, %v2913
      %v2915 = vpop.f32.mrb[0].mxu0
      %v2916 = vadd.f32 0.0, %v2915
      %v2917 = vpop.f32.mrb[0].mxu0
      %v2918 = vadd.f32 0.0, %v2917
      %v2919 = vpop.f32.mrb[0].mxu0
      %v2920 = vadd.f32 0.0, %v2919
      %2921 = vmatprep.mubr.bf16.mxu0 0
      %2922 = vmatmul.mubr.bf16.gmra.mrb[0].mxu0 %v2772
      %v2923 = vpop.f32.mrb[0].mxu0
      %v2924 = vadd.f32 0.0, %v2923
      %v2925 = vpop.f32.mrb[0].mxu0
      %v2926 = vadd.f32 0.0, %v2925
      %v2927 = vpop.f32.mrb[0].mxu0
      %v2928 = vadd.f32 0.0, %v2927
      %v2929 = vpop.f32.mrb[0].mxu0
      %v2930 = vadd.f32 0.0, %v2929
      %2931 = vmatprep.mubr.bf16.mxu0 0
      %2932 = vmatmul.mubr.bf16.gmra.mrb[0].mxu0 %v2775
      %v2933 = vpop.f32.mrb[0].mxu0
      %v2934 = vadd.f32 0.0, %v2933
      %v2935 = vpop.f32.mrb[0].mxu0
      %v2936 = vadd.f32 0.0, %v2935
      %v2937 = vpop.f32.mrb[0].mxu0
      %v2938 = vadd.f32 0.0, %v2937
      %v2939 = vpop.f32.mrb[0].mxu0
      %v2940 = vadd.f32 0.0, %v2939
      %2941 = vmatprep.mubr.bf16.mxu0 0
      %2942 = vmatmul.mubr.bf16.gmra.mrb[0].mxu0 %v2778
      %v2943 = vpop.f32.mrb[0].mxu0
      %v2944 = vadd.f32 0.0, %v2943
      %v2945 = vpop.f32.mrb[0].mxu0
      %v2946 = vadd.f32 0.0, %v2945
      %v2947 = vpop.f32.mrb[0].mxu0
      %v2948 = vadd.f32 0.0, %v2947
      %v2949 = vpop.f32.mrb[0].mxu0
      %v2950 = vadd.f32 0.0, %v2949
      %2951 = vmatprep.mubr.bf16.mxu0 0
      %2952 = vmatmul.mubr.bf16.gmra.mrb[0].mxu0 %v2781
      %v2953 = vpop.f32.mrb[0].mxu0
      %v2954 = vadd.f32 0.0, %v2953
      %v2955 = vpop.f32.mrb[0].mxu0
      %v2956 = vadd.f32 0.0, %v2955
      %v2957 = vpop.f32.mrb[0].mxu0
      %v2958 = vadd.f32 0.0, %v2957
      %v2959 = vpop.f32.mrb[0].mxu0
      %v2960 = vadd.f32 0.0, %v2959
      %2961 = vmatprep.mubr.bf16.mxu0 0
      %2962 = vmatmul.mubr.bf16.gmra.mrb[0].mxu0 %v2784
      %v2963 = vpop.f32.mrb[0].mxu0
      %v2964 = vadd.f32 0.0, %v2963
      %v2965 = vpop.f32.mrb[0].mxu0
      %v2966 = vadd.f32 0.0, %v2965
      %v2967 = vpop.f32.mrb[0].mxu0
      %v2968 = vadd.f32 0.0, %v2967
      %v2969 = vpop.f32.mrb[0].mxu0
      %v2970 = vadd.f32 0.0, %v2969
      %2971 = vmatprep.mubr.bf16.mxu0 0
      %2972 = vmatmul.mubr.bf16.gmra.mrb[0].mxu0 %v2787
      %v2973 = vpop.f32.mrb[0].mxu0
      %v2974 = vadd.f32 0.0, %v2973
      %v2975 = vpop.f32.mrb[0].mxu0
      %v2976 = vadd.f32 0.0, %v2975
      %v2977 = vpop.f32.mrb[0].mxu0
      %v2978 = vpop.f32.mrb[0].mxu0
      %2979 = vdwg.mxu0
      %v2980 = vadd.f32 %v2520, %v2824
      %v2981 = vadd.f32 %v2522, %v2826
      %v2982 = vadd.f32 %v2524, %v2828
      %v2983 = vadd.f32 %v2526, %v2830
      %v2984 = vadd.f32 %v2530, %v2834
      %v2985 = vadd.f32 %v2532, %v2836
      %v2986 = vadd.f32 %v2534, %v2838
      %v2987 = vadd.f32 %v2536, %v2840
      %v2988 = vadd.f32 %v2540, %v2844
      %v2989 = vadd.f32 %v2542, %v2846
      %v2990 = vadd.f32 %v2544, %v2848
      %v2991 = vadd.f32 %v2546, %v2850
      %v2992 = vadd.f32 %v2550, %v2854
      %v2993 = vadd.f32 %v2552, %v2856
      %v2994 = vadd.f32 %v2554, %v2858
      %v2995 = vadd.f32 %v2556, %v2860
      %v2996 = vadd.f32 %v2560, %v2864
      %v2997 = vadd.f32 %v2562, %v2866
      %v2998 = vadd.f32 %v2564, %v2868
      %v2999 = vadd.f32 %v2566, %v2870
      %v3000 = vadd.f32 %v2570, %v2874
      %v3001 = vadd.f32 %v2572, %v2876
      %v3002 = vadd.f32 %v2574, %v2878
      %v3003 = vadd.f32 %v2576, %v2880
      %v3004 = vadd.f32 %v2580, %v2884
      %v3005 = vadd.f32 %v2582, %v2886
      %v3006 = vadd.f32 %v2584, %v2888
      %v3007 = vadd.f32 %v2586, %v2890
      %v3008 = vadd.f32 %v2590, %v2894
      %v3009 = vadd.f32 %v2592, %v2896
      %v3010 = vadd.f32 %v2594, %v2898
      %v3011 = vadd.f32 %v2596, %v2900
      %v3012 = vadd.f32 %v2600, %v2904
      %v3013 = vadd.f32 %v2602, %v2906
      %v3014 = vadd.f32 %v2604, %v2908
      %v3015 = vadd.f32 %v2606, %v2910
      %v3016 = vadd.f32 %v2610, %v2914
      %v3017 = vadd.f32 %v2612, %v2916
      %v3018 = vadd.f32 %v2614, %v2918
      %v3019 = vadd.f32 %v2616, %v2920
      %v3020 = vadd.f32 %v2620, %v2924
      %v3021 = vadd.f32 %v2622, %v2926
      %v3022 = vadd.f32 %v2624, %v2928
      %v3023 = vadd.f32 %v2626, %v2930
      %v3024 = vadd.f32 %v2630, %v2934
      %v3025 = vadd.f32 %v2632, %v2936
      %v3026 = vadd.f32 %v2634, %v2938
      %v3027 = vadd.f32 %v2636, %v2940
      %v3028 = vadd.f32 %v2640, %v2944
      %v3029 = vadd.f32 %v2642, %v2946
      %v3030 = vadd.f32 %v2644, %v2948
      %v3031 = vadd.f32 %v2646, %v2950
      %v3032 = vadd.f32 %v2650, %v2954
      %v3033 = vadd.f32 %v2652, %v2956
      %v3034 = vadd.f32 %v2654, %v2958
      %v3035 = vadd.f32 %v2656, %v2960
      %v3036 = vadd.f32 %v2660, %v2964
      %v3037 = vadd.f32 %v2662, %v2966
      %v3038 = vadd.f32 %v2664, %v2968
      %v3039 = vadd.f32 %v2666, %v2970
      %v3040 = vadd.f32 %v2670, %v2974
      %v3041 = vadd.f32 %v2672, %v2976
      %v3042 = vld [vmem:[%s6] sm:$0x1]
      %v3044 = vlaneseq
      %v3045 = vshrl.u32 %v3044, 7
      %v3046 = vsub.s32 0, %v3045
      %v3047 = vrot.slane %v3042, %v3046
      %v3049 = vadd.f32 %v3047, %v2980
      %v3050 = vadd.f32 %v3047, %v2982
      %v3051 = vadd.f32 %v3047, %v2984
      %v3052 = vadd.f32 %v3047, %v2986
      %v3053 = vadd.f32 %v3047, %v2988
      %v3054 = vadd.f32 %v3047, %v2990
      %v3055 = vadd.f32 %v3047, %v2992
      %v3056 = vadd.f32 %v3047, %v2994
      %v3057 = vadd.f32 %v3047, %v2996
      %v3058 = vadd.f32 %v3047, %v2998
      %v3059 = vadd.f32 %v3047, %v3000
      %v3060 = vadd.f32 %v3047, %v3002
      %v3061 = vadd.f32 %v3047, %v3004
      %v3062 = vadd.f32 %v3047, %v3006
      %v3063 = vadd.f32 %v3047, %v3008
      %v3064 = vadd.f32 %v3047, %v3010
      %v3065 = vadd.f32 %v3047, %v3012
      %v3066 = vadd.f32 %v3047, %v3014
      %v3067 = vadd.f32 %v3047, %v3016
      %v3068 = vadd.f32 %v3047, %v3018
      %v3069 = vadd.f32 %v3047, %v3020
      %v3070 = vadd.f32 %v3047, %v3022
      %v3071 = vadd.f32 %v3047, %v3024
      %v3072 = vadd.f32 %v3047, %v3026
      %v3073 = vadd.f32 %v3047, %v3028
      %v3074 = vadd.f32 %v3047, %v3030
      %v3075 = vadd.f32 %v3047, %v3032
      %v3076 = vadd.f32 %v3047, %v3034
      %v3077 = vadd.f32 %v3047, %v3036
      %v3078 = vadd.f32 %v3047, %v3038
      %v3110 = vrot.slane %v2980, 1
      %v3111 = vrot.slane %v2982, 1
      %v3112 = vsel %vm1734, %v3110, %v3111
      %v3113 = vrot.slane %v2984, 1
      %v3114 = vsel %vm1734, %v3111, %v3113
      %v3115 = vrot.slane %v2986, 1
      %v3116 = vsel %vm1734, %v3113, %v3115
      %v3117 = vrot.slane %v2988, 1
      %v3118 = vsel %vm1734, %v3115, %v3117
      %v3119 = vrot.slane %v2990, 1
      %v3120 = vsel %vm1734, %v3117, %v3119
      %v3121 = vrot.slane %v2992, 1
      %v3122 = vsel %vm1734, %v3119, %v3121
      %v3123 = vrot.slane %v2994, 1
      %v3124 = vsel %vm1734, %v3121, %v3123
      %v3125 = vrot.slane %v2996, 1
      %v3126 = vsel %vm1734, %v3123, %v3125
      %v3127 = vrot.slane %v2998, 1
      %v3128 = vsel %vm1734, %v3125, %v3127
      %v3129 = vrot.slane %v3000, 1
      %v3130 = vsel %vm1734, %v3127, %v3129
      %v3131 = vrot.slane %v3002, 1
      %v3132 = vsel %vm1734, %v3129, %v3131
      %v3133 = vrot.slane %v3004, 1
      %v3134 = vsel %vm1734, %v3131, %v3133
      %v3135 = vrot.slane %v3006, 1
      %v3136 = vsel %vm1734, %v3133, %v3135
      %v3137 = vrot.slane %v3008, 1
      %v3138 = vsel %vm1734, %v3135, %v3137
      %v3139 = vrot.slane %v3010, 1
      %v3140 = vsel %vm1734, %v3137, %v3139
      %v3141 = vrot.slane %v3012, 1
      %v3142 = vsel %vm1734, %v3139, %v3141
      %v3143 = vrot.slane %v3014, 1
      %v3144 = vsel %vm1734, %v3141, %v3143
      %v3145 = vrot.slane %v3016, 1
      %v3146 = vsel %vm1734, %v3143, %v3145
      %v3147 = vrot.slane %v3018, 1
      %v3148 = vsel %vm1734, %v3145, %v3147
      %v3149 = vrot.slane %v3020, 1
      %v3150 = vsel %vm1734, %v3147, %v3149
      %v3151 = vrot.slane %v3022, 1
      %v3152 = vsel %vm1734, %v3149, %v3151
      %v3153 = vrot.slane %v3024, 1
      %v3154 = vsel %vm1734, %v3151, %v3153
      %v3155 = vrot.slane %v3026, 1
      %v3156 = vsel %vm1734, %v3153, %v3155
      %v3157 = vrot.slane %v3028, 1
      %v3158 = vsel %vm1734, %v3155, %v3157
      %v3159 = vrot.slane %v3030, 1
      %v3160 = vsel %vm1734, %v3157, %v3159
      %v3161 = vrot.slane %v3032, 1
      %v3162 = vsel %vm1734, %v3159, %v3161
      %v3163 = vrot.slane %v3034, 1
      %v3164 = vsel %vm1734, %v3161, %v3163
      %v3165 = vrot.slane %v3036, 1
      %v3166 = vsel %vm1734, %v3163, %v3165
      %v3167 = vrot.slane %v3038, 1
      %v3168 = vsel %vm1734, %v3165, %v3167
      %v3169 = vrot.slane %v3040, 1
      %v3170 = vsel %vm1734, %v3167, %v3169
      %3171 = vrot.lane.b32.xlu0 %v3112, 64
      %v3172 = vpop.permute.xlu0 %3171
      %3173 = vrot.lane.b32.xlu0 %v3114, 64
      %v3174 = vpop.permute.xlu0 %3173
      %3175 = vrot.lane.b32.xlu0 %v3116, 64
      %v3176 = vpop.permute.xlu0 %3175
      %3177 = vrot.lane.b32.xlu0 %v3118, 64
      %v3178 = vpop.permute.xlu0 %3177
      %3179 = vrot.lane.b32.xlu0 %v3120, 64
      %v3180 = vpop.permute.xlu0 %3179
      %3181 = vrot.lane.b32.xlu0 %v3122, 64
      %v3182 = vpop.permute.xlu0 %3181
      %3183 = vrot.lane.b32.xlu0 %v3124, 64
      %v3184 = vpop.permute.xlu0 %3183
      %3185 = vrot.lane.b32.xlu0 %v3126, 64
      %v3186 = vpop.permute.xlu0 %3185
      %3187 = vrot.lane.b32.xlu0 %v3128, 64
      %v3188 = vpop.permute.xlu0 %3187
      %3189 = vrot.lane.b32.xlu0 %v3130, 64
      %v3190 = vpop.permute.xlu0 %3189
      %3191 = vrot.lane.b32.xlu0 %v3132, 64
      %v3192 = vpop.permute.xlu0 %3191
      %3193 = vrot.lane.b32.xlu0 %v3134, 64
      %v3194 = vpop.permute.xlu0 %3193
      %3195 = vrot.lane.b32.xlu0 %v3136, 64
      %v3196 = vpop.permute.xlu0 %3195
      %3197 = vrot.lane.b32.xlu0 %v3138, 64
      %v3198 = vpop.permute.xlu0 %3197
      %3199 = vrot.lane.b32.xlu0 %v3140, 64
      %v3200 = vpop.permute.xlu0 %3199
      %3201 = vrot.lane.b32.xlu0 %v3142, 64
      %v3202 = vpop.permute.xlu0 %3201
      %3203 = vrot.lane.b32.xlu0 %v3144, 64
      %v3204 = vpop.permute.xlu0 %3203
      %3205 = vrot.lane.b32.xlu0 %v3146, 64
      %v3206 = vpop.permute.xlu0 %3205
      %3207 = vrot.lane.b32.xlu0 %v3148, 64
      %v3208 = vpop.permute.xlu0 %3207
      %3209 = vrot.lane.b32.xlu0 %v3150, 64
      %v3210 = vpop.permute.xlu0 %3209
      %3211 = vrot.lane.b32.xlu0 %v3152, 64
      %v3212 = vpop.permute.xlu0 %3211
      %3213 = vrot.lane.b32.xlu0 %v3154, 64
      %v3214 = vpop.permute.xlu0 %3213
      %3215 = vrot.lane.b32.xlu0 %v3156, 64
      %v3216 = vpop.permute.xlu0 %3215
      %3217 = vrot.lane.b32.xlu0 %v3158, 64
      %v3218 = vpop.permute.xlu0 %3217
      %3219 = vrot.lane.b32.xlu0 %v3160, 64
      %v3220 = vpop.permute.xlu0 %3219
      %3221 = vrot.lane.b32.xlu0 %v3162, 64
      %v3222 = vpop.permute.xlu0 %3221
      %3223 = vrot.lane.b32.xlu0 %v3164, 64
      %v3224 = vpop.permute.xlu0 %3223
      %3225 = vrot.lane.b32.xlu0 %v3166, 64
      %v3226 = vpop.permute.xlu0 %3225
      %3227 = vrot.lane.b32.xlu0 %v3168, 64
      %v3228 = vpop.permute.xlu0 %3227
      %3229 = vrot.lane.b32.xlu0 %v3170, 64
      %v3230 = vpop.permute.xlu0 %3229
      %v3261 = vadd.f32 %v3049, %v3172
      %v3262 = vadd.f32 %v3050, %v3174
      %v3263 = vadd.f32 %v3051, %v3176
      %v3264 = vadd.f32 %v3052, %v3178
      %v3265 = vadd.f32 %v3053, %v3180
      %v3266 = vadd.f32 %v3054, %v3182
      %v3267 = vadd.f32 %v3055, %v3184
      %v3268 = vadd.f32 %v3056, %v3186
      %v3269 = vadd.f32 %v3057, %v3188
      %v3270 = vadd.f32 %v3058, %v3190
      %v3271 = vadd.f32 %v3059, %v3192
      %v3272 = vadd.f32 %v3060, %v3194
      %v3273 = vadd.f32 %v3061, %v3196
      %v3274 = vadd.f32 %v3062, %v3198
      %v3275 = vadd.f32 %v3063, %v3200
      %v3276 = vadd.f32 %v3064, %v3202
      %v3277 = vadd.f32 %v3065, %v3204
      %v3278 = vadd.f32 %v3066, %v3206
      %v3279 = vadd.f32 %v3067, %v3208
      %v3280 = vadd.f32 %v3068, %v3210
      %v3281 = vadd.f32 %v3069, %v3212
      %v3282 = vadd.f32 %v3070, %v3214
      %v3283 = vadd.f32 %v3071, %v3216
      %v3284 = vadd.f32 %v3072, %v3218
      %v3285 = vadd.f32 %v3073, %v3220
      %v3286 = vadd.f32 %v3074, %v3222
      %v3287 = vadd.f32 %v3075, %v3224
      %v3288 = vadd.f32 %v3076, %v3226
      %v3289 = vadd.f32 %v3077, %v3228
      %v3290 = vadd.f32 %v3078, %v3230
      %v3322 = vrot.slane %v2981, 2
      %v3323 = vrot.slane %v2983, 2
      %v3324 = vsel %vm1947, %v3322, %v3323
      %v3325 = vrot.slane %v2985, 2
      %v3326 = vsel %vm1947, %v3323, %v3325
      %v3327 = vrot.slane %v2987, 2
      %v3328 = vsel %vm1947, %v3325, %v3327
      %v3329 = vrot.slane %v2989, 2
      %v3330 = vsel %vm1947, %v3327, %v3329
      %v3331 = vrot.slane %v2991, 2
      %v3332 = vsel %vm1947, %v3329, %v3331
      %v3333 = vrot.slane %v2993, 2
      %v3334 = vsel %vm1947, %v3331, %v3333
      %v3335 = vrot.slane %v2995, 2
      %v3336 = vsel %vm1947, %v3333, %v3335
      %v3337 = vrot.slane %v2997, 2
      %v3338 = vsel %vm1947, %v3335, %v3337
      %v3339 = vrot.slane %v2999, 2
      %v3340 = vsel %vm1947, %v3337, %v3339
      %v3341 = vrot.slane %v3001, 2
      %v3342 = vsel %vm1947, %v3339, %v3341
      %v3343 = vrot.slane %v3003, 2
      %v3344 = vsel %vm1947, %v3341, %v3343
      %v3345 = vrot.slane %v3005, 2
      %v3346 = vsel %vm1947, %v3343, %v3345
      %v3347 = vrot.slane %v3007, 2
      %v3348 = vsel %vm1947, %v3345, %v3347
      %v3349 = vrot.slane %v3009, 2
      %v3350 = vsel %vm1947, %v3347, %v3349
      %v3351 = vrot.slane %v3011, 2
      %v3352 = vsel %vm1947, %v3349, %v3351
      %v3353 = vrot.slane %v3013, 2
      %v3354 = vsel %vm1947, %v3351, %v3353
      %v3355 = vrot.slane %v3015, 2
      %v3356 = vsel %vm1947, %v3353, %v3355
      %v3357 = vrot.slane %v3017, 2
      %v3358 = vsel %vm1947, %v3355, %v3357
      %v3359 = vrot.slane %v3019, 2
      %v3360 = vsel %vm1947, %v3357, %v3359
      %v3361 = vrot.slane %v3021, 2
      %v3362 = vsel %vm1947, %v3359, %v3361
      %v3363 = vrot.slane %v3023, 2
      %v3364 = vsel %vm1947, %v3361, %v3363
      %v3365 = vrot.slane %v3025, 2
      %v3366 = vsel %vm1947, %v3363, %v3365
      %v3367 = vrot.slane %v3027, 2
      %v3368 = vsel %vm1947, %v3365, %v3367
      %v3369 = vrot.slane %v3029, 2
      %v3370 = vsel %vm1947, %v3367, %v3369
      %v3371 = vrot.slane %v3031, 2
      %v3372 = vsel %vm1947, %v3369, %v3371
      %v3373 = vrot.slane %v3033, 2
      %v3374 = vsel %vm1947, %v3371, %v3373
      %v3375 = vrot.slane %v3035, 2
      %v3376 = vsel %vm1947, %v3373, %v3375
      %v3377 = vrot.slane %v3037, 2
      %v3378 = vsel %vm1947, %v3375, %v3377
      %v3379 = vrot.slane %v3039, 2
      %v3380 = vsel %vm1947, %v3377, %v3379
      %v3381 = vrot.slane %v3041, 2
      %v3382 = vsel %vm1947, %v3379, %v3381
      %v3413 = vadd.f32 %v3261, %v3324
      %v3414 = vadd.f32 %v3262, %v3326
      %v3415 = vadd.f32 %v3263, %v3328
      %v3416 = vadd.f32 %v3264, %v3330
      %v3417 = vadd.f32 %v3265, %v3332
      %v3418 = vadd.f32 %v3266, %v3334
      %v3419 = vadd.f32 %v3267, %v3336
      %v3420 = vadd.f32 %v3268, %v3338
      %v3421 = vadd.f32 %v3269, %v3340
      %v3422 = vadd.f32 %v3270, %v3342
      %v3423 = vadd.f32 %v3271, %v3344
      %v3424 = vadd.f32 %v3272, %v3346
      %v3425 = vadd.f32 %v3273, %v3348
      %v3426 = vadd.f32 %v3274, %v3350
      %v3427 = vadd.f32 %v3275, %v3352
      %v3428 = vadd.f32 %v3276, %v3354
      %v3429 = vadd.f32 %v3277, %v3356
      %v3430 = vadd.f32 %v3278, %v3358
      %v3431 = vadd.f32 %v3279, %v3360
      %v3432 = vadd.f32 %v3280, %v3362
      %v3433 = vadd.f32 %v3281, %v3364
      %v3434 = vadd.f32 %v3282, %v3366
      %v3435 = vadd.f32 %v3283, %v3368
      %v3436 = vadd.f32 %v3284, %v3370
      %v3437 = vadd.f32 %v3285, %v3372
      %v3438 = vadd.f32 %v3286, %v3374
      %v3439 = vadd.f32 %v3287, %v3376
      %v3440 = vadd.f32 %v3288, %v3378
      %v3441 = vadd.f32 %v3289, %v3380
      %v3442 = vadd.f32 %v3290, %v3382
      %v3443 = vmax.f32 %v3413, 0.0
      %v3444 = vmax.f32 %v3414, 0.0
      %v3445 = vmax.f32 %v3415, 0.0
      %v3446 = vmax.f32 %v3416, 0.0
      %v3447 = vmax.f32 %v3417, 0.0
      %v3448 = vmax.f32 %v3418, 0.0
      %v3449 = vmax.f32 %v3419, 0.0
      %v3450 = vmax.f32 %v3420, 0.0
      %v3451 = vmax.f32 %v3421, 0.0
      %v3452 = vmax.f32 %v3422, 0.0
      %v3453 = vmax.f32 %v3423, 0.0
      %v3454 = vmax.f32 %v3424, 0.0
      %v3455 = vmax.f32 %v3425, 0.0
      %v3456 = vmax.f32 %v3426, 0.0
      %v3457 = vmax.f32 %v3427, 0.0
      %v3458 = vmax.f32 %v3428, 0.0
      %v3459 = vmax.f32 %v3429, 0.0
      %v3460 = vmax.f32 %v3430, 0.0
      %v3461 = vmax.f32 %v3431, 0.0
      %v3462 = vmax.f32 %v3432, 0.0
      %v3463 = vmax.f32 %v3433, 0.0
      %v3464 = vmax.f32 %v3434, 0.0
      %v3465 = vmax.f32 %v3435, 0.0
      %v3466 = vmax.f32 %v3436, 0.0
      %v3467 = vmax.f32 %v3437, 0.0
      %v3468 = vmax.f32 %v3438, 0.0
      %v3469 = vmax.f32 %v3439, 0.0
      %v3470 = vmax.f32 %v3440, 0.0
      %v3471 = vmax.f32 %v3441, 0.0
      %v3472 = vmax.f32 %v3442, 0.0
      %v3473 = vpack.c.bf16 %v3444, %v3443
      %v3474 = vpack.c.bf16 %v3446, %v3445
      %v3475 = vpack.c.bf16 %v3448, %v3447
      %v3476 = vpack.c.bf16 %v3450, %v3449
      %v3477 = vpack.c.bf16 %v3452, %v3451
      %v3478 = vpack.c.bf16 %v3454, %v3453
      %v3479 = vpack.c.bf16 %v3456, %v3455
      %v3480 = vpack.c.bf16 %v3458, %v3457
      %v3481 = vpack.c.bf16 %v3460, %v3459
      %v3482 = vpack.c.bf16 %v3462, %v3461
      %v3483 = vpack.c.bf16 %v3464, %v3463
      %v3484 = vpack.c.bf16 %v3466, %v3465
      %v3485 = vpack.c.bf16 %v3468, %v3467
      %v3486 = vpack.c.bf16 %v3470, %v3469
      %v3487 = vpack.c.bf16 %v3472, %v3471
      %3488 = vst.msk [vmem:[#allocation2] sm:$0xff] %vm337, %v3473
      %3489 = vst.msk [vmem:[#allocation2 + $0x8] sm:$0xff] %vm337, %v3474
      %3490 = vst.msk [vmem:[#allocation2 + $0x10] sm:$0xff] %vm337, %v3475
      %3491 = vst.msk [vmem:[#allocation2 + $0x18] sm:$0xff] %vm337, %v3476
      %3492 = vst.msk [vmem:[#allocation2 + $0x20] sm:$0xff] %vm337, %v3477
      %3493 = vst.msk [vmem:[#allocation2 + $0x28] sm:$0xff] %vm337, %v3478
      %3494 = vst.msk [vmem:[#allocation2 + $0x30] sm:$0xff] %vm337, %v3479
      %3495 = vst.msk [vmem:[#allocation2 + $0x38] sm:$0xff] %vm337, %v3480
      %3496 = vst.msk [vmem:[#allocation2 + $0x40] sm:$0xff] %vm337, %v3481
      %3497 = vst.msk [vmem:[#allocation2 + $0x48] sm:$0xff] %vm337, %v3482
      %3498 = vst.msk [vmem:[#allocation2 + $0x50] sm:$0xff] %vm337, %v3483
      %3499 = vst.msk [vmem:[#allocation2 + $0x58] sm:$0xff] %vm337, %v3484
      %3500 = vst.msk [vmem:[#allocation2 + $0x60] sm:$0xff] %vm337, %v3485
      %3501 = vst.msk [vmem:[#allocation2 + $0x68] sm:$0xff] %vm337, %v3486
      %3502 = vst.msk [vmem:[#allocation2 + $0x70] sm:$0xff] %vm337, %v3487
      %v3503 = vld [vmem:[#allocation2] sm:$0xff]
      %v3504 = vld [vmem:[#allocation2 + $0x8] sm:$0xff]
      %v3505 = vld [vmem:[#allocation2 + $0x10] sm:$0xff]
      %v3506 = vld [vmem:[#allocation2 + $0x18] sm:$0xff]
      %v3507 = vld [vmem:[#allocation2 + $0x20] sm:$0xff]
      %v3508 = vld [vmem:[#allocation2 + $0x28] sm:$0xff]
      %v3509 = vld [vmem:[#allocation2 + $0x30] sm:$0xff]
      %v3510 = vld [vmem:[#allocation2 + $0x38] sm:$0xff]
      %v3511 = vld [vmem:[#allocation2 + $0x40] sm:$0xff]
      %v3512 = vld [vmem:[%s7] sm:$0xff]
      %v3513 = vld [vmem:[%s7 + $0x8] sm:$0xff]
      %v3514 = vld [vmem:[%s7 + $0x10] sm:$0xff]
      %v3515 = vld [vmem:[%s7 + $0x18] sm:$0xff]
      %v3516 = vld [vmem:[%s7 + $0x20] sm:$0xff]
      %v3517 = vld [vmem:[%s7 + $0x28] sm:$0xff]
      %v3518 = vld [vmem:[%s7 + $0x30] sm:$0xff]
      %v3519 = vld [vmem:[%s7 + $0x38] sm:$0xff]
      %v3520 = vld [vmem:[#allocation2 + $0x48] sm:$0xff]
      %s3521 = scalar_lea.vmem %s7, 64
      %v3522 = vld [vmem:[%s3521] sm:$0xff]
      %v3523 = vld [vmem:[%s3521 + $0x8] sm:$0xff]
      %v3524 = vld [vmem:[%s3521 + $0x10] sm:$0xff]
      %v3525 = vld [vmem:[%s3521 + $0x18] sm:$0xff]
      %v3526 = vld [vmem:[%s3521 + $0x20] sm:$0xff]
      %v3527 = vld [vmem:[%s3521 + $0x28] sm:$0xff]
      %v3528 = vld [vmem:[%s3521 + $0x30] sm:$0xff]
      %v3529 = vld [vmem:[%s3521 + $0x38] sm:$0xff]
      %v3538 = vunpack.c.l.b16 %v3522
      %v3539 = vunpack.c.h.b16 %v3522
      %v3540 = vunpack.c.l.b16 %v3523
      %v3541 = vunpack.c.h.b16 %v3523
      %v3542 = vunpack.c.l.b16 %v3524
      %v3543 = vunpack.c.h.b16 %v3524
      %v3544 = vunpack.c.l.b16 %v3525
      %v3545 = vunpack.c.h.b16 %v3525
      %v3546 = vunpack.c.l.b16 %v3526
      %v3547 = vunpack.c.h.b16 %v3526
      %v3548 = vunpack.c.l.b16 %v3527
      %v3549 = vunpack.c.h.b16 %v3527
      %v3550 = vunpack.c.l.b16 %v3528
      %v3551 = vunpack.c.h.b16 %v3528
      %v3552 = vunpack.c.l.b16 %v3529
      %v3553 = vunpack.c.h.b16 %v3529
      %v3554 = vpack.c.b16 %v3540, %v3538
      %v3555 = vpack.c.b16 %v3541, %v3539
      %v3556 = vpack.c.b16 %v3544, %v3542
      %v3557 = vpack.c.b16 %v3545, %v3543
      %v3558 = vpack.c.b16 %v3548, %v3546
      %v3559 = vpack.c.b16 %v3549, %v3547
      %v3560 = vpack.c.b16 %v3552, %v3550
      %v3561 = vpack.c.b16 %v3553, %v3551
      %v3571 = vsel %vm337, %v3504, 0
      %v3574 = vsel %vm337, %v3505, 0
      %v3577 = vsel %vm337, %v3506, 0
      %v3580 = vsel %vm337, %v3507, 0
      %v3583 = vsel %vm337, %v3508, 0
      %v3586 = vsel %vm337, %v3509, 0
      %v3589 = vsel %vm337, %v3510, 0
      %v3592 = vsel %vm337, %v3511, 0
      %v3595 = vsel %vm337, %v3520, 0
      %3597 = vmatprep.subr.bf16.mxu0 %v3555
      %3598 = vmatpush1.bf16.msra.mxu0 %v3554
      %3599 = vmatprep.subr.bf16.mxu0 %v3557
      %3600 = vmatpush1.bf16.msra.mxu0 %v3556
      %3601 = vmatprep.subr.bf16.mxu0 %v3559
      %3602 = vmatpush1.bf16.msra.mxu0 %v3558
      %3603 = vmatprep.subr.bf16.mxu0 %v3561
      %3604 = vmatpush1.bf16.msra.mxu0 %v3560
      %3605 = vmatprep.subr.bf16.mxu0 0
      %3606 = vmatpush1.bf16.msra.mxu0 0
      %3607 = vmatprep.subr.bf16.mxu0 0
      %3608 = vmatpush1.bf16.msra.mxu0 0
      %3609 = vmatprep.subr.bf16.mxu0 0
      %3610 = vmatpush1.bf16.msra.mxu0 0
      %3611 = vmatprep.subr.bf16.mxu0 0
      %3612 = vmatpush1.bf16.msra.mxu0 0
      %3613 = vmatprep.subr.bf16.mxu0 0
      %3614 = vmatpush1.bf16.msra.mxu0 0
      %3615 = vmatprep.subr.bf16.mxu0 0
      %3616 = vmatpush1.bf16.msra.mxu0 0
      %3617 = vmatprep.subr.bf16.mxu0 0
      %3618 = vmatpush1.bf16.msra.mxu0 0
      %3619 = vmatprep.subr.bf16.mxu0 0
      %3620 = vmatpush1.bf16.msra.mxu0 0
      %3621 = vmatprep.subr.bf16.mxu0 0
      %3622 = vmatpush1.bf16.msra.mxu0 0
      %3623 = vmatprep.subr.bf16.mxu0 0
      %3624 = vmatpush1.bf16.msra.mxu0 0
      %3625 = vmatprep.subr.bf16.mxu0 0
      %3626 = vmatpush1.bf16.msra.mxu0 0
      %3627 = vmatprep.subr.bf16.mxu0 0
      %3628 = vmatpush1.bf16.msra.mxu0 0
      %3629 = vmatprep.mubr.bf16.mxu0 0
      %3630 = vmatmul.mubr.bf16.gmra.mrb[0].mxu0 %v3571
      %v3631 = vpop.f32.mrb[0].mxu0
      %v3632 = vadd.f32 0.0, %v3631
      %v3633 = vpop.f32.mrb[0].mxu0
      %v3634 = vadd.f32 0.0, %v3633
      %v3635 = vpop.f32.mrb[0].mxu0
      %v3636 = vadd.f32 0.0, %v3635
      %v3637 = vpop.f32.mrb[0].mxu0
      %v3638 = vadd.f32 0.0, %v3637
      %3639 = vmatprep.mubr.bf16.mxu0 0
      %3640 = vmatmul.mubr.bf16.gmra.mrb[0].mxu0 %v3574
      %v3641 = vpop.f32.mrb[0].mxu0
      %v3642 = vadd.f32 0.0, %v3641
      %v3643 = vpop.f32.mrb[0].mxu0
      %v3644 = vadd.f32 0.0, %v3643
      %v3645 = vpop.f32.mrb[0].mxu0
      %v3646 = vadd.f32 0.0, %v3645
      %v3647 = vpop.f32.mrb[0].mxu0
      %v3648 = vadd.f32 0.0, %v3647
      %3649 = vmatprep.mubr.bf16.mxu0 0
      %3650 = vmatmul.mubr.bf16.gmra.mrb[0].mxu0 %v3577
      %v3651 = vpop.f32.mrb[0].mxu0
      %v3652 = vadd.f32 0.0, %v3651
      %v3653 = vpop.f32.mrb[0].mxu0
      %v3654 = vadd.f32 0.0, %v3653
      %v3655 = vpop.f32.mrb[0].mxu0
      %v3656 = vadd.f32 0.0, %v3655
      %v3657 = vpop.f32.mrb[0].mxu0
      %v3658 = vadd.f32 0.0, %v3657
      %3659 = vmatprep.mubr.bf16.mxu0 0
      %3660 = vmatmul.mubr.bf16.gmra.mrb[0].mxu0 %v3580
      %v3661 = vpop.f32.mrb[0].mxu0
      %v3662 = vadd.f32 0.0, %v3661
      %v3663 = vpop.f32.mrb[0].mxu0
      %v3664 = vadd.f32 0.0, %v3663
      %v3665 = vpop.f32.mrb[0].mxu0
      %v3666 = vadd.f32 0.0, %v3665
      %v3667 = vpop.f32.mrb[0].mxu0
      %v3668 = vadd.f32 0.0, %v3667
      %3669 = vmatprep.mubr.bf16.mxu0 0
      %3670 = vmatmul.mubr.bf16.gmra.mrb[0].mxu0 %v3583
      %v3671 = vpop.f32.mrb[0].mxu0
      %v3672 = vadd.f32 0.0, %v3671
      %v3673 = vpop.f32.mrb[0].mxu0
      %v3674 = vadd.f32 0.0, %v3673
      %v3675 = vpop.f32.mrb[0].mxu0
      %v3676 = vadd.f32 0.0, %v3675
      %v3677 = vpop.f32.mrb[0].mxu0
      %v3678 = vadd.f32 0.0, %v3677
      %3679 = vmatprep.mubr.bf16.mxu0 0
      %3680 = vmatmul.mubr.bf16.gmra.mrb[0].mxu0 %v3586
      %v3681 = vpop.f32.mrb[0].mxu0
      %v3682 = vadd.f32 0.0, %v3681
      %v3683 = vpop.f32.mrb[0].mxu0
      %v3684 = vadd.f32 0.0, %v3683
      %v3685 = vpop.f32.mrb[0].mxu0
      %v3686 = vadd.f32 0.0, %v3685
      %v3687 = vpop.f32.mrb[0].mxu0
      %v3688 = vadd.f32 0.0, %v3687
      %3689 = vmatprep.mubr.bf16.mxu0 0
      %3690 = vmatmul.mubr.bf16.gmra.mrb[0].mxu0 %v3589
      %v3691 = vpop.f32.mrb[0].mxu0
      %v3692 = vadd.f32 0.0, %v3691
      %v3693 = vpop.f32.mrb[0].mxu0
      %v3694 = vadd.f32 0.0, %v3693
      %v3695 = vpop.f32.mrb[0].mxu0
      %v3696 = vadd.f32 0.0, %v3695
      %v3697 = vpop.f32.mrb[0].mxu0
      %v3698 = vadd.f32 0.0, %v3697
      %3699 = vmatprep.mubr.bf16.mxu0 0
      %3700 = vmatmul.mubr.bf16.gmra.mrb[0].mxu0 %v3592
      %v3701 = vpop.f32.mrb[0].mxu0
      %v3702 = vadd.f32 0.0, %v3701
      %v3703 = vpop.f32.mrb[0].mxu0
      %v3704 = vadd.f32 0.0, %v3703
      %v3705 = vpop.f32.mrb[0].mxu0
      %v3706 = vadd.f32 0.0, %v3705
      %v3707 = vpop.f32.mrb[0].mxu0
      %v3708 = vadd.f32 0.0, %v3707
      %3709 = vmatprep.mubr.bf16.mxu0 0
      %3710 = vmatmul.mubr.bf16.gmra.mrb[0].mxu0 %v3595
      %v3711 = vpop.f32.mrb[0].mxu0
      %v3712 = vadd.f32 0.0, %v3711
      %v3713 = vpop.f32.mrb[0].mxu0
      %v3714 = vadd.f32 0.0, %v3713
      %v3715 = vpop.f32.mrb[0].mxu0
      %v3716 = vpop.f32.mrb[0].mxu0
      %3717 = vdwg.mxu0
      %v3726 = vunpack.c.l.b16 %v3512
      %v3727 = vunpack.c.h.b16 %v3512
      %v3728 = vunpack.c.l.b16 %v3513
      %v3729 = vunpack.c.h.b16 %v3513
      %v3730 = vunpack.c.l.b16 %v3514
      %v3731 = vunpack.c.h.b16 %v3514
      %v3732 = vunpack.c.l.b16 %v3515
      %v3733 = vunpack.c.h.b16 %v3515
      %v3734 = vunpack.c.l.b16 %v3516
      %v3735 = vunpack.c.h.b16 %v3516
      %v3736 = vunpack.c.l.b16 %v3517
      %v3737 = vunpack.c.h.b16 %v3517
      %v3738 = vunpack.c.l.b16 %v3518
      %v3739 = vunpack.c.h.b16 %v3518
      %v3740 = vunpack.c.l.b16 %v3519
      %v3741 = vunpack.c.h.b16 %v3519
      %v3742 = vpack.c.b16 %v3728, %v3726
      %v3743 = vpack.c.b16 %v3729, %v3727
      %v3744 = vpack.c.b16 %v3732, %v3730
      %v3745 = vpack.c.b16 %v3733, %v3731
      %v3746 = vpack.c.b16 %v3736, %v3734
      %v3747 = vpack.c.b16 %v3737, %v3735
      %v3748 = vpack.c.b16 %v3740, %v3738
      %v3749 = vpack.c.b16 %v3741, %v3739
      %v3759 = vsel %vm337, %v3503, 0
      %3761 = vmatprep.subr.bf16.mxu0 %v3743
      %3762 = vmatpush1.bf16.msra.mxu0 %v3742
      %3763 = vmatprep.subr.bf16.mxu0 %v3745
      %3764 = vmatpush1.bf16.msra.mxu0 %v3744
      %3765 = vmatprep.subr.bf16.mxu0 %v3747
      %3766 = vmatpush1.bf16.msra.mxu0 %v3746
      %3767 = vmatprep.subr.bf16.mxu0 %v3749
      %3768 = vmatpush1.bf16.msra.mxu0 %v3748
      %3769 = vmatprep.subr.bf16.mxu0 0
      %3770 = vmatpush1.bf16.msra.mxu0 0
      %3771 = vmatprep.subr.bf16.mxu0 0
      %3772 = vmatpush1.bf16.msra.mxu0 0
      %3773 = vmatprep.subr.bf16.mxu0 0
      %3774 = vmatpush1.bf16.msra.mxu0 0
      %3775 = vmatprep.subr.bf16.mxu0 0
      %3776 = vmatpush1.bf16.msra.mxu0 0
      %3777 = vmatprep.subr.bf16.mxu0 0
      %3778 = vmatpush1.bf16.msra.mxu0 0
      %3779 = vmatprep.subr.bf16.mxu0 0
      %3780 = vmatpush1.bf16.msra.mxu0 0
      %3781 = vmatprep.subr.bf16.mxu0 0
      %3782 = vmatpush1.bf16.msra.mxu0 0
      %3783 = vmatprep.subr.bf16.mxu0 0
      %3784 = vmatpush1.bf16.msra.mxu0 0
      %3785 = vmatprep.subr.bf16.mxu0 0
      %3786 = vmatpush1.bf16.msra.mxu0 0
      %3787 = vmatprep.subr.bf16.mxu0 0
      %3788 = vmatpush1.bf16.msra.mxu0 0
      %3789 = vmatprep.subr.bf16.mxu0 0
      %3790 = vmatpush1.bf16.msra.mxu0 0
      %3791 = vmatprep.subr.bf16.mxu0 0
      %3792 = vmatpush1.bf16.msra.mxu0 0
      %3793 = vmatprep.mubr.bf16.mxu0 0
      %3794 = vmatmul.mubr.bf16.gmra.mrb[0].mxu0 %v3759
      %v3795 = vpop.f32.mrb[0].mxu0
      %v3796 = vadd.f32 %v3632, %v3795
      %v3797 = vpop.f32.mrb[0].mxu0
      %v3798 = vadd.f32 %v3634, %v3797
      %v3799 = vpop.f32.mrb[0].mxu0
      %v3800 = vadd.f32 %v3636, %v3799
      %v3801 = vpop.f32.mrb[0].mxu0
      %v3802 = vadd.f32 %v3638, %v3801
      %3803 = vmatprep.mubr.bf16.mxu0 0
      %3804 = vmatmul.mubr.bf16.gmra.mrb[0].mxu0 %v3571
      %v3805 = vpop.f32.mrb[0].mxu0
      %v3806 = vadd.f32 %v3642, %v3805
      %v3807 = vpop.f32.mrb[0].mxu0
      %v3808 = vadd.f32 %v3644, %v3807
      %v3809 = vpop.f32.mrb[0].mxu0
      %v3810 = vadd.f32 %v3646, %v3809
      %v3811 = vpop.f32.mrb[0].mxu0
      %v3812 = vadd.f32 %v3648, %v3811
      %3813 = vmatprep.mubr.bf16.mxu0 0
      %3814 = vmatmul.mubr.bf16.gmra.mrb[0].mxu0 %v3574
      %v3815 = vpop.f32.mrb[0].mxu0
      %v3816 = vadd.f32 %v3652, %v3815
      %v3817 = vpop.f32.mrb[0].mxu0
      %v3818 = vadd.f32 %v3654, %v3817
      %v3819 = vpop.f32.mrb[0].mxu0
      %v3820 = vadd.f32 %v3656, %v3819
      %v3821 = vpop.f32.mrb[0].mxu0
      %v3822 = vadd.f32 %v3658, %v3821
      %3823 = vmatprep.mubr.bf16.mxu0 0
      %3824 = vmatmul.mubr.bf16.gmra.mrb[0].mxu0 %v3577
      %v3825 = vpop.f32.mrb[0].mxu0
      %v3826 = vadd.f32 %v3662, %v3825
      %v3827 = vpop.f32.mrb[0].mxu0
      %v3828 = vadd.f32 %v3664, %v3827
      %v3829 = vpop.f32.mrb[0].mxu0
      %v3830 = vadd.f32 %v3666, %v3829
      %v3831 = vpop.f32.mrb[0].mxu0
      %v3832 = vadd.f32 %v3668, %v3831
      %3833 = vmatprep.mubr.bf16.mxu0 0
      %3834 = vmatmul.mubr.bf16.gmra.mrb[0].mxu0 %v3580
      %v3835 = vpop.f32.mrb[0].mxu0
      %v3836 = vadd.f32 %v3672, %v3835
      %v3837 = vpop.f32.mrb[0].mxu0
      %v3838 = vadd.f32 %v3674, %v3837
      %v3839 = vpop.f32.mrb[0].mxu0
      %v3840 = vadd.f32 %v3676, %v3839
      %v3841 = vpop.f32.mrb[0].mxu0
      %v3842 = vadd.f32 %v3678, %v3841
      %3843 = vmatprep.mubr.bf16.mxu0 0
      %3844 = vmatmul.mubr.bf16.gmra.mrb[0].mxu0 %v3583
      %v3845 = vpop.f32.mrb[0].mxu0
      %v3846 = vadd.f32 %v3682, %v3845
      %v3847 = vpop.f32.mrb[0].mxu0
      %v3848 = vadd.f32 %v3684, %v3847
      %v3849 = vpop.f32.mrb[0].mxu0
      %v3850 = vadd.f32 %v3686, %v3849
      %v3851 = vpop.f32.mrb[0].mxu0
      %v3852 = vadd.f32 %v3688, %v3851
      %3853 = vmatprep.mubr.bf16.mxu0 0
      %3854 = vmatmul.mubr.bf16.gmra.mrb[0].mxu0 %v3586
      %v3855 = vpop.f32.mrb[0].mxu0
      %v3856 = vadd.f32 %v3692, %v3855
      %v3857 = vpop.f32.mrb[0].mxu0
      %v3858 = vadd.f32 %v3694, %v3857
      %v3859 = vpop.f32.mrb[0].mxu0
      %v3860 = vadd.f32 %v3696, %v3859
      %v3861 = vpop.f32.mrb[0].mxu0
      %v3862 = vadd.f32 %v3698, %v3861
      %3863 = vmatprep.mubr.bf16.mxu0 0
      %3864 = vmatmul.mubr.bf16.gmra.mrb[0].mxu0 %v3589
      %v3865 = vpop.f32.mrb[0].mxu0
      %v3866 = vadd.f32 %v3702, %v3865
      %v3867 = vpop.f32.mrb[0].mxu0
      %v3868 = vadd.f32 %v3704, %v3867
      %v3869 = vpop.f32.mrb[0].mxu0
      %v3870 = vadd.f32 %v3706, %v3869
      %v3871 = vpop.f32.mrb[0].mxu0
      %v3872 = vadd.f32 %v3708, %v3871
      %3873 = vmatprep.mubr.bf16.mxu0 0
      %3874 = vmatmul.mubr.bf16.gmra.mrb[0].mxu0 %v3592
      %v3875 = vpop.f32.mrb[0].mxu0
      %v3876 = vadd.f32 %v3712, %v3875
      %v3877 = vpop.f32.mrb[0].mxu0
      %v3878 = vadd.f32 %v3714, %v3877
      %v3879 = vpop.f32.mrb[0].mxu0
      %v3880 = vpop.f32.mrb[0].mxu0
      %3881 = vdwg.mxu0
      %v3882 = vld [vmem:[#allocation2 + $0x10] sm:$0xff]
      %v3883 = vld [vmem:[#allocation2 + $0x18] sm:$0xff]
      %v3884 = vld [vmem:[#allocation2 + $0x20] sm:$0xff]
      %v3885 = vld [vmem:[#allocation2 + $0x28] sm:$0xff]
      %v3886 = vld [vmem:[#allocation2 + $0x30] sm:$0xff]
      %v3887 = vld [vmem:[#allocation2 + $0x38] sm:$0xff]
      %v3888 = vld [vmem:[#allocation2 + $0x40] sm:$0xff]
      %v3889 = vld [vmem:[#allocation2 + $0x48] sm:$0xff]
      %v3890 = vld [vmem:[#allocation2 + $0x50] sm:$0xff]
      %s3891 = scalar_lea.vmem %s7, 128
      %v3892 = vld [vmem:[%s3891] sm:$0xff]
      %v3893 = vld [vmem:[%s3891 + $0x8] sm:$0xff]
      %v3894 = vld [vmem:[%s3891 + $0x10] sm:$0xff]
      %v3895 = vld [vmem:[%s3891 + $0x18] sm:$0xff]
      %v3896 = vld [vmem:[%s3891 + $0x20] sm:$0xff]
      %v3897 = vld [vmem:[%s3891 + $0x28] sm:$0xff]
      %v3898 = vld [vmem:[%s3891 + $0x30] sm:$0xff]
      %v3899 = vld [vmem:[%s3891 + $0x38] sm:$0xff]
      %v3908 = vunpack.c.l.b16 %v3892
      %v3909 = vunpack.c.h.b16 %v3892
      %v3910 = vunpack.c.l.b16 %v3893
      %v3911 = vunpack.c.h.b16 %v3893
      %v3912 = vunpack.c.l.b16 %v3894
      %v3913 = vunpack.c.h.b16 %v3894
      %v3914 = vunpack.c.l.b16 %v3895
      %v3915 = vunpack.c.h.b16 %v3895
      %v3916 = vunpack.c.l.b16 %v3896
      %v3917 = vunpack.c.h.b16 %v3896
      %v3918 = vunpack.c.l.b16 %v3897
      %v3919 = vunpack.c.h.b16 %v3897
      %v3920 = vunpack.c.l.b16 %v3898
      %v3921 = vunpack.c.h.b16 %v3898
      %v3922 = vunpack.c.l.b16 %v3899
      %v3923 = vunpack.c.h.b16 %v3899
      %v3924 = vpack.c.b16 %v3910, %v3908
      %v3925 = vpack.c.b16 %v3911, %v3909
      %v3926 = vpack.c.b16 %v3914, %v3912
      %v3927 = vpack.c.b16 %v3915, %v3913
      %v3928 = vpack.c.b16 %v3918, %v3916
      %v3929 = vpack.c.b16 %v3919, %v3917
      %v3930 = vpack.c.b16 %v3922, %v3920
      %v3931 = vpack.c.b16 %v3923, %v3921
      %v3941 = vsel %vm337, %v3882, 0
      %v3944 = vsel %vm337, %v3883, 0
      %v3947 = vsel %vm337, %v3884, 0
      %v3950 = vsel %vm337, %v3885, 0
      %v3953 = vsel %vm337, %v3886, 0
      %v3956 = vsel %vm337, %v3887, 0
      %v3959 = vsel %vm337, %v3888, 0
      %v3962 = vsel %vm337, %v3889, 0
      %v3965 = vsel %vm337, %v3890, 0
      %3967 = vmatprep.subr.bf16.mxu0 %v3925
      %3968 = vmatpush1.bf16.msra.mxu0 %v3924
      %3969 = vmatprep.subr.bf16.mxu0 %v3927
      %3970 = vmatpush1.bf16.msra.mxu0 %v3926
      %3971 = vmatprep.subr.bf16.mxu0 %v3929
      %3972 = vmatpush1.bf16.msra.mxu0 %v3928
      %3973 = vmatprep.subr.bf16.mxu0 %v3931
      %3974 = vmatpush1.bf16.msra.mxu0 %v3930
      %3975 = vmatprep.subr.bf16.mxu0 0
      %3976 = vmatpush1.bf16.msra.mxu0 0
      %3977 = vmatprep.subr.bf16.mxu0 0
      %3978 = vmatpush1.bf16.msra.mxu0 0
      %3979 = vmatprep.subr.bf16.mxu0 0
      %3980 = vmatpush1.bf16.msra.mxu0 0
      %3981 = vmatprep.subr.bf16.mxu0 0
      %3982 = vmatpush1.bf16.msra.mxu0 0
      %3983 = vmatprep.subr.bf16.mxu0 0
      %3984 = vmatpush1.bf16.msra.mxu0 0
      %3985 = vmatprep.subr.bf16.mxu0 0
      %3986 = vmatpush1.bf16.msra.mxu0 0
      %3987 = vmatprep.subr.bf16.mxu0 0
      %3988 = vmatpush1.bf16.msra.mxu0 0
      %3989 = vmatprep.subr.bf16.mxu0 0
      %3990 = vmatpush1.bf16.msra.mxu0 0
      %3991 = vmatprep.subr.bf16.mxu0 0
      %3992 = vmatpush1.bf16.msra.mxu0 0
      %3993 = vmatprep.subr.bf16.mxu0 0
      %3994 = vmatpush1.bf16.msra.mxu0 0
      %3995 = vmatprep.subr.bf16.mxu0 0
      %3996 = vmatpush1.bf16.msra.mxu0 0
      %3997 = vmatprep.subr.bf16.mxu0 0
      %3998 = vmatpush1.bf16.msra.mxu0 0
      %3999 = vmatprep.mubr.bf16.mxu0 0
      %4000 = vmatmul.mubr.bf16.gmra.mrb[0].mxu0 %v3941
      %v4001 = vpop.f32.mrb[0].mxu0
      %v4002 = vadd.f32 0.0, %v4001
      %v4003 = vpop.f32.mrb[0].mxu0
      %v4004 = vadd.f32 0.0, %v4003
      %v4005 = vpop.f32.mrb[0].mxu0
      %v4006 = vadd.f32 0.0, %v4005
      %v4007 = vpop.f32.mrb[0].mxu0
      %v4008 = vadd.f32 0.0, %v4007
      %4009 = vmatprep.mubr.bf16.mxu0 0
      %4010 = vmatmul.mubr.bf16.gmra.mrb[0].mxu0 %v3944
      %v4011 = vpop.f32.mrb[0].mxu0
      %v4012 = vadd.f32 0.0, %v4011
      %v4013 = vpop.f32.mrb[0].mxu0
      %v4014 = vadd.f32 0.0, %v4013
      %v4015 = vpop.f32.mrb[0].mxu0
      %v4016 = vadd.f32 0.0, %v4015
      %v4017 = vpop.f32.mrb[0].mxu0
      %v4018 = vadd.f32 0.0, %v4017
      %4019 = vmatprep.mubr.bf16.mxu0 0
      %4020 = vmatmul.mubr.bf16.gmra.mrb[0].mxu0 %v3947
      %v4021 = vpop.f32.mrb[0].mxu0
      %v4022 = vadd.f32 0.0, %v4021
      %v4023 = vpop.f32.mrb[0].mxu0
      %v4024 = vadd.f32 0.0, %v4023
      %v4025 = vpop.f32.mrb[0].mxu0
      %v4026 = vadd.f32 0.0, %v4025
      %v4027 = vpop.f32.mrb[0].mxu0
      %v4028 = vadd.f32 0.0, %v4027
      %4029 = vmatprep.mubr.bf16.mxu0 0
      %4030 = vmatmul.mubr.bf16.gmra.mrb[0].mxu0 %v3950
      %v4031 = vpop.f32.mrb[0].mxu0
      %v4032 = vadd.f32 0.0, %v4031
      %v4033 = vpop.f32.mrb[0].mxu0
      %v4034 = vadd.f32 0.0, %v4033
      %v4035 = vpop.f32.mrb[0].mxu0
      %v4036 = vadd.f32 0.0, %v4035
      %v4037 = vpop.f32.mrb[0].mxu0
      %v4038 = vadd.f32 0.0, %v4037
      %4039 = vmatprep.mubr.bf16.mxu0 0
      %4040 = vmatmul.mubr.bf16.gmra.mrb[0].mxu0 %v3953
      %v4041 = vpop.f32.mrb[0].mxu0
      %v4042 = vadd.f32 0.0, %v4041
      %v4043 = vpop.f32.mrb[0].mxu0
      %v4044 = vadd.f32 0.0, %v4043
      %v4045 = vpop.f32.mrb[0].mxu0
      %v4046 = vadd.f32 0.0, %v4045
      %v4047 = vpop.f32.mrb[0].mxu0
      %v4048 = vadd.f32 0.0, %v4047
      %4049 = vmatprep.mubr.bf16.mxu0 0
      %4050 = vmatmul.mubr.bf16.gmra.mrb[0].mxu0 %v3956
      %v4051 = vpop.f32.mrb[0].mxu0
      %v4052 = vadd.f32 0.0, %v4051
      %v4053 = vpop.f32.mrb[0].mxu0
      %v4054 = vadd.f32 0.0, %v4053
      %v4055 = vpop.f32.mrb[0].mxu0
      %v4056 = vadd.f32 0.0, %v4055
      %v4057 = vpop.f32.mrb[0].mxu0
      %v4058 = vadd.f32 0.0, %v4057
      %4059 = vmatprep.mubr.bf16.mxu0 0
      %4060 = vmatmul.mubr.bf16.gmra.mrb[0].mxu0 %v3959
      %v4061 = vpop.f32.mrb[0].mxu0
      %v4062 = vadd.f32 0.0, %v4061
      %v4063 = vpop.f32.mrb[0].mxu0
      %v4064 = vadd.f32 0.0, %v4063
      %v4065 = vpop.f32.mrb[0].mxu0
      %v4066 = vadd.f32 0.0, %v4065
      %v4067 = vpop.f32.mrb[0].mxu0
      %v4068 = vadd.f32 0.0, %v4067
      %4069 = vmatprep.mubr.bf16.mxu0 0
      %4070 = vmatmul.mubr.bf16.gmra.mrb[0].mxu0 %v3962
      %v4071 = vpop.f32.mrb[0].mxu0
      %v4072 = vadd.f32 0.0, %v4071
      %v4073 = vpop.f32.mrb[0].mxu0
      %v4074 = vadd.f32 0.0, %v4073
      %v4075 = vpop.f32.mrb[0].mxu0
      %v4076 = vadd.f32 0.0, %v4075
      %v4077 = vpop.f32.mrb[0].mxu0
      %v4078 = vadd.f32 0.0, %v4077
      %4079 = vmatprep.mubr.bf16.mxu0 0
      %4080 = vmatmul.mubr.bf16.gmra.mrb[0].mxu0 %v3965
      %v4081 = vpop.f32.mrb[0].mxu0
      %v4082 = vadd.f32 0.0, %v4081
      %v4083 = vpop.f32.mrb[0].mxu0
      %v4084 = vadd.f32 0.0, %v4083
      %v4085 = vpop.f32.mrb[0].mxu0
      %v4086 = vpop.f32.mrb[0].mxu0
      %4087 = vdwg.mxu0
      %v4088 = vadd.f32 %v3796, %v4002
      %v4089 = vadd.f32 %v3798, %v4004
      %v4090 = vadd.f32 %v3800, %v4006
      %v4091 = vadd.f32 %v3802, %v4008
      %v4092 = vadd.f32 %v3806, %v4012
      %v4093 = vadd.f32 %v3808, %v4014
      %v4094 = vadd.f32 %v3810, %v4016
      %v4095 = vadd.f32 %v3812, %v4018
      %v4096 = vadd.f32 %v3816, %v4022
      %v4097 = vadd.f32 %v3818, %v4024
      %v4098 = vadd.f32 %v3820, %v4026
      %v4099 = vadd.f32 %v3822, %v4028
      %v4100 = vadd.f32 %v3826, %v4032
      %v4101 = vadd.f32 %v3828, %v4034
      %v4102 = vadd.f32 %v3830, %v4036
      %v4103 = vadd.f32 %v3832, %v4038
      %v4104 = vadd.f32 %v3836, %v4042
      %v4105 = vadd.f32 %v3838, %v4044
      %v4106 = vadd.f32 %v3840, %v4046
      %v4107 = vadd.f32 %v3842, %v4048
      %v4108 = vadd.f32 %v3846, %v4052
      %v4109 = vadd.f32 %v3848, %v4054
      %v4110 = vadd.f32 %v3850, %v4056
      %v4111 = vadd.f32 %v3852, %v4058
      %v4112 = vadd.f32 %v3856, %v4062
      %v4113 = vadd.f32 %v3858, %v4064
      %v4114 = vadd.f32 %v3860, %v4066
      %v4115 = vadd.f32 %v3862, %v4068
      %v4116 = vadd.f32 %v3866, %v4072
      %v4117 = vadd.f32 %v3868, %v4074
      %v4118 = vadd.f32 %v3870, %v4076
      %v4119 = vadd.f32 %v3872, %v4078
      %v4120 = vadd.f32 %v3876, %v4082
      %v4121 = vadd.f32 %v3878, %v4084
      %v4122 = vld [vmem:[%s8] sm:$0x1]
      %v4124 = vlaneseq
      %v4125 = vshrl.u32 %v4124, 7
      %v4126 = vsub.s32 0, %v4125
      %v4127 = vrot.slane %v4122, %v4126
      %v4129 = vadd.f32 %v4127, %v4088
      %v4130 = vadd.f32 %v4127, %v4090
      %v4131 = vadd.f32 %v4127, %v4092
      %v4132 = vadd.f32 %v4127, %v4094
      %v4133 = vadd.f32 %v4127, %v4096
      %v4134 = vadd.f32 %v4127, %v4098
      %v4135 = vadd.f32 %v4127, %v4100
      %v4136 = vadd.f32 %v4127, %v4102
      %v4137 = vadd.f32 %v4127, %v4104
      %v4138 = vadd.f32 %v4127, %v4106
      %v4139 = vadd.f32 %v4127, %v4108
      %v4140 = vadd.f32 %v4127, %v4110
      %v4141 = vadd.f32 %v4127, %v4112
      %v4142 = vadd.f32 %v4127, %v4114
      %v4143 = vadd.f32 %v4127, %v4116
      %v4144 = vadd.f32 %v4127, %v4118
      %v4162 = vrot.slane %v4088, 1
      %v4163 = vrot.slane %v4090, 1
      %v4164 = vsel %vm1734, %v4162, %v4163
      %v4165 = vrot.slane %v4092, 1
      %v4166 = vsel %vm1734, %v4163, %v4165
      %v4167 = vrot.slane %v4094, 1
      %v4168 = vsel %vm1734, %v4165, %v4167
      %v4169 = vrot.slane %v4096, 1
      %v4170 = vsel %vm1734, %v4167, %v4169
      %v4171 = vrot.slane %v4098, 1
      %v4172 = vsel %vm1734, %v4169, %v4171
      %v4173 = vrot.slane %v4100, 1
      %v4174 = vsel %vm1734, %v4171, %v4173
      %v4175 = vrot.slane %v4102, 1
      %v4176 = vsel %vm1734, %v4173, %v4175
      %v4177 = vrot.slane %v4104, 1
      %v4178 = vsel %vm1734, %v4175, %v4177
      %v4179 = vrot.slane %v4106, 1
      %v4180 = vsel %vm1734, %v4177, %v4179
      %v4181 = vrot.slane %v4108, 1
      %v4182 = vsel %vm1734, %v4179, %v4181
      %v4183 = vrot.slane %v4110, 1
      %v4184 = vsel %vm1734, %v4181, %v4183
      %v4185 = vrot.slane %v4112, 1
      %v4186 = vsel %vm1734, %v4183, %v4185
      %v4187 = vrot.slane %v4114, 1
      %v4188 = vsel %vm1734, %v4185, %v4187
      %v4189 = vrot.slane %v4116, 1
      %v4190 = vsel %vm1734, %v4187, %v4189
      %v4191 = vrot.slane %v4118, 1
      %v4192 = vsel %vm1734, %v4189, %v4191
      %v4193 = vrot.slane %v4120, 1
      %v4194 = vsel %vm1734, %v4191, %v4193
      %4195 = vrot.lane.b32.xlu0 %v4164, 64
      %v4196 = vpop.permute.xlu0 %4195
      %4197 = vrot.lane.b32.xlu0 %v4166, 64
      %v4198 = vpop.permute.xlu0 %4197
      %4199 = vrot.lane.b32.xlu0 %v4168, 64
      %v4200 = vpop.permute.xlu0 %4199
      %4201 = vrot.lane.b32.xlu0 %v4170, 64
      %v4202 = vpop.permute.xlu0 %4201
      %4203 = vrot.lane.b32.xlu0 %v4172, 64
      %v4204 = vpop.permute.xlu0 %4203
      %4205 = vrot.lane.b32.xlu0 %v4174, 64
      %v4206 = vpop.permute.xlu0 %4205
      %4207 = vrot.lane.b32.xlu0 %v4176, 64
      %v4208 = vpop.permute.xlu0 %4207
      %4209 = vrot.lane.b32.xlu0 %v4178, 64
      %v4210 = vpop.permute.xlu0 %4209
      %4211 = vrot.lane.b32.xlu0 %v4180, 64
      %v4212 = vpop.permute.xlu0 %4211
      %4213 = vrot.lane.b32.xlu0 %v4182, 64
      %v4214 = vpop.permute.xlu0 %4213
      %4215 = vrot.lane.b32.xlu0 %v4184, 64
      %v4216 = vpop.permute.xlu0 %4215
      %4217 = vrot.lane.b32.xlu0 %v4186, 64
      %v4218 = vpop.permute.xlu0 %4217
      %4219 = vrot.lane.b32.xlu0 %v4188, 64
      %v4220 = vpop.permute.xlu0 %4219
      %4221 = vrot.lane.b32.xlu0 %v4190, 64
      %v4222 = vpop.permute.xlu0 %4221
      %4223 = vrot.lane.b32.xlu0 %v4192, 64
      %v4224 = vpop.permute.xlu0 %4223
      %4225 = vrot.lane.b32.xlu0 %v4194, 64
      %v4226 = vpop.permute.xlu0 %4225
      %v4243 = vadd.f32 %v4129, %v4196
      %v4244 = vadd.f32 %v4130, %v4198
      %v4245 = vadd.f32 %v4131, %v4200
      %v4246 = vadd.f32 %v4132, %v4202
      %v4247 = vadd.f32 %v4133, %v4204
      %v4248 = vadd.f32 %v4134, %v4206
      %v4249 = vadd.f32 %v4135, %v4208
      %v4250 = vadd.f32 %v4136, %v4210
      %v4251 = vadd.f32 %v4137, %v4212
      %v4252 = vadd.f32 %v4138, %v4214
      %v4253 = vadd.f32 %v4139, %v4216
      %v4254 = vadd.f32 %v4140, %v4218
      %v4255 = vadd.f32 %v4141, %v4220
      %v4256 = vadd.f32 %v4142, %v4222
      %v4257 = vadd.f32 %v4143, %v4224
      %v4258 = vadd.f32 %v4144, %v4226
      %v4276 = vrot.slane %v4089, 2
      %v4277 = vrot.slane %v4091, 2
      %v4278 = vsel %vm1947, %v4276, %v4277
      %v4279 = vrot.slane %v4093, 2
      %v4280 = vsel %vm1947, %v4277, %v4279
      %v4281 = vrot.slane %v4095, 2
      %v4282 = vsel %vm1947, %v4279, %v4281
      %v4283 = vrot.slane %v4097, 2
      %v4284 = vsel %vm1947, %v4281, %v4283
      %v4285 = vrot.slane %v4099, 2
      %v4286 = vsel %vm1947, %v4283, %v4285
      %v4287 = vrot.slane %v4101, 2
      %v4288 = vsel %vm1947, %v4285, %v4287
      %v4289 = vrot.slane %v4103, 2
      %v4290 = vsel %vm1947, %v4287, %v4289
      %v4291 = vrot.slane %v4105, 2
      %v4292 = vsel %vm1947, %v4289, %v4291
      %v4293 = vrot.slane %v4107, 2
      %v4294 = vsel %vm1947, %v4291, %v4293
      %v4295 = vrot.slane %v4109, 2
      %v4296 = vsel %vm1947, %v4293, %v4295
      %v4297 = vrot.slane %v4111, 2
      %v4298 = vsel %vm1947, %v4295, %v4297
      %v4299 = vrot.slane %v4113, 2
      %v4300 = vsel %vm1947, %v4297, %v4299
      %v4301 = vrot.slane %v4115, 2
      %v4302 = vsel %vm1947, %v4299, %v4301
      %v4303 = vrot.slane %v4117, 2
      %v4304 = vsel %vm1947, %v4301, %v4303
      %v4305 = vrot.slane %v4119, 2
      %v4306 = vsel %vm1947, %v4303, %v4305
      %v4307 = vrot.slane %v4121, 2
      %v4308 = vsel %vm1947, %v4305, %v4307
      %v4325 = vadd.f32 %v4243, %v4278
      %v4326 = vadd.f32 %v4244, %v4280
      %v4327 = vadd.f32 %v4245, %v4282
      %v4328 = vadd.f32 %v4246, %v4284
      %v4329 = vadd.f32 %v4247, %v4286
      %v4330 = vadd.f32 %v4248, %v4288
      %v4331 = vadd.f32 %v4249, %v4290
      %v4332 = vadd.f32 %v4250, %v4292
      %v4333 = vadd.f32 %v4251, %v4294
      %v4334 = vadd.f32 %v4252, %v4296
      %v4335 = vadd.f32 %v4253, %v4298
      %v4336 = vadd.f32 %v4254, %v4300
      %v4337 = vadd.f32 %v4255, %v4302
      %v4338 = vadd.f32 %v4256, %v4304
      %v4339 = vadd.f32 %v4257, %v4306
      %v4340 = vadd.f32 %v4258, %v4308
      %v4341 = vmul.f32 %v4325, %v4325
      %v4342 = vmul.f32 %v4326, %v4326
      %v4343 = vmul.f32 %v4327, %v4327
      %v4344 = vmul.f32 %v4328, %v4328
      %v4345 = vmul.f32 %v4329, %v4329
      %v4346 = vmul.f32 %v4330, %v4330
      %v4347 = vmul.f32 %v4331, %v4331
      %v4348 = vmul.f32 %v4332, %v4332
      %v4349 = vmul.f32 %v4333, %v4333
      %v4350 = vmul.f32 %v4334, %v4334
      %v4351 = vmul.f32 %v4335, %v4335
      %v4352 = vmul.f32 %v4336, %v4336
      %v4353 = vmul.f32 %v4337, %v4337
      %v4354 = vmul.f32 %v4338, %v4338
      %v4355 = vmul.f32 %v4339, %v4339
      %v4356 = vmul.f32 %v4340, %v4340
      %v4357 = vsel %vm337, %v4341, 0.0
      %4358 = vadd.xlane.f32.xlu0 %v4357
      %v4359 = vpop.xlane.xlu0 %4358
      %v4360 = vsel %vm337, %v4342, 0.0
      %4361 = vadd.xlane.f32.xlu0 %v4360
      %v4362 = vpop.xlane.xlu0 %4361
      %v4363 = vsel %vm337, %v4343, 0.0
      %4364 = vadd.xlane.f32.xlu0 %v4363
      %v4365 = vpop.xlane.xlu0 %4364
      %v4366 = vsel %vm337, %v4344, 0.0
      %4367 = vadd.xlane.f32.xlu0 %v4366
      %v4368 = vpop.xlane.xlu0 %4367
      %v4369 = vsel %vm337, %v4345, 0.0
      %4370 = vadd.xlane.f32.xlu0 %v4369
      %v4371 = vpop.xlane.xlu0 %4370
      %v4372 = vsel %vm337, %v4346, 0.0
      %4373 = vadd.xlane.f32.xlu0 %v4372
      %v4374 = vpop.xlane.xlu0 %4373
      %v4375 = vsel %vm337, %v4347, 0.0
      %4376 = vadd.xlane.f32.xlu0 %v4375
      %v4377 = vpop.xlane.xlu0 %4376
      %v4378 = vsel %vm337, %v4348, 0.0
      %4379 = vadd.xlane.f32.xlu0 %v4378
      %v4380 = vpop.xlane.xlu0 %4379
      %v4381 = vsel %vm337, %v4349, 0.0
      %4382 = vadd.xlane.f32.xlu0 %v4381
      %v4383 = vpop.xlane.xlu0 %4382
      %v4384 = vsel %vm337, %v4350, 0.0
      %4385 = vadd.xlane.f32.xlu0 %v4384
      %v4386 = vpop.xlane.xlu0 %4385
      %v4387 = vsel %vm337, %v4351, 0.0
      %4388 = vadd.xlane.f32.xlu0 %v4387
      %v4389 = vpop.xlane.xlu0 %4388
      %v4390 = vsel %vm337, %v4352, 0.0
      %4391 = vadd.xlane.f32.xlu0 %v4390
      %v4392 = vpop.xlane.xlu0 %4391
      %v4393 = vsel %vm337, %v4353, 0.0
      %4394 = vadd.xlane.f32.xlu0 %v4393
      %v4395 = vpop.xlane.xlu0 %4394
      %v4396 = vsel %vm337, %v4354, 0.0
      %4397 = vadd.xlane.f32.xlu0 %v4396
      %v4398 = vpop.xlane.xlu0 %4397
      %v4399 = vsel %vm337, %v4355, 0.0
      %4400 = vadd.xlane.f32.xlu0 %v4399
      %v4401 = vpop.xlane.xlu0 %4400
      %v4402 = vsel %vm337, %v4356, 0.0
      %4403 = vadd.xlane.f32.xlu0 %v4402
      %v4404 = vpop.xlane.xlu0 %4403
      %v4405 = vmax.f32 %v4359, 1e-24
      %v4406 = vmax.f32 %v4362, 1e-24
      %v4407 = vmax.f32 %v4365, 1e-24
      %v4408 = vmax.f32 %v4368, 1e-24
      %v4409 = vmax.f32 %v4371, 1e-24
      %v4410 = vmax.f32 %v4374, 1e-24
      %v4411 = vmax.f32 %v4377, 1e-24
      %v4412 = vmax.f32 %v4380, 1e-24
      %v4413 = vmax.f32 %v4383, 1e-24
      %v4414 = vmax.f32 %v4386, 1e-24
      %v4415 = vmax.f32 %v4389, 1e-24
      %v4416 = vmax.f32 %v4392, 1e-24
      %v4417 = vmax.f32 %v4395, 1e-24
      %v4418 = vmax.f32 %v4398, 1e-24
      %v4419 = vmax.f32 %v4401, 1e-24
      %v4420 = vmax.f32 %v4404, 1e-24
      %v4421 = vrsqrt.pop %v4405
      %v4422 = vrsqrt.pop %v4406
      %v4423 = vrsqrt.pop %v4407
      %v4424 = vrsqrt.pop %v4408
      %v4425 = vrsqrt.pop %v4409
      %v4426 = vrsqrt.pop %v4410
      %v4427 = vrsqrt.pop %v4411
      %v4428 = vrsqrt.pop %v4412
      %v4429 = vrsqrt.pop %v4413
      %v4430 = vrsqrt.pop %v4414
      %v4431 = vrsqrt.pop %v4415
      %v4432 = vrsqrt.pop %v4416
      %v4433 = vrsqrt.pop %v4417
      %v4434 = vrsqrt.pop %v4418
      %v4435 = vrsqrt.pop %v4419
      %v4436 = vrsqrt.pop %v4420
      %v4437 = vmul.f32 %v4325, %v4421
      %v4438 = vmul.f32 %v4326, %v4422
      %v4439 = vmul.f32 %v4327, %v4423
      %v4440 = vmul.f32 %v4328, %v4424
      %v4441 = vmul.f32 %v4329, %v4425
      %v4442 = vmul.f32 %v4330, %v4426
      %v4443 = vmul.f32 %v4331, %v4427
      %v4444 = vmul.f32 %v4332, %v4428
      %v4445 = vmul.f32 %v4333, %v4429
      %v4446 = vmul.f32 %v4334, %v4430
      %v4447 = vmul.f32 %v4335, %v4431
      %v4448 = vmul.f32 %v4336, %v4432
      %v4449 = vmul.f32 %v4337, %v4433
      %v4450 = vmul.f32 %v4338, %v4434
      %v4451 = vmul.f32 %v4339, %v4435
      %v4452 = vmul.f32 %v4340, %v4436
      %4453 = vst.msk [vmem:[%s334] sm:$0xff] %vm337, %v4437
      %4454 = vst.msk [vmem:[%s334 + $0x8] sm:$0xff] %vm337, %v4438
      %4455 = vst.msk [vmem:[%s334 + $0x10] sm:$0xff] %vm337, %v4439
      %4456 = vst.msk [vmem:[%s334 + $0x18] sm:$0xff] %vm337, %v4440
      %4457 = vst.msk [vmem:[%s334 + $0x20] sm:$0xff] %vm337, %v4441
      %4458 = vst.msk [vmem:[%s334 + $0x28] sm:$0xff] %vm337, %v4442
      %4459 = vst.msk [vmem:[%s334 + $0x30] sm:$0xff] %vm337, %v4443
      %4460 = vst.msk [vmem:[%s334 + $0x38] sm:$0xff] %vm337, %v4444
      %4461 = vst.msk [vmem:[%s334 + $0x40] sm:$0xff] %vm337, %v4445
      %4462 = vst.msk [vmem:[%s334 + $0x48] sm:$0xff] %vm337, %v4446
      %4463 = vst.msk [vmem:[%s334 + $0x50] sm:$0xff] %vm337, %v4447
      %4464 = vst.msk [vmem:[%s334 + $0x58] sm:$0xff] %vm337, %v4448
      %4465 = vst.msk [vmem:[%s334 + $0x60] sm:$0xff] %vm337, %v4449
      %4466 = vst.msk [vmem:[%s334 + $0x68] sm:$0xff] %vm337, %v4450
      %4467 = vst.msk [vmem:[%s334 + $0x70] sm:$0xff] %vm337, %v4451
      %4468 = vst.msk [vmem:[%s334 + $0x78] sm:$0xff] %vm337, %v4452
      %s4469 = smul.u32 16, %s20
      %p4470 = scmp.lt.s32.totalorder %s4469, 31
      %s4471 = scalar_select %p4470, %s4469, 31
      %s4472 = smul.addr %s4471, 8
      %s4473 = scalar_lea.vmem %s9, %s4472
      // Predicated region
      $region57: #{stereo_matching_forward.1} parent=55 // pred_check
        %p4474 = pneg %p232
      $region58: #{stereo_matching_forward.1} parent=55 // pred_check_branch
        %4476 = sbr.rel (%p4474) target = $region60
      $region59: #{stereo_matching_forward.1} parent=55 // pred_region
        %s4477 = smul.u32 16, %s20
      $region60: #{stereo_matching_forward.1} parent=55 // pred_fallthru
        _
    $region56: #{stereo_matching_forward.1} parent=5 // pred_fallthru
      _
    %p4478 = scmp.le.s32.totalorder 2, %s15
    // Predicated region
    $region61: #{stereo_matching_forward.1} parent=5 // pred_check
      %p4479 = pneg %p4478
    $region62: #{stereo_matching_forward.1} parent=5 // pred_check_branch
      %4481 = sbr.rel (%p4479) target = $region64
    $region63: #{stereo_matching_forward.1} parent=5 // pred_region
      %s4482 = ssub.s32 %s15, 2
      // Predicated region
      $region65: #{stereo_matching_forward.1} parent=63 // pred_check
        %p4483 = pneg %p238
      $region66: #{stereo_matching_forward.1} parent=63 // pred_check_branch
        %4485 = sbr.rel (%p4483) target = $region68
      $region67: #{stereo_matching_forward.1} parent=63 // pred_region
        %s4486 = smul.u32 16, %s21
        %p4487 = scmp.lt.s32.totalorder %s4486, 31
        %s4488 = scalar_select %p4487, %s4486, 31
        %s4489 = smul.addr %s4488, 8
        %s4490 = scalar_lea.vmem %s9, %s4489
      $region68: #{stereo_matching_forward.1} parent=63 // pred_fallthru
        _
    $region64: #{stereo_matching_forward.1} parent=5 // pred_fallthru
      _
  $region6: #{stereo_matching_forward.1} parent=0 // loop_footer
    %s19 = sadd.s32 1, %s15
  $region7: #{stereo_matching_forward.1} parent=0 // loop_footer_branch
    %14 = sbr.rel target = $region3
  $region8: #{stereo_matching_forward.1} parent=0 // loop_exit
    _

</llo_original>
